<compile_context>
chip_gen: v7x
topology: tpu7x:2x2x1
jax: 0.10.0
libtpu: 0.0.40
codegen_flags: <defaults>
</compile_context>

<pallas_src>
import functools

import jax
import jax.numpy as jnp
from jax import lax
from jax.experimental import pallas as pl
from jax.experimental.pallas import tpu as pltpu

KSIZE = 9      # Conv1d kernel size
HALO = 12      # input halo per side: 4 (conv1) + 2*4 (conv2 after the /2 pool)


def _round_up(n, m):
    return ((n + m - 1) // m) * m


def _pick_batch_block(batch, rows_per_batch):
    """Fold several batch elements into one grid step when tiles are tiny
    (amortizes ~0.35us/step overhead and enlarges the matmul M axis)."""
    limit = max(1, 4096 // rows_per_batch)
    best = 1
    for cand in range(1, batch + 1):
        if batch % cand == 0 and cand <= limit:
            best = cand
    return best


def _mish(x):
    # mish(x) = x * tanh(softplus(x)) = x * (1 - 2 / ((1 + e^x)^2 + 1))
    # -> one exp + one EUP reciprocal instead of exp + log1p + tanh.
    # The exp argument is clamped so the expression never sees inf.
    ex = jnp.exp(jnp.minimum(x, 20.0))
    t = 1.0 + ex
    return x * (1.0 - 2.0 * pl.reciprocal(t * t + 1.0, approx=True))


def _make_kernel(bblk, to, cin, c, pack, t_orig):
    w_rows = 4 * to + 2 * HALO      # padded-input rows visible per tile
    c1 = 4 * to + 16                # conv1 output rows needed per tile
    p_rows = 2 * to + 8             # pooled-1 rows needed (incl. +-4 conv2 halo)
    c2 = 2 * to                     # conv2 output rows per tile
    t_half = t_orig // 2

    def kernel(xm_ref, xh_ref, w1_ref, b1_ref, w2_ref, b2_ref, out_ref):
        # xm_ref : (bblk, 4*to, cin)   core rows of the padded input (bf16/f32)
        # xh_ref : (bblk, 32, cin)     right halo = first rows of the next tile
        # w1_ref : (cin, 9*c)          9 conv1 taps concatenated along N
        # b1_ref : (1, c)              f32
        # w2_ref : (c, 9*c)            9 conv2 taps concatenated along N
        # b2_ref : (1, c)              f32
        # out_ref: (bblk, to//pack, pack*c)  lane-dense packed output tile
        j = pl.program_id(1)

        # Stitch core + 24 halo rows (wrapper padding guarantees in-bounds).
        xw = jnp.concatenate([xm_ref[...], xh_ref[:, :2 * HALO, :]], axis=1)

        # ---- conv1: ONE (M, cin) @ (cin, 9*c) MXU matmul + 8 shifted adds ----
        y1 = jnp.dot(xw.reshape(bblk * w_rows, cin), w1_ref[...],
                     preferred_element_type=jnp.float32)
        y1 = y1.reshape(bblk, w_rows, KSIZE * c)
        acc1 = y1[:, 0:c1, 0:c]
        for k in range(1, KSIZE):
            acc1 = acc1 + y1[:, k:k + c1, k * c:(k + 1) * c]
        feat1 = _mish(acc1 + b1_ref[...])                    # (bblk, c1, c) f32

        # ---- maxpool1 (k=2, s=2) ----
        pooled = feat1.reshape(bblk * c1 // 2, 2, c).max(axis=1)
        pooled = pooled.reshape(bblk, p_rows, c)

        # Zero globally out-of-range pooled rows: this IS conv2's zero padding
        # at the sequence ends and it also kills the garbage tail of a ragged
        # last tile (correct behaviour at tile seams).
        q = lax.broadcasted_iota(jnp.int32, (1, p_rows, 1), 1)
        p_glob = q + (2 * to) * j - 4
        valid = jnp.logical_and(p_glob >= 0, p_glob < t_half)
        pooled = jnp.where(valid, pooled, 0.0)

        # ---- conv2: one (M, c) @ (c, 9*c) matmul + 8 shifted adds ----
        y2 = jnp.dot(pooled.reshape(bblk * p_rows, c).astype(w2_ref.dtype),
                     w2_ref[...], preferred_element_type=jnp.float32)
        y2 = y2.reshape(bblk, p_rows, KSIZE * c)
        acc2 = y2[:, 0:c2, 0:c]
        for k in range(1, KSIZE):
            acc2 = acc2 + y2[:, k:k + c2, k * c:(k + 1) * c]
        feat2 = _mish(acc2 + b2_ref[...])                    # (bblk, 2*to, c)

        # ---- maxpool2 (k=2, s=2) ----
        out3d = feat2.reshape(bblk * c2 // 2, 2, c).max(axis=1)
        out3d = out3d.reshape(bblk, to, c)

        # ---- lane-dense store: pack `pack` row-groups side by side on lanes ----
        if pack > 1:
            s = to // pack
            out3d = jnp.concatenate(
                [out3d[:, g * s:(g + 1) * s, :] for g in range(pack)], axis=-1)
        out_ref[...] = out3d.astype(out_ref.dtype)

    return kernel


def base_feature_net(x, w1, b1, w2, b2, *, max_out_rows_per_tile=512,
                     use_bf16=True):
    """conv1d(k=9,p=4)+Mish+maxpool2  ->  conv1d(k=9,p=4)+Mish+maxpool2.

    x : (B, C_in, T) in NCT (PyTorch) layout.
    w1: (C_out, C_in, 9), b1: (C_out,), w2: (C_out, C_out, 9), b2: (C_out,).
    Returns (B, C_out, T // 4).
    """
    batch, cin, t = x.shape
    c = w1.shape[0]
    assert t % 4 == 0
    assert w1.shape == (c, cin, KSIZE) and w2.shape == (c, c, KSIZE)
    assert b1.shape == (c,) and b2.shape == (c,)

    tout = t // 4
    pack = 128 // c if (c < 128 and 128 % c == 0) else 1

    # --- choose the time tile (`to` = final-output rows per tile) ----------
    # Per-step VMEM at to=512, c=32, bf16 inputs: ~0.5 MiB double-buffered
    # input + ~2.4 MiB conv1 matmul tile + ~1.2 MiB conv2 tile + small rest
    # (~6 MiB total) -> sized for v7x's 64 MiB VMEM with large headroom;
    # v5e/v6e could take bigger tiles but are already near the HBM roofline.
    if tout <= max_out_rows_per_tile:
        to = _round_up(tout, max(8, pack))
        n_t = 1
    else:
        to = _round_up(max_out_rows_per_tile, 8 * pack)
        n_t = (tout + to - 1) // to

    core = 4 * to                          # original-time rows per tile
    length = core * n_t + 32               # 12 left pad + data + right pad/halo

    mm_dtype = jnp.bfloat16 if use_bf16 else jnp.float32

    # NCT -> time-major (B, T, C_in); pad time so every tile's halo is in-bounds.
    xt = jnp.transpose(x, (0, 2, 1))
    xg = jnp.pad(xt, ((0, 0), (HALO, length - HALO - t), (0, 0))).astype(mm_dtype)

    # Fuse the 9 taps: W_cat[i, k*c + o] = w[o, i, k]  (one N=9*c matmul / conv).
    w1cat = jnp.transpose(w1, (1, 2, 0)).reshape(cin, KSIZE * c).astype(mm_dtype)
    w2cat = jnp.transpose(w2, (1, 2, 0)).reshape(c, KSIZE * c).astype(mm_dtype)
    b1r = b1.reshape(1, c).astype(jnp.float32)
    b2r = b2.reshape(1, c).astype(jnp.float32)

    bblk = _pick_batch_block(batch, 4 * to + 2 * HALO)
    grid = (batch // bblk, n_t)

    kernel = _make_kernel(bblk, to, cin, c, pack, t)

    out_packed = pl.pallas_call(
        kernel,
        out_shape=jax.ShapeDtypeStruct((batch, n_t * (to // pack), pack * c),
                                       x.dtype),
        grid=grid,
        in_specs=[
            # core rows [j*4*to, (j+1)*4*to) of the padded input
            pl.BlockSpec((bblk, core, cin), lambda bb, j: (bb, j, 0)),
            # 24-row right halo, fetched as an aligned 32-row block that starts
            # exactly where the next tile's core begins
            pl.BlockSpec((bblk, 32, cin),
                         lambda bb, j: (bb, (j + 1) * (to // 8), 0)),
            pl.BlockSpec((cin, KSIZE * c), lambda bb, j: (0, 0)),
            pl.BlockSpec((1, c), lambda bb, j: (0, 0)),
            pl.BlockSpec((c, KSIZE * c), lambda bb, j: (0, 0)),
            pl.BlockSpec((1, c), lambda bb, j: (0, 0)),
        ],
        out_specs=pl.BlockSpec((bblk, to // pack, pack * c),
                               lambda bb, j: (bb, j, 0)),
        compiler_params=pltpu.CompilerParams(
            dimension_semantics=("parallel", "parallel"),
            vmem_limit_bytes=32 * 1024 * 1024),
    )(xg, xg, w1cat, b1r, w2cat, b2r)

    # Un-pack the lane-packed output and return NCT.
    out = out_packed.reshape(batch, n_t, to // pack, pack, c)
    out = jnp.transpose(out, (0, 1, 3, 2, 4)).reshape(batch, n_t * to, c)
    return jnp.transpose(out[:, :tout, :], (0, 2, 1))


# ---------------- pure-JAX reference (for verification) ----------------
def _ref_forward(x, w1, b1, w2, b2):
    def conv(x_, w_, b_):
        y = lax.conv_general_dilated(
            x_, w_, window_strides=(1,), padding=[(4, 4)],
            dimension_numbers=("NCH", "OIH", "NCH"))
        return y + b_[None, :, None]

    def maxpool2(v):
        bb, cc, tt = v.shape
        return v.reshape(bb, cc, tt // 2, 2).max(axis=-1)

    def mish(v):
        return v * jnp.tanh(jax.nn.softplus(v))

    feat = maxpool2(mish(conv(x, w1, b1)))
    return maxpool2(mish(conv(feat, w2, b2)))


if __name__ == "__main__":
    # Small shapes consistent with the module (IN_FEAT_DIM -> BASE_FEAT_DIM, T -> T/4)
    B, Cin, Cout, T = 2, 64, 32, 64

    key = jax.random.PRNGKey(0)
    k1, k2, k3, k4, k5, k6 = jax.random.split(key, 6)
    x = jax.random.normal(k1, (B, Cin, T), dtype=jnp.float32)
    # PyTorch Conv1d weight layout: (out_channels, in_channels, kernel_size)
    w1 = jax.random.normal(k2, (Cout, Cin, KSIZE), dtype=jnp.float32) * 0.05
    b1 = jax.random.normal(k3, (Cout,), dtype=jnp.float32) * 0.05
    w2 = jax.random.normal(k4, (Cout, Cout, KSIZE), dtype=jnp.float32) * 0.05
    b2 = jax.random.normal(k5, (Cout,), dtype=jnp.float32) * 0.05

    out = jax.block_until_ready(jax.jit(base_feature_net)(x, w1, b1, w2, b2))
    ref = _ref_forward(x, w1, b1, w2, b2)
    assert out.shape == (B, Cout, T // 4), out.shape
    # bf16 MXU inputs + approx EUP reciprocal in Mish -> loosened tolerance.
    assert jnp.allclose(out, ref, atol=5e-2, rtol=5e-2), float(
        jnp.max(jnp.abs(out - ref)))

    # Second check: longer sequence with a small tile forces the multi-tile
    # (halo + seam-mask) path, batch-block path already covered above.
    T2 = 512
    x2 = jax.random.normal(k6, (1, Cin, T2), dtype=jnp.float32)
    fn2 = jax.jit(functools.partial(base_feature_net, max_out_rows_per_tile=32))
    out2 = jax.block_until_ready(fn2(x2, w1, b1, w2, b2))
    ref2 = _ref_forward(x2, w1, b1, w2, b2)
    assert out2.shape == (1, Cout, T2 // 4), out2.shape
    assert jnp.allclose(out2, ref2, atol=5e-2, rtol=5e-2), float(
        jnp.max(jnp.abs(out2 - ref2)))

    print("KERNEL_OK")
</pallas_src>

<mosaic_0001>
module attributes {stable_mosaic.version = 11 : i64} {
  func.func @kernel(%arg0: i32, %arg1: i32, %arg2: memref<2x64x64xbf16, #tpu.memory_space<vmem>>, %arg3: memref<2x32x64xbf16, #tpu.memory_space<vmem>>, %arg4: memref<64x288xbf16, #tpu.memory_space<vmem>>, %arg5: memref<1x32xf32, #tpu.memory_space<vmem>>, %arg6: memref<32x288xbf16, #tpu.memory_space<vmem>>, %arg7: memref<1x32xf32, #tpu.memory_space<vmem>>, %arg8: memref<2x4x128xf32, #tpu.memory_space<vmem>>) attributes {dimension_semantics = [#tpu.dimension_semantics<parallel>, #tpu.dimension_semantics<parallel>], iteration_bounds = array<i64: 1, 1>, scalar_prefetch = 0 : i64, scratch_operands = 0 : i64, tpu.core_type = #tpu.core_type<tc>, window_params = [{transform_indices = @transform_0, window_bounds = array<i64: 2, 64, 64>}, {transform_indices = @transform_1, window_bounds = array<i64: 2, 32, 64>}, {pipeline_mode = #tpu.pipeline_mode<synchronous>, transform_indices = @transform_2, window_bounds = array<i64: 64, 288>}, {pipeline_mode = #tpu.pipeline_mode<synchronous>, transform_indices = @transform_3, window_bounds = array<i64: 1, 32>}, {pipeline_mode = #tpu.pipeline_mode<synchronous>, transform_indices = @transform_4, window_bounds = array<i64: 32, 288>}, {pipeline_mode = #tpu.pipeline_mode<synchronous>, transform_indices = @transform_5, window_bounds = array<i64: 1, 32>}, {transform_indices = @transform_6, window_bounds = array<i64: 2, 4, 128>}]} {
    %c0 = arith.constant 0 : index
    %c0_0 = arith.constant 0 : index
    %c0_1 = arith.constant 0 : index
    %0 = vector.load %arg2[%c0, %c0_0, %c0_1] : memref<2x64x64xbf16, #tpu.memory_space<vmem>>, vector<2x64x64xbf16>
    %c0_2 = arith.constant 0 : index
    %c0_3 = arith.constant 0 : index
    %c0_4 = arith.constant 0 : index
    %1 = vector.load %arg3[%c0_2, %c0_3, %c0_4] : memref<2x32x64xbf16, #tpu.memory_space<vmem>>, vector<2x24x64xbf16>
    %2 = tpu.concatenate %0, %1 in 1 : vector<2x64x64xbf16>, vector<2x24x64xbf16> -> vector<2x88x64xbf16>
    %3 = vector.shape_cast %2 : vector<2x88x64xbf16> to vector<176x64xbf16>
    %c0_5 = arith.constant 0 : index
    %c0_6 = arith.constant 0 : index
    %4 = vector.load %arg4[%c0_5, %c0_6] : memref<64x288xbf16, #tpu.memory_space<vmem>>, vector<64x288xbf16>
    %cst = arith.constant dense<0.000000e+00> : vector<176x288xf32>
    %5 = tpu.matmul %3, %4, %cst {dimension_numbers = #tpu.dot_dimension_numbers<[1], [0], [0], [1], [0, 0, 1, 1], [], []>} : vector<176x64xbf16>, vector<64x288xbf16>, vector<176x288xf32> -> vector<176x288xf32>
    %6 = vector.shape_cast %5 : vector<176x288xf32> to vector<2x88x288xf32>
    %7 = vector.extract_strided_slice %6 {offsets = [0, 0, 0], sizes = [2, 80, 32], strides = [1, 1, 1]} : vector<2x88x288xf32> to vector<2x80x32xf32>
    %8 = vector.extract_strided_slice %6 {offsets = [0, 1, 32], sizes = [2, 80, 32], strides = [1, 1, 1]} : vector<2x88x288xf32> to vector<2x80x32xf32>
    %9 = arith.addf %7, %8 : vector<2x80x32xf32>
    %10 = vector.extract_strided_slice %6 {offsets = [0, 2, 64], sizes = [2, 80, 32], strides = [1, 1, 1]} : vector<2x88x288xf32> to vector<2x80x32xf32>
    %11 = arith.addf %9, %10 : vector<2x80x32xf32>
    %12 = vector.extract_strided_slice %6 {offsets = [0, 3, 96], sizes = [2, 80, 32], strides = [1, 1, 1]} : vector<2x88x288xf32> to vector<2x80x32xf32>
    %13 = arith.addf %11, %12 : vector<2x80x32xf32>
    %14 = vector.extract_strided_slice %6 {offsets = [0, 4, 128], sizes = [2, 80, 32], strides = [1, 1, 1]} : vector<2x88x288xf32> to vector<2x80x32xf32>
    %15 = arith.addf %13, %14 : vector<2x80x32xf32>
    %16 = vector.extract_strided_slice %6 {offsets = [0, 5, 160], sizes = [2, 80, 32], strides = [1, 1, 1]} : vector<2x88x288xf32> to vector<2x80x32xf32>
    %17 = arith.addf %15, %16 : vector<2x80x32xf32>
    %18 = vector.extract_strided_slice %6 {offsets = [0, 6, 192], sizes = [2, 80, 32], strides = [1, 1, 1]} : vector<2x88x288xf32> to vector<2x80x32xf32>
    %19 = arith.addf %17, %18 : vector<2x80x32xf32>
    %20 = vector.extract_strided_slice %6 {offsets = [0, 7, 224], sizes = [2, 80, 32], strides = [1, 1, 1]} : vector<2x88x288xf32> to vector<2x80x32xf32>
    %21 = arith.addf %19, %20 : vector<2x80x32xf32>
    %22 = vector.extract_strided_slice %6 {offsets = [0, 8, 256], sizes = [2, 80, 32], strides = [1, 1, 1]} : vector<2x88x288xf32> to vector<2x80x32xf32>
    %23 = arith.addf %21, %22 : vector<2x80x32xf32>
    %c0_7 = arith.constant 0 : index
    %c0_8 = arith.constant 0 : index
    %24 = vector.load %arg5[%c0_7, %c0_8] : memref<1x32xf32, #tpu.memory_space<vmem>>, vector<1x32xf32>
    %25 = vector.shape_cast %24 : vector<1x32xf32> to vector<1x1x32xf32>
    %26 = vector.broadcast %25 : vector<1x1x32xf32> to vector<2x80x32xf32>
    %27 = arith.addf %23, %26 : vector<2x80x32xf32>
    %cst_9 = arith.constant 2.000000e+01 : f32
    %28 = vector.broadcast %cst_9 : f32 to vector<2x80x32xf32>
    %29 = arith.minimumf %27, %28 : vector<2x80x32xf32>
    %30 = math.exp %29 : vector<2x80x32xf32>
    %cst_10 = arith.constant 1.000000e+00 : f32
    %31 = vector.broadcast %cst_10 : f32 to vector<2x80x32xf32>
    %32 = arith.addf %31, %30 : vector<2x80x32xf32>
    %33 = arith.mulf %32, %32 : vector<2x80x32xf32>
    %cst_11 = arith.constant 1.000000e+00 : f32
    %34 = vector.broadcast %cst_11 : f32 to vector<2x80x32xf32>
    %35 = arith.addf %33, %34 : vector<2x80x32xf32>
    %36 = tpu.reciprocal %35 {approx = true} : vector<2x80x32xf32> -> vector<2x80x32xf32>
    %cst_12 = arith.constant 2.000000e+00 : f32
    %37 = vector.broadcast %cst_12 : f32 to vector<2x80x32xf32>
    %38 = arith.mulf %37, %36 : vector<2x80x32xf32>
    %cst_13 = arith.constant 1.000000e+00 : f32
    %39 = vector.broadcast %cst_13 : f32 to vector<2x80x32xf32>
    %40 = arith.subf %39, %38 : vector<2x80x32xf32>
    %41 = arith.mulf %27, %40 : vector<2x80x32xf32>
    %42 = vector.shape_cast %41 : vector<2x80x32xf32> to vector<80x2x32xf32>
    %cst_14 = arith.constant dense<0xFF800000> : vector<80x32xf32>
    %43 = vector.multi_reduction <maximumf>, %42, %cst_14 [1] : vector<80x2x32xf32> to vector<80x32xf32>
    %44 = vector.shape_cast %43 : vector<80x32xf32> to vector<2x40x32xf32>
    %45 = tpu.iota {dimensions = array<i32: 1>} : vector<1x40x1xi32>
    %c32_i32 = arith.constant 32 : i32
    %46 = arith.muli %c32_i32, %arg1 : i32
    %47 = vector.broadcast %46 : i32 to vector<1x40x1xi32>
    %48 = arith.addi %45, %47 : vector<1x40x1xi32>
    %c4_i32 = arith.constant 4 : i32
    %49 = vector.broadcast %c4_i32 : i32 to vector<1x40x1xi32>
    %50 = arith.subi %48, %49 : vector<1x40x1xi32>
    %c0_i32 = arith.constant 0 : i32
    %51 = vector.broadcast %c0_i32 : i32 to vector<1x40x1xi32>
    %52 = arith.cmpi sge, %50, %51 : vector<1x40x1xi32>
    %c32_i32_15 = arith.constant 32 : i32
    %53 = vector.broadcast %c32_i32_15 : i32 to vector<1x40x1xi32>
    %54 = arith.cmpi slt, %50, %53 : vector<1x40x1xi32>
    %55 = arith.andi %52, %54 : vector<1x40x1xi1>
    %cst_16 = arith.constant 0.000000e+00 : f32
    %56 = vector.shape_cast %55 : vector<1x40x1xi1> to vector<1x40x1xi1>
    %57 = vector.broadcast %56 : vector<1x40x1xi1> to vector<2x40x32xi1>
    %58 = vector.broadcast %cst_16 : f32 to vector<2x40x32xf32>
    %59 = arith.select %57, %44, %58 : vector<2x40x32xi1>, vector<2x40x32xf32>
    %60 = vector.shape_cast %59 : vector<2x40x32xf32> to vector<80x32xf32>
    %61 = arith.truncf %60 : vector<80x32xf32> to vector<80x32xbf16>
    %c0_17 = arith.constant 0 : index
    %c0_18 = arith.constant 0 : index
    %62 = vector.load %arg6[%c0_17, %c0_18] : memref<32x288xbf16, #tpu.memory_space<vmem>>, vector<32x288xbf16>
    %cst_19 = arith.constant dense<0.000000e+00> : vector<80x288xf32>
    %63 = tpu.matmul %61, %62, %cst_19 {dimension_numbers = #tpu.dot_dimension_numbers<[1], [0], [0], [1], [0, 0, 1, 1], [], []>} : vector<80x32xbf16>, vector<32x288xbf16>, vector<80x288xf32> -> vector<80x288xf32>
    %64 = vector.shape_cast %63 : vector<80x288xf32> to vector<2x40x288xf32>
    %65 = vector.extract_strided_slice %64 {offsets = [0, 0, 0], sizes = [2, 32, 32], strides = [1, 1, 1]} : vector<2x40x288xf32> to vector<2x32x32xf32>
    %66 = vector.extract_strided_slice %64 {offsets = [0, 1, 32], sizes = [2, 32, 32], strides = [1, 1, 1]} : vector<2x40x288xf32> to vector<2x32x32xf32>
    %67 = arith.addf %65, %66 : vector<2x32x32xf32>
    %68 = vector.extract_strided_slice %64 {offsets = [0, 2, 64], sizes = [2, 32, 32], strides = [1, 1, 1]} : vector<2x40x288xf32> to vector<2x32x32xf32>
    %69 = arith.addf %67, %68 : vector<2x32x32xf32>
    %70 = vector.extract_strided_slice %64 {offsets = [0, 3, 96], sizes = [2, 32, 32], strides = [1, 1, 1]} : vector<2x40x288xf32> to vector<2x32x32xf32>
    %71 = arith.addf %69, %70 : vector<2x32x32xf32>
    %72 = vector.extract_strided_slice %64 {offsets = [0, 4, 128], sizes = [2, 32, 32], strides = [1, 1, 1]} : vector<2x40x288xf32> to vector<2x32x32xf32>
    %73 = arith.addf %71, %72 : vector<2x32x32xf32>
    %74 = vector.extract_strided_slice %64 {offsets = [0, 5, 160], sizes = [2, 32, 32], strides = [1, 1, 1]} : vector<2x40x288xf32> to vector<2x32x32xf32>
    %75 = arith.addf %73, %74 : vector<2x32x32xf32>
    %76 = vector.extract_strided_slice %64 {offsets = [0, 6, 192], sizes = [2, 32, 32], strides = [1, 1, 1]} : vector<2x40x288xf32> to vector<2x32x32xf32>
    %77 = arith.addf %75, %76 : vector<2x32x32xf32>
    %78 = vector.extract_strided_slice %64 {offsets = [0, 7, 224], sizes = [2, 32, 32], strides = [1, 1, 1]} : vector<2x40x288xf32> to vector<2x32x32xf32>
    %79 = arith.addf %77, %78 : vector<2x32x32xf32>
    %80 = vector.extract_strided_slice %64 {offsets = [0, 8, 256], sizes = [2, 32, 32], strides = [1, 1, 1]} : vector<2x40x288xf32> to vector<2x32x32xf32>
    %81 = arith.addf %79, %80 : vector<2x32x32xf32>
    %c0_20 = arith.constant 0 : index
    %c0_21 = arith.constant 0 : index
    %82 = vector.load %arg7[%c0_20, %c0_21] : memref<1x32xf32, #tpu.memory_space<vmem>>, vector<1x32xf32>
    %83 = vector.shape_cast %82 : vector<1x32xf32> to vector<1x1x32xf32>
    %84 = vector.broadcast %83 : vector<1x1x32xf32> to vector<2x32x32xf32>
    %85 = arith.addf %81, %84 : vector<2x32x32xf32>
    %cst_22 = arith.constant 2.000000e+01 : f32
    %86 = vector.broadcast %cst_22 : f32 to vector<2x32x32xf32>
    %87 = arith.minimumf %85, %86 : vector<2x32x32xf32>
    %88 = math.exp %87 : vector<2x32x32xf32>
    %cst_23 = arith.constant 1.000000e+00 : f32
    %89 = vector.broadcast %cst_23 : f32 to vector<2x32x32xf32>
    %90 = arith.addf %89, %88 : vector<2x32x32xf32>
    %91 = arith.mulf %90, %90 : vector<2x32x32xf32>
    %cst_24 = arith.constant 1.000000e+00 : f32
    %92 = vector.broadcast %cst_24 : f32 to vector<2x32x32xf32>
    %93 = arith.addf %91, %92 : vector<2x32x32xf32>
    %94 = tpu.reciprocal %93 {approx = true} : vector<2x32x32xf32> -> vector<2x32x32xf32>
    %cst_25 = arith.constant 2.000000e+00 : f32
    %95 = vector.broadcast %cst_25 : f32 to vector<2x32x32xf32>
    %96 = arith.mulf %95, %94 : vector<2x32x32xf32>
    %cst_26 = arith.constant 1.000000e+00 : f32
    %97 = vector.broadcast %cst_26 : f32 to vector<2x32x32xf32>
    %98 = arith.subf %97, %96 : vector<2x32x32xf32>
    %99 = arith.mulf %85, %98 : vector<2x32x32xf32>
    %100 = vector.shape_cast %99 : vector<2x32x32xf32> to vector<32x2x32xf32>
    %cst_27 = arith.constant dense<0xFF800000> : vector<32x32xf32>
    %101 = vector.multi_reduction <maximumf>, %100, %cst_27 [1] : vector<32x2x32xf32> to vector<32x32xf32>
    %102 = vector.shape_cast %101 : vector<32x32xf32> to vector<2x16x32xf32>
    %103 = vector.extract_strided_slice %102 {offsets = [0, 0, 0], sizes = [2, 4, 32], strides = [1, 1, 1]} : vector<2x16x32xf32> to vector<2x4x32xf32>
    %104 = vector.extract_strided_slice %102 {offsets = [0, 4, 0], sizes = [2, 4, 32], strides = [1, 1, 1]} : vector<2x16x32xf32> to vector<2x4x32xf32>
    %105 = vector.extract_strided_slice %102 {offsets = [0, 8, 0], sizes = [2, 4, 32], strides = [1, 1, 1]} : vector<2x16x32xf32> to vector<2x4x32xf32>
    %106 = vector.extract_strided_slice %102 {offsets = [0, 12, 0], sizes = [2, 4, 32], strides = [1, 1, 1]} : vector<2x16x32xf32> to vector<2x4x32xf32>
    %107 = tpu.concatenate %103, %104, %105, %106 in 2 : vector<2x4x32xf32>, vector<2x4x32xf32>, vector<2x4x32xf32>, vector<2x4x32xf32> -> vector<2x4x128xf32>
    %c0_28 = arith.constant 0 : index
    %c0_29 = arith.constant 0 : index
    %c0_30 = arith.constant 0 : index
    %108 = vector.load %arg8[%c0_28, %c0_29, %c0_30] : memref<2x4x128xf32, #tpu.memory_space<vmem>>, vector<2x4x128xf32>
    tpu.vector_store %arg8[%c0_28, %c0_29, %c0_30], %107 {strides = array<i32>} : memref<2x4x128xf32, #tpu.memory_space<vmem>>, vector<2x4x128xf32>,
    return
  }
  func.func @transform_0(%arg0: i32, %arg1: i32) -> (i32, i32, i32) {
    %c0_i32 = arith.constant 0 : i32
    %c0_i32_0 = arith.constant 0 : i32
    return %arg0, %arg1, %c0_i32 : i32, i32, i32
  }
  func.func @transform_1(%arg0: i32, %arg1: i32) -> (i32, i32, i32) {
    %c1_i32 = arith.constant 1 : i32
    %0 = arith.addi %arg1, %c1_i32 : i32
    %c2_i32 = arith.constant 2 : i32
    %1 = arith.muli %0, %c2_i32 : i32
    %c0_i32 = arith.constant 0 : i32
    %c0_i32_0 = arith.constant 0 : i32
    return %arg0, %1, %c0_i32 : i32, i32, i32
  }
  func.func @transform_2(%arg0: i32, %arg1: i32) -> (i32, i32) {
    %c0_i32 = arith.constant 0 : i32
    %c0_i32_0 = arith.constant 0 : i32
    %c0_i32_1 = arith.constant 0 : i32
    return %c0_i32, %c0_i32_0 : i32, i32
  }
  func.func @transform_3(%arg0: i32, %arg1: i32) -> (i32, i32) {
    %c0_i32 = arith.constant 0 : i32
    %c0_i32_0 = arith.constant 0 : i32
    %c0_i32_1 = arith.constant 0 : i32
    return %c0_i32, %c0_i32_0 : i32, i32
  }
  func.func @transform_4(%arg0: i32, %arg1: i32) -> (i32, i32) {
    %c0_i32 = arith.constant 0 : i32
    %c0_i32_0 = arith.constant 0 : i32
    %c0_i32_1 = arith.constant 0 : i32
    return %c0_i32, %c0_i32_0 : i32, i32
  }
  func.func @transform_5(%arg0: i32, %arg1: i32) -> (i32, i32) {
    %c0_i32 = arith.constant 0 : i32
    %c0_i32_0 = arith.constant 0 : i32
    %c0_i32_1 = arith.constant 0 : i32
    return %c0_i32, %c0_i32_0 : i32, i32
  }
  func.func @transform_6(%arg0: i32, %arg1: i32) -> (i32, i32, i32) {
    %c0_i32 = arith.constant 0 : i32
    %c0_i32_0 = arith.constant 0 : i32
    return %arg0, %arg1, %c0_i32 : i32, i32, i32
  }
}

</mosaic_0001>

<llo_original>
// kernel: base_feature_net.1
$region0: #{base_feature_net.1}
  #allocation0 [shape = 'u32[]', space=smem, size = 0x4, offset = 0x4, fixed_abs, tag = 'smem constant byte address 0x4 - core index']
  #allocation1 [shape = 'u32[144,128]{1,0:T(1,128)}', space=vmem, size = 0x12000, scoped, tag = 'internal scratch']
  %s0 = inlined_call_operand.vmem [shape: bf16[2,96,64], index: 0, kind: input, shape index: {}, may-alias: {0,1}]
  %s1 = inlined_call_operand.vmem [shape: bf16[2,96,64], index: 1, kind: input, shape index: {}, may-alias: {0,1}]
  %s2 = inlined_call_operand.vmem [shape: bf16[64,288], index: 2, kind: input, shape index: {}]
  %s3 = inlined_call_operand.vmem [shape: f32[1,32], index: 3, kind: input, shape index: {}]
  %s4 = inlined_call_operand.vmem [shape: bf16[32,288], index: 4, kind: input, shape index: {}]
  %s5 = inlined_call_operand.vmem [shape: f32[1,32], index: 5, kind: input, shape index: {}]
  %s6 = inlined_call_operand.vmem [shape: f32[2,4,128], index: 6, kind: output, shape index: {}]
  %s7 = sld [smem:[#allocation0]]
  $region116: #{base_feature_net.1} parent=0
    _
  %s9 = ssub.s32 1, %s7
  %s10 = scalar_select 0, %s9, %s7
  $region1: #{base_feature_net.1} parent=0
    #allocation2 [shape = 'u8[32768]{0}', space=vmem, size = 0x8000, scoped, tag = 'input window, operand 0, single buffered']
    #allocation3 [shape = 'u8[16384]{0}', space=vmem, size = 0x4000, scoped, tag = 'input window, operand 1, single buffered']
    // Predicated region
    $region2: #{base_feature_net.1} parent=1 // pred_check
      _
    $region3: #{base_feature_net.1} parent=1 // pred_check_branch
      %12 = sbr.rel (0) target = $region5
    $region4: #{base_feature_net.1} parent=1 // pred_region
      // Predicated region
      $region6: #{base_feature_net.1} parent=4 // pred_check
        _
      $region7: #{base_feature_net.1} parent=4 // pred_check_branch
        %14 = sbr.rel (0) target = $region9
      $region8: #{base_feature_net.1} parent=4 // pred_region
        // Predicated region
        $region10: #{base_feature_net.1} parent=8 // pred_check
          _
        $region11: #{base_feature_net.1} parent=8 // pred_check_branch
          %16 = sbr.rel target = $region13
        $region12: #{base_feature_net.1} parent=8 // pred_region
          // Predicated region
          $region25: #{base_feature_net.1} parent=12 // pred_check
            _
          $region26: #{base_feature_net.1} parent=12 // pred_check_branch
            %61 = sbr.rel (0) target = $region28
          $region27: #{base_feature_net.1} parent=12 // pred_region
            loop: start=0, step=1, limit=1
            $region29: #{base_feature_net.1} parent=27 // loop_pre_header
              _
            $region30: #{base_feature_net.1} parent=27 // loop_header
              %s63 = sphi 0, %s67
              %p64 = scmp.ge.s32.totalorder %s63, 1
              %s68 = sphi %s0, %s0
              %s69 = sphi [#allocation2], [#allocation2]
            $region31: #{base_feature_net.1} parent=27 // loop_header_branch
              %66 = sbr.rel (%p64) target = $region35
            $region32: #{base_feature_net.1} parent=27 // loop_body
              _
            $region33: #{base_feature_net.1} parent=27 // loop_footer
              %s67 = sadd.s32 1, %s63
            $region34: #{base_feature_net.1} parent=27 // loop_footer_branch
              %62 = sbr.rel target = $region30
            $region35: #{base_feature_net.1} parent=27 // loop_exit
              _
            loop: start=0, step=1, limit=1
            $region36: #{base_feature_net.1} parent=27 // loop_pre_header
              _
            $region37: #{base_feature_net.1} parent=27 // loop_header
              %s72 = sphi 0, %s76
              %p73 = scmp.ge.s32.totalorder %s72, 1
              %s77 = sphi %s0, %s0
              %s78 = sphi [#allocation2], [#allocation2]
            $region38: #{base_feature_net.1} parent=27 // loop_header_branch
              %75 = sbr.rel (%p73) target = $region42
            $region39: #{base_feature_net.1} parent=27 // loop_body
              %v79 = vld [vmem:[%s77] sm:$0xf]
              %80 = vst [vmem:[%s78] sm:$0xf] %v79
              %v81 = vld [vmem:[%s77 + $0x4] sm:$0xf]
              %82 = vst [vmem:[%s78 + $0x4] sm:$0xf] %v81
              %v83 = vld [vmem:[%s77 + $0x8] sm:$0xf]
              %84 = vst [vmem:[%s78 + $0x8] sm:$0xf] %v83
              %v85 = vld [vmem:[%s77 + $0xc] sm:$0xf]
              %86 = vst [vmem:[%s78 + $0xc] sm:$0xf] %v85
              %v87 = vld [vmem:[%s77 + $0x10] sm:$0xf]
              %88 = vst [vmem:[%s78 + $0x10] sm:$0xf] %v87
              %v89 = vld [vmem:[%s77 + $0x14] sm:$0xf]
              %90 = vst [vmem:[%s78 + $0x14] sm:$0xf] %v89
              %v91 = vld [vmem:[%s77 + $0x18] sm:$0xf]
              %92 = vst [vmem:[%s78 + $0x18] sm:$0xf] %v91
              %v93 = vld [vmem:[%s77 + $0x1c] sm:$0xf]
              %94 = vst [vmem:[%s78 + $0x1c] sm:$0xf] %v93
              %v95 = vld [vmem:[%s77 + $0x30] sm:$0xf]
              %96 = vst [vmem:[%s78 + $0x20] sm:$0xf] %v95
              %v97 = vld [vmem:[%s77 + $0x34] sm:$0xf]
              %98 = vst [vmem:[%s78 + $0x24] sm:$0xf] %v97
              %v99 = vld [vmem:[%s77 + $0x38] sm:$0xf]
              %100 = vst [vmem:[%s78 + $0x28] sm:$0xf] %v99
              %v101 = vld [vmem:[%s77 + $0x3c] sm:$0xf]
              %102 = vst [vmem:[%s78 + $0x2c] sm:$0xf] %v101
              %v103 = vld [vmem:[%s77 + $0x40] sm:$0xf]
              %104 = vst [vmem:[%s78 + $0x30] sm:$0xf] %v103
              %v105 = vld [vmem:[%s77 + $0x44] sm:$0xf]
              %106 = vst [vmem:[%s78 + $0x34] sm:$0xf] %v105
              %v107 = vld [vmem:[%s77 + $0x48] sm:$0xf]
              %108 = vst [vmem:[%s78 + $0x38] sm:$0xf] %v107
              %v109 = vld [vmem:[%s77 + $0x4c] sm:$0xf]
              %110 = vst [vmem:[%s78 + $0x3c] sm:$0xf] %v109
            $region40: #{base_feature_net.1} parent=27 // loop_footer
              %s76 = sadd.s32 1, %s72
            $region41: #{base_feature_net.1} parent=27 // loop_footer_branch
              %71 = sbr.rel target = $region37
            $region42: #{base_feature_net.1} parent=27 // loop_exit
              _
          $region28: #{base_feature_net.1} parent=12 // pred_fallthru
            _
        $region13: #{base_feature_net.1} parent=8 // pred_fallthru
          _
        // Predicated region
        $region14: #{base_feature_net.1} parent=8 // pred_check
          _
        $region15: #{base_feature_net.1} parent=8 // pred_check_branch
          %18 = sbr.rel (0) target = $region17
        $region16: #{base_feature_net.1} parent=8 // pred_region
          loop: start=0, step=1, limit=1
          $region18: #{base_feature_net.1} parent=16 // loop_pre_header
            _
          $region19: #{base_feature_net.1} parent=16 // loop_header
            %s21 = sphi 0, %s25
            %p22 = scmp.ge.s32.totalorder %s21, 1
            %s26 = sphi %s0, %s0
            %s27 = sphi [#allocation2], [#allocation2]
          $region20: #{base_feature_net.1} parent=16 // loop_header_branch
            %24 = sbr.rel (%p22) target = $region24
          $region21: #{base_feature_net.1} parent=16 // loop_body
            %v28 = vld [vmem:[%s26] sm:$0xf]
            %29 = vst [vmem:[%s27] sm:$0xf] %v28
            %v30 = vld [vmem:[%s26 + $0x4] sm:$0xf]
            %31 = vst [vmem:[%s27 + $0x4] sm:$0xf] %v30
            %v32 = vld [vmem:[%s26 + $0x8] sm:$0xf]
            %33 = vst [vmem:[%s27 + $0x8] sm:$0xf] %v32
            %v34 = vld [vmem:[%s26 + $0xc] sm:$0xf]
            %35 = vst [vmem:[%s27 + $0xc] sm:$0xf] %v34
            %v36 = vld [vmem:[%s26 + $0x10] sm:$0xf]
            %37 = vst [vmem:[%s27 + $0x10] sm:$0xf] %v36
            %v38 = vld [vmem:[%s26 + $0x14] sm:$0xf]
            %39 = vst [vmem:[%s27 + $0x14] sm:$0xf] %v38
            %v40 = vld [vmem:[%s26 + $0x18] sm:$0xf]
            %41 = vst [vmem:[%s27 + $0x18] sm:$0xf] %v40
            %v42 = vld [vmem:[%s26 + $0x1c] sm:$0xf]
            %43 = vst [vmem:[%s27 + $0x1c] sm:$0xf] %v42
            %v44 = vld [vmem:[%s26 + $0x30] sm:$0xf]
            %45 = vst [vmem:[%s27 + $0x20] sm:$0xf] %v44
            %v46 = vld [vmem:[%s26 + $0x34] sm:$0xf]
            %47 = vst [vmem:[%s27 + $0x24] sm:$0xf] %v46
            %v48 = vld [vmem:[%s26 + $0x38] sm:$0xf]
            %49 = vst [vmem:[%s27 + $0x28] sm:$0xf] %v48
            %v50 = vld [vmem:[%s26 + $0x3c] sm:$0xf]
            %51 = vst [vmem:[%s27 + $0x2c] sm:$0xf] %v50
            %v52 = vld [vmem:[%s26 + $0x40] sm:$0xf]
            %53 = vst [vmem:[%s27 + $0x30] sm:$0xf] %v52
            %v54 = vld [vmem:[%s26 + $0x44] sm:$0xf]
            %55 = vst [vmem:[%s27 + $0x34] sm:$0xf] %v54
            %v56 = vld [vmem:[%s26 + $0x48] sm:$0xf]
            %57 = vst [vmem:[%s27 + $0x38] sm:$0xf] %v56
            %v58 = vld [vmem:[%s26 + $0x4c] sm:$0xf]
            %59 = vst [vmem:[%s27 + $0x3c] sm:$0xf] %v58
          $region22: #{base_feature_net.1} parent=16 // loop_footer
            %s25 = sadd.s32 1, %s21
          $region23: #{base_feature_net.1} parent=16 // loop_footer_branch
            %20 = sbr.rel target = $region19
          $region24: #{base_feature_net.1} parent=16 // loop_exit
            _
        $region17: #{base_feature_net.1} parent=8 // pred_fallthru
          _
      $region9: #{base_feature_net.1} parent=4 // pred_fallthru
        _
      %111 = vnop
    $region5: #{base_feature_net.1} parent=1 // pred_fallthru
      _
    // Predicated region
    $region43: #{base_feature_net.1} parent=1 // pred_check
      _
    $region44: #{base_feature_net.1} parent=1 // pred_check_branch
      %113 = sbr.rel (0) target = $region46
    $region45: #{base_feature_net.1} parent=1 // pred_region
      %s114 = sadd.s32 0, 1
      %s115 = smul.u32 %s114, 2
      %s116 = smul.u32 4, %s115
      %s117 = smul.addr %s116, 4
      %s118 = scalar_lea.vmem %s1, %s117
      // Predicated region
      $region47: #{base_feature_net.1} parent=45 // pred_check
        _
      $region48: #{base_feature_net.1} parent=45 // pred_check_branch
        %120 = sbr.rel (0) target = $region50
      $region49: #{base_feature_net.1} parent=45 // pred_region
        // Predicated region
        $region51: #{base_feature_net.1} parent=49 // pred_check
          _
        $region52: #{base_feature_net.1} parent=49 // pred_check_branch
          %122 = sbr.rel target = $region54
        $region53: #{base_feature_net.1} parent=49 // pred_region
          // Predicated region
          $region66: #{base_feature_net.1} parent=53 // pred_check
            _
          $region67: #{base_feature_net.1} parent=53 // pred_check_branch
            %151 = sbr.rel (0) target = $region69
          $region68: #{base_feature_net.1} parent=53 // pred_region
            loop: start=0, step=1, limit=1
            $region70: #{base_feature_net.1} parent=68 // loop_pre_header
              _
            $region71: #{base_feature_net.1} parent=68 // loop_header
              %s153 = sphi 0, %s157
              %p154 = scmp.ge.s32.totalorder %s153, 1
              %s158 = sphi %s118, %s118
              %s159 = sphi [#allocation3], [#allocation3]
            $region72: #{base_feature_net.1} parent=68 // loop_header_branch
              %156 = sbr.rel (%p154) target = $region76
            $region73: #{base_feature_net.1} parent=68 // loop_body
              _
            $region74: #{base_feature_net.1} parent=68 // loop_footer
              %s157 = sadd.s32 1, %s153
            $region75: #{base_feature_net.1} parent=68 // loop_footer_branch
              %152 = sbr.rel target = $region71
            $region76: #{base_feature_net.1} parent=68 // loop_exit
              _
            loop: start=0, step=1, limit=1
            $region77: #{base_feature_net.1} parent=68 // loop_pre_header
              _
            $region78: #{base_feature_net.1} parent=68 // loop_header
              %s162 = sphi 0, %s166
              %p163 = scmp.ge.s32.totalorder %s162, 1
              %s167 = sphi %s118, %s118
              %s168 = sphi [#allocation3], [#allocation3]
            $region79: #{base_feature_net.1} parent=68 // loop_header_branch
              %165 = sbr.rel (%p163) target = $region83
            $region80: #{base_feature_net.1} parent=68 // loop_body
              %v169 = vld [vmem:[%s167] sm:$0xf]
              %170 = vst [vmem:[%s168] sm:$0xf] %v169
              %v171 = vld [vmem:[%s167 + $0x4] sm:$0xf]
              %172 = vst [vmem:[%s168 + $0x4] sm:$0xf] %v171
              %v173 = vld [vmem:[%s167 + $0x8] sm:$0xf]
              %174 = vst [vmem:[%s168 + $0x8] sm:$0xf] %v173
              %v175 = vld [vmem:[%s167 + $0xc] sm:$0xf]
              %176 = vst [vmem:[%s168 + $0xc] sm:$0xf] %v175
              %v177 = vld [vmem:[%s167 + $0x30] sm:$0xf]
              %178 = vst [vmem:[%s168 + $0x10] sm:$0xf] %v177
              %v179 = vld [vmem:[%s167 + $0x34] sm:$0xf]
              %180 = vst [vmem:[%s168 + $0x14] sm:$0xf] %v179
              %v181 = vld [vmem:[%s167 + $0x38] sm:$0xf]
              %182 = vst [vmem:[%s168 + $0x18] sm:$0xf] %v181
              %v183 = vld [vmem:[%s167 + $0x3c] sm:$0xf]
              %184 = vst [vmem:[%s168 + $0x1c] sm:$0xf] %v183
            $region81: #{base_feature_net.1} parent=68 // loop_footer
              %s166 = sadd.s32 1, %s162
            $region82: #{base_feature_net.1} parent=68 // loop_footer_branch
              %161 = sbr.rel target = $region78
            $region83: #{base_feature_net.1} parent=68 // loop_exit
              _
          $region69: #{base_feature_net.1} parent=53 // pred_fallthru
            _
        $region54: #{base_feature_net.1} parent=49 // pred_fallthru
          _
        // Predicated region
        $region55: #{base_feature_net.1} parent=49 // pred_check
          _
        $region56: #{base_feature_net.1} parent=49 // pred_check_branch
          %124 = sbr.rel (0) target = $region58
        $region57: #{base_feature_net.1} parent=49 // pred_region
          loop: start=0, step=1, limit=1
          $region59: #{base_feature_net.1} parent=57 // loop_pre_header
            _
          $region60: #{base_feature_net.1} parent=57 // loop_header
            %s127 = sphi 0, %s131
            %p128 = scmp.ge.s32.totalorder %s127, 1
            %s132 = sphi %s118, %s118
            %s133 = sphi [#allocation3], [#allocation3]
          $region61: #{base_feature_net.1} parent=57 // loop_header_branch
            %130 = sbr.rel (%p128) target = $region65
          $region62: #{base_feature_net.1} parent=57 // loop_body
            %v134 = vld [vmem:[%s132] sm:$0xf]
            %135 = vst [vmem:[%s133] sm:$0xf] %v134
            %v136 = vld [vmem:[%s132 + $0x4] sm:$0xf]
            %137 = vst [vmem:[%s133 + $0x4] sm:$0xf] %v136
            %v138 = vld [vmem:[%s132 + $0x8] sm:$0xf]
            %139 = vst [vmem:[%s133 + $0x8] sm:$0xf] %v138
            %v140 = vld [vmem:[%s132 + $0xc] sm:$0xf]
            %141 = vst [vmem:[%s133 + $0xc] sm:$0xf] %v140
            %v142 = vld [vmem:[%s132 + $0x30] sm:$0xf]
            %143 = vst [vmem:[%s133 + $0x10] sm:$0xf] %v142
            %v144 = vld [vmem:[%s132 + $0x34] sm:$0xf]
            %145 = vst [vmem:[%s133 + $0x14] sm:$0xf] %v144
            %v146 = vld [vmem:[%s132 + $0x38] sm:$0xf]
            %147 = vst [vmem:[%s133 + $0x18] sm:$0xf] %v146
            %v148 = vld [vmem:[%s132 + $0x3c] sm:$0xf]
            %149 = vst [vmem:[%s133 + $0x1c] sm:$0xf] %v148
          $region63: #{base_feature_net.1} parent=57 // loop_footer
            %s131 = sadd.s32 1, %s127
          $region64: #{base_feature_net.1} parent=57 // loop_footer_branch
            %126 = sbr.rel target = $region60
          $region65: #{base_feature_net.1} parent=57 // loop_exit
            _
        $region58: #{base_feature_net.1} parent=49 // pred_fallthru
          _
      $region50: #{base_feature_net.1} parent=45 // pred_fallthru
        _
      %185 = vnop
    $region46: #{base_feature_net.1} parent=1 // pred_fallthru
      _
    // Predicated region
    $region84: #{base_feature_net.1} parent=1 // pred_check
      _
    $region85: #{base_feature_net.1} parent=1 // pred_check_branch
      %187 = sbr.rel (0) target = $region87
    $region86: #{base_feature_net.1} parent=1 // pred_region
      _
    $region87: #{base_feature_net.1} parent=1 // pred_fallthru
      _
    // Predicated region
    $region88: #{base_feature_net.1} parent=1 // pred_check
      _
    $region89: #{base_feature_net.1} parent=1 // pred_check_branch
      %189 = sbr.rel (0) target = $region91
    $region90: #{base_feature_net.1} parent=1 // pred_region
      _
    $region91: #{base_feature_net.1} parent=1 // pred_fallthru
      _
    // Predicated region
    $region92: #{base_feature_net.1} parent=1 // pred_check
      _
    $region93: #{base_feature_net.1} parent=1 // pred_check_branch
      %191 = sbr.rel (0) target = $region95
    $region94: #{base_feature_net.1} parent=1 // pred_region
      _
    $region95: #{base_feature_net.1} parent=1 // pred_fallthru
      _
    // Predicated region
    $region96: #{base_feature_net.1} parent=1 // pred_check
      _
    $region97: #{base_feature_net.1} parent=1 // pred_check_branch
      %193 = sbr.rel (0) target = $region99
    $region98: #{base_feature_net.1} parent=1 // pred_region
      _
    $region99: #{base_feature_net.1} parent=1 // pred_fallthru
      _
    // Predicated region
    $region100: #{base_feature_net.1} parent=1 // pred_check
      _
    $region101: #{base_feature_net.1} parent=1 // pred_check_branch
      %195 = sbr.rel (0) target = $region103
    $region102: #{base_feature_net.1} parent=1 // pred_region
      _
    $region103: #{base_feature_net.1} parent=1 // pred_fallthru
      _
    // Predicated region
    $region104: #{base_feature_net.1} parent=1 // pred_check
      _
    $region105: #{base_feature_net.1} parent=1 // pred_check_branch
      %197 = sbr.rel (0) target = $region107
    $region106: #{base_feature_net.1} parent=1 // pred_region
      _
    $region107: #{base_feature_net.1} parent=1 // pred_fallthru
      _
    %s198 = sadd.s32 0, 1
    %s199 = smul.u32 %s198, 2
    %s200 = smul.u32 4, %s199
    %v202 = vld [vmem:[#allocation2] sm:$0xf]
    %v203 = vld [vmem:[#allocation2 + $0x4] sm:$0xf]
    %v204 = vld [vmem:[#allocation2 + $0x8] sm:$0xf]
    %v205 = vld [vmem:[#allocation2 + $0xc] sm:$0xf]
    %v206 = vld [vmem:[#allocation2 + $0x10] sm:$0xf]
    %v207 = vld [vmem:[#allocation2 + $0x14] sm:$0xf]
    %v208 = vld [vmem:[#allocation2 + $0x18] sm:$0xf]
    %v209 = vld [vmem:[#allocation2 + $0x1c] sm:$0xf]
    %v210 = vld [vmem:[#allocation2 + $0x20] sm:$0xf]
    %v211 = vld [vmem:[#allocation2 + $0x24] sm:$0xf]
    %v212 = vld [vmem:[#allocation2 + $0x28] sm:$0xf]
    %v213 = vld [vmem:[#allocation2 + $0x2c] sm:$0xf]
    %v214 = vld [vmem:[#allocation2 + $0x30] sm:$0xf]
    %v215 = vld [vmem:[#allocation2 + $0x34] sm:$0xf]
    %v216 = vld [vmem:[#allocation2 + $0x38] sm:$0xf]
    %v217 = vld [vmem:[#allocation2 + $0x3c] sm:$0xf]
    %v218 = vld [vmem:[#allocation3] sm:$0xf]
    %v219 = vld [vmem:[#allocation3 + $0x4] sm:$0xf]
    %v220 = vld [vmem:[#allocation3 + $0x8] sm:$0xf]
    %v221 = vld [vmem:[#allocation3 + $0x10] sm:$0xf]
    %v222 = vld [vmem:[#allocation3 + $0x14] sm:$0xf]
    %v223 = vld [vmem:[#allocation3 + $0x18] sm:$0xf]
    %v240 = vunpack.c.l.b16 %v202
    %v241 = vunpack.c.l.b16 %v203
    %v242 = vunpack.c.l.b16 %v204
    %v243 = vunpack.c.l.b16 %v205
    %v244 = vunpack.c.l.b16 %v206
    %v245 = vunpack.c.l.b16 %v207
    %v246 = vunpack.c.l.b16 %v208
    %v247 = vunpack.c.l.b16 %v209
    %v248 = vunpack.c.l.b16 %v210
    %v249 = vunpack.c.l.b16 %v211
    %v250 = vunpack.c.l.b16 %v212
    %v251 = vunpack.c.l.b16 %v213
    %v252 = vunpack.c.l.b16 %v214
    %v253 = vunpack.c.l.b16 %v215
    %v254 = vunpack.c.l.b16 %v216
    %v255 = vunpack.c.l.b16 %v217
    %v262 = vunpack.c.l.b16 %v218
    %v263 = vunpack.c.l.b16 %v219
    %v264 = vunpack.c.l.b16 %v220
    %v265 = vunpack.c.l.b16 %v221
    %v266 = vunpack.c.l.b16 %v222
    %v267 = vunpack.c.l.b16 %v223
    %v268 = vld [vmem:[%s2] sm:$0xff]
    %v269 = vld [vmem:[%s2 + $0x8] sm:$0xf]
    %v270 = vld [vmem:[%s2 + $0xc] sm:$0xff]
    %v271 = vld [vmem:[%s2 + $0x14] sm:$0xf]
    %v272 = vld [vmem:[%s2 + $0x18] sm:$0xff]
    %v273 = vld [vmem:[%s2 + $0x20] sm:$0xf]
    %v274 = vld [vmem:[%s2 + $0x24] sm:$0xff]
    %v275 = vld [vmem:[%s2 + $0x2c] sm:$0xf]
    %v276 = vld [vmem:[%s2 + $0x30] sm:$0xff]
    %v277 = vld [vmem:[%s2 + $0x38] sm:$0xf]
    %v278 = vld [vmem:[%s2 + $0x3c] sm:$0xff]
    %v279 = vld [vmem:[%s2 + $0x44] sm:$0xf]
    %v280 = vld [vmem:[%s2 + $0x48] sm:$0xff]
    %v281 = vld [vmem:[%s2 + $0x50] sm:$0xf]
    %v282 = vld [vmem:[%s2 + $0x54] sm:$0xff]
    %v283 = vld [vmem:[%s2 + $0x5c] sm:$0xf]
    %v284 = vpack.c.b16 %v241, %v240
    %v285 = vpack.c.b16 %v243, %v242
    %v286 = vpack.c.b16 %v245, %v244
    %v287 = vpack.c.b16 %v247, %v246
    %v288 = vpack.c.b16 %v263, %v262
    %v289 = vpack.c.b16 %v248, %v264
    %v290 = vpack.c.b16 %v250, %v249
    %v291 = vpack.c.b16 %v252, %v251
    %v292 = vpack.c.b16 %v254, %v253
    %v293 = vpack.c.b16 %v265, %v255
    %v294 = vpack.c.b16 %v267, %v266
    %v311 = vunpack.c.l.b16 %v268
    %v312 = vunpack.c.h.b16 %v268
    %v313 = vunpack.c.l.b16 %v269
    %v314 = vunpack.c.l.b16 %v270
    %v315 = vunpack.c.h.b16 %v270
    %v316 = vunpack.c.l.b16 %v271
    %v317 = vunpack.c.l.b16 %v272
    %v318 = vunpack.c.h.b16 %v272
    %v319 = vunpack.c.l.b16 %v273
    %v320 = vunpack.c.l.b16 %v274
    %v321 = vunpack.c.h.b16 %v274
    %v322 = vunpack.c.l.b16 %v275
    %v323 = vunpack.c.l.b16 %v276
    %v324 = vunpack.c.h.b16 %v276
    %v325 = vunpack.c.l.b16 %v277
    %v326 = vunpack.c.l.b16 %v278
    %v327 = vunpack.c.h.b16 %v278
    %v328 = vunpack.c.l.b16 %v279
    %v329 = vunpack.c.l.b16 %v280
    %v330 = vunpack.c.h.b16 %v280
    %v331 = vunpack.c.l.b16 %v281
    %v332 = vunpack.c.l.b16 %v282
    %v333 = vunpack.c.h.b16 %v282
    %v334 = vunpack.c.l.b16 %v283
    %v335 = vpack.c.b16 %v314, %v311
    %v336 = vpack.c.b16 %v315, %v312
    %v337 = vpack.c.b16 %v316, %v313
    %v338 = vpack.c.b16 %v320, %v317
    %v339 = vpack.c.b16 %v321, %v318
    %v340 = vpack.c.b16 %v322, %v319
    %v341 = vpack.c.b16 %v326, %v323
    %v342 = vpack.c.b16 %v327, %v324
    %v343 = vpack.c.b16 %v328, %v325
    %v344 = vpack.c.b16 %v332, %v329
    %v345 = vpack.c.b16 %v333, %v330
    %v346 = vpack.c.b16 %v334, %v331
    %vm359 = vcmask 523264
    %v361 = vsel %vm359, %v284, 0
    %v364 = vsel %vm359, %v285, 0
    %v367 = vsel %vm359, %v286, 0
    %v370 = vsel %vm359, %v287, 0
    %v373 = vsel %vm359, %v288, 0
    %v376 = vsel %vm359, %v289, 0
    %v379 = vsel %vm359, %v290, 0
    %v382 = vsel %vm359, %v291, 0
    %v385 = vsel %vm359, %v292, 0
    %v388 = vsel %vm359, %v293, 0
    %v391 = vsel %vm359, %v294, 0
    %393 = vmatprep.subr.bf16.mxu0 %v336
    %394 = vmatpush1.bf16.msra.mxu0 %v335
    %395 = vmatprep.subr.bf16.mxu0 %v339
    %396 = vmatpush1.bf16.msra.mxu0 %v338
    %397 = vmatprep.subr.bf16.mxu0 %v342
    %398 = vmatpush1.bf16.msra.mxu0 %v341
    %399 = vmatprep.subr.bf16.mxu0 %v345
    %400 = vmatpush1.bf16.msra.mxu0 %v344
    %401 = vmatprep.subr.bf16.mxu0 0
    %402 = vmatpush1.bf16.msra.mxu0 0
    %403 = vmatprep.subr.bf16.mxu0 0
    %404 = vmatpush1.bf16.msra.mxu0 0
    %405 = vmatprep.subr.bf16.mxu0 0
    %406 = vmatpush1.bf16.msra.mxu0 0
    %407 = vmatprep.subr.bf16.mxu0 0
    %408 = vmatpush1.bf16.msra.mxu0 0
    %409 = vmatprep.subr.bf16.mxu0 0
    %410 = vmatpush1.bf16.msra.mxu0 0
    %411 = vmatprep.subr.bf16.mxu0 0
    %412 = vmatpush1.bf16.msra.mxu0 0
    %413 = vmatprep.subr.bf16.mxu0 0
    %414 = vmatpush1.bf16.msra.mxu0 0
    %415 = vmatprep.subr.bf16.mxu0 0
    %416 = vmatpush1.bf16.msra.mxu0 0
    %417 = vmatprep.subr.bf16.mxu0 0
    %418 = vmatpush1.bf16.msra.mxu0 0
    %419 = vmatprep.subr.bf16.mxu0 0
    %420 = vmatpush1.bf16.msra.mxu0 0
    %421 = vmatprep.subr.bf16.mxu0 0
    %422 = vmatpush1.bf16.msra.mxu0 0
    %423 = vmatprep.subr.bf16.mxu0 0
    %424 = vmatpush1.bf16.msra.mxu0 0
    %425 = vmatprep.mubr.bf16.mxu0 0
    %426 = vmatmul.mubr.bf16.gmra.mrb[0].mxu0 %v361
    %v427 = vpop.f32.mrb[0].mxu0
    %v428 = vadd.f32 0.0, %v427
    %v429 = vpop.f32.mrb[0].mxu0
    %v430 = vadd.f32 0.0, %v429
    %v431 = vpop.f32.mrb[0].mxu0
    %v432 = vadd.f32 0.0, %v431
    %v433 = vpop.f32.mrb[0].mxu0
    %v434 = vadd.f32 0.0, %v433
    %435 = vmatprep.mubr.bf16.mxu0 0
    %436 = vmatmul.mubr.bf16.gmra.mrb[0].mxu0 %v364
    %v437 = vpop.f32.mrb[0].mxu0
    %v438 = vadd.f32 0.0, %v437
    %v439 = vpop.f32.mrb[0].mxu0
    %v440 = vadd.f32 0.0, %v439
    %v441 = vpop.f32.mrb[0].mxu0
    %v442 = vadd.f32 0.0, %v441
    %v443 = vpop.f32.mrb[0].mxu0
    %v444 = vadd.f32 0.0, %v443
    %445 = vmatprep.mubr.bf16.mxu0 0
    %446 = vmatmul.mubr.bf16.gmra.mrb[0].mxu0 %v367
    %v447 = vpop.f32.mrb[0].mxu0
    %v448 = vadd.f32 0.0, %v447
    %v449 = vpop.f32.mrb[0].mxu0
    %v450 = vadd.f32 0.0, %v449
    %v451 = vpop.f32.mrb[0].mxu0
    %v452 = vadd.f32 0.0, %v451
    %v453 = vpop.f32.mrb[0].mxu0
    %v454 = vadd.f32 0.0, %v453
    %455 = vmatprep.mubr.bf16.mxu0 0
    %456 = vmatmul.mubr.bf16.gmra.mrb[0].mxu0 %v370
    %v457 = vpop.f32.mrb[0].mxu0
    %v458 = vadd.f32 0.0, %v457
    %v459 = vpop.f32.mrb[0].mxu0
    %v460 = vadd.f32 0.0, %v459
    %v461 = vpop.f32.mrb[0].mxu0
    %v462 = vadd.f32 0.0, %v461
    %v463 = vpop.f32.mrb[0].mxu0
    %v464 = vadd.f32 0.0, %v463
    %465 = vmatprep.mubr.bf16.mxu0 0
    %466 = vmatmul.mubr.bf16.gmra.mrb[0].mxu0 %v373
    %v467 = vpop.f32.mrb[0].mxu0
    %v468 = vadd.f32 0.0, %v467
    %v469 = vpop.f32.mrb[0].mxu0
    %v470 = vadd.f32 0.0, %v469
    %v471 = vpop.f32.mrb[0].mxu0
    %v472 = vadd.f32 0.0, %v471
    %v473 = vpop.f32.mrb[0].mxu0
    %v474 = vadd.f32 0.0, %v473
    %475 = vmatprep.mubr.bf16.mxu0 0
    %476 = vmatmul.mubr.bf16.gmra.mrb[0].mxu0 %v376
    %v477 = vpop.f32.mrb[0].mxu0
    %v478 = vadd.f32 0.0, %v477
    %v479 = vpop.f32.mrb[0].mxu0
    %v480 = vadd.f32 0.0, %v479
    %v481 = vpop.f32.mrb[0].mxu0
    %v482 = vadd.f32 0.0, %v481
    %v483 = vpop.f32.mrb[0].mxu0
    %v484 = vadd.f32 0.0, %v483
    %485 = vmatprep.mubr.bf16.mxu0 0
    %486 = vmatmul.mubr.bf16.gmra.mrb[0].mxu0 %v379
    %v487 = vpop.f32.mrb[0].mxu0
    %v488 = vadd.f32 0.0, %v487
    %v489 = vpop.f32.mrb[0].mxu0
    %v490 = vadd.f32 0.0, %v489
    %v491 = vpop.f32.mrb[0].mxu0
    %v492 = vadd.f32 0.0, %v491
    %v493 = vpop.f32.mrb[0].mxu0
    %v494 = vadd.f32 0.0, %v493
    %495 = vmatprep.mubr.bf16.mxu0 0
    %496 = vmatmul.mubr.bf16.gmra.mrb[0].mxu0 %v382
    %v497 = vpop.f32.mrb[0].mxu0
    %v498 = vadd.f32 0.0, %v497
    %v499 = vpop.f32.mrb[0].mxu0
    %v500 = vadd.f32 0.0, %v499
    %v501 = vpop.f32.mrb[0].mxu0
    %v502 = vadd.f32 0.0, %v501
    %v503 = vpop.f32.mrb[0].mxu0
    %v504 = vadd.f32 0.0, %v503
    %505 = vmatprep.mubr.bf16.mxu0 0
    %506 = vmatmul.mubr.bf16.gmra.mrb[0].mxu0 %v385
    %v507 = vpop.f32.mrb[0].mxu0
    %v508 = vadd.f32 0.0, %v507
    %v509 = vpop.f32.mrb[0].mxu0
    %v510 = vadd.f32 0.0, %v509
    %v511 = vpop.f32.mrb[0].mxu0
    %v512 = vadd.f32 0.0, %v511
    %v513 = vpop.f32.mrb[0].mxu0
    %v514 = vadd.f32 0.0, %v513
    %515 = vmatprep.mubr.bf16.mxu0 0
    %516 = vmatmul.mubr.bf16.gmra.mrb[0].mxu0 %v388
    %v517 = vpop.f32.mrb[0].mxu0
    %v518 = vadd.f32 0.0, %v517
    %v519 = vpop.f32.mrb[0].mxu0
    %v520 = vadd.f32 0.0, %v519
    %v521 = vpop.f32.mrb[0].mxu0
    %v522 = vadd.f32 0.0, %v521
    %v523 = vpop.f32.mrb[0].mxu0
    %v524 = vadd.f32 0.0, %v523
    %525 = vmatprep.mubr.bf16.mxu0 0
    %526 = vmatmul.mubr.bf16.gmra.mrb[0].mxu0 %v391
    %v527 = vpop.f32.mrb[0].mxu0
    %v528 = vadd.f32 0.0, %v527
    %v529 = vpop.f32.mrb[0].mxu0
    %v530 = vadd.f32 0.0, %v529
    %v531 = vpop.f32.mrb[0].mxu0
    %v532 = vadd.f32 0.0, %v531
    %v533 = vpop.f32.mrb[0].mxu0
    %v534 = vadd.f32 0.0, %v533
    %535 = vdwg.mxu0
    %536 = vmatprep.subr.bf16.mxu0 0
    %537 = vmatpush1.bf16.msra.mxu0 %v337
    %538 = vmatprep.subr.bf16.mxu0 0
    %539 = vmatpush1.bf16.msra.mxu0 %v340
    %540 = vmatprep.subr.bf16.mxu0 0
    %541 = vmatpush1.bf16.msra.mxu0 %v343
    %542 = vmatprep.subr.bf16.mxu0 0
    %543 = vmatpush1.bf16.msra.mxu0 %v346
    %544 = vmatprep.subr.bf16.mxu0 0
    %545 = vmatpush1.bf16.msra.mxu0 0
    %546 = vmatprep.subr.bf16.mxu0 0
    %547 = vmatpush1.bf16.msra.mxu0 0
    %548 = vmatprep.subr.bf16.mxu0 0
    %549 = vmatpush1.bf16.msra.mxu0 0
    %550 = vmatprep.subr.bf16.mxu0 0
    %551 = vmatpush1.bf16.msra.mxu0 0
    %552 = vmatprep.subr.bf16.mxu0 0
    %553 = vmatpush1.bf16.msra.mxu0 0
    %554 = vmatprep.subr.bf16.mxu0 0
    %555 = vmatpush1.bf16.msra.mxu0 0
    %556 = vmatprep.subr.bf16.mxu0 0
    %557 = vmatpush1.bf16.msra.mxu0 0
    %558 = vmatprep.subr.bf16.mxu0 0
    %559 = vmatpush1.bf16.msra.mxu0 0
    %560 = vmatprep.subr.bf16.mxu0 0
    %561 = vmatpush1.bf16.msra.mxu0 0
    %562 = vmatprep.subr.bf16.mxu0 0
    %563 = vmatpush1.bf16.msra.mxu0 0
    %564 = vmatprep.subr.bf16.mxu0 0
    %565 = vmatpush1.bf16.msra.mxu0 0
    %566 = vmatprep.subr.bf16.mxu0 0
    %567 = vmatpush1.bf16.msra.mxu0 0
    %568 = vmatprep.mubr.bf16.mxu0 0
    %569 = vmatmul.mubr.bf16.gmra.mrb[0].mxu0 %v361
    %v570 = vpop.f32.mrb[0].mxu0
    %v571 = vpop.f32.mrb[0].mxu0
    %v572 = vpop.f32.mrb[0].mxu0
    %v573 = vadd.f32 0.0, %v572
    %v574 = vpop.f32.mrb[0].mxu0
    %575 = vmatprep.mubr.bf16.mxu0 0
    %576 = vmatmul.mubr.bf16.gmra.mrb[0].mxu0 %v364
    %v577 = vpop.f32.mrb[0].mxu0
    %v578 = vadd.f32 0.0, %v577
    %v579 = vpop.f32.mrb[0].mxu0
    %v580 = vpop.f32.mrb[0].mxu0
    %v581 = vadd.f32 0.0, %v580
    %v582 = vpop.f32.mrb[0].mxu0
    %583 = vmatprep.mubr.bf16.mxu0 0
    %584 = vmatmul.mubr.bf16.gmra.mrb[0].mxu0 %v367
    %v585 = vpop.f32.mrb[0].mxu0
    %v586 = vadd.f32 0.0, %v585
    %v587 = vpop.f32.mrb[0].mxu0
    %v588 = vpop.f32.mrb[0].mxu0
    %v589 = vadd.f32 0.0, %v588
    %v590 = vpop.f32.mrb[0].mxu0
    %591 = vmatprep.mubr.bf16.mxu0 0
    %592 = vmatmul.mubr.bf16.gmra.mrb[0].mxu0 %v370
    %v593 = vpop.f32.mrb[0].mxu0
    %v594 = vadd.f32 0.0, %v593
    %v595 = vpop.f32.mrb[0].mxu0
    %v596 = vpop.f32.mrb[0].mxu0
    %v597 = vadd.f32 0.0, %v596
    %v598 = vpop.f32.mrb[0].mxu0
    %599 = vmatprep.mubr.bf16.mxu0 0
    %600 = vmatmul.mubr.bf16.gmra.mrb[0].mxu0 %v373
    %v601 = vpop.f32.mrb[0].mxu0
    %v602 = vadd.f32 0.0, %v601
    %v603 = vpop.f32.mrb[0].mxu0
    %v604 = vpop.f32.mrb[0].mxu0
    %v605 = vadd.f32 0.0, %v604
    %v606 = vpop.f32.mrb[0].mxu0
    %607 = vmatprep.mubr.bf16.mxu0 0
    %608 = vmatmul.mubr.bf16.gmra.mrb[0].mxu0 %v376
    %v609 = vpop.f32.mrb[0].mxu0
    %v610 = vadd.f32 0.0, %v609
    %v611 = vpop.f32.mrb[0].mxu0
    %v612 = vpop.f32.mrb[0].mxu0
    %v613 = vpop.f32.mrb[0].mxu0
    %614 = vmatprep.mubr.bf16.mxu0 0
    %615 = vmatmul.mubr.bf16.gmra.mrb[0].mxu0 %v379
    %v616 = vpop.f32.mrb[0].mxu0
    %v617 = vadd.f32 0.0, %v616
    %v618 = vpop.f32.mrb[0].mxu0
    %v619 = vpop.f32.mrb[0].mxu0
    %v620 = vadd.f32 0.0, %v619
    %v621 = vpop.f32.mrb[0].mxu0
    %622 = vmatprep.mubr.bf16.mxu0 0
    %623 = vmatmul.mubr.bf16.gmra.mrb[0].mxu0 %v382
    %v624 = vpop.f32.mrb[0].mxu0
    %v625 = vadd.f32 0.0, %v624
    %v626 = vpop.f32.mrb[0].mxu0
    %v627 = vpop.f32.mrb[0].mxu0
    %v628 = vadd.f32 0.0, %v627
    %v629 = vpop.f32.mrb[0].mxu0
    %630 = vmatprep.mubr.bf16.mxu0 0
    %631 = vmatmul.mubr.bf16.gmra.mrb[0].mxu0 %v385
    %v632 = vpop.f32.mrb[0].mxu0
    %v633 = vadd.f32 0.0, %v632
    %v634 = vpop.f32.mrb[0].mxu0
    %v635 = vpop.f32.mrb[0].mxu0
    %v636 = vadd.f32 0.0, %v635
    %v637 = vpop.f32.mrb[0].mxu0
    %638 = vmatprep.mubr.bf16.mxu0 0
    %639 = vmatmul.mubr.bf16.gmra.mrb[0].mxu0 %v388
    %v640 = vpop.f32.mrb[0].mxu0
    %v641 = vadd.f32 0.0, %v640
    %v642 = vpop.f32.mrb[0].mxu0
    %v643 = vpop.f32.mrb[0].mxu0
    %v644 = vadd.f32 0.0, %v643
    %v645 = vpop.f32.mrb[0].mxu0
    %646 = vmatprep.mubr.bf16.mxu0 0
    %647 = vmatmul.mubr.bf16.gmra.mrb[0].mxu0 %v391
    %v648 = vpop.f32.mrb[0].mxu0
    %v649 = vadd.f32 0.0, %v648
    %v650 = vpop.f32.mrb[0].mxu0
    %v651 = vpop.f32.mrb[0].mxu0
    %v652 = vadd.f32 0.0, %v651
    %v653 = vpop.f32.mrb[0].mxu0
    %654 = vdwg.mxu0
    %vm677 = vcmask 1046528
    %v678 = vrot.slane %v428, 1
    %v679 = vrot.slane %v432, 1
    %v680 = vsel %vm677, %v678, %v679
    %v681 = vrot.slane %v438, 1
    %v682 = vsel %vm677, %v679, %v681
    %v683 = vrot.slane %v442, 1
    %v684 = vsel %vm677, %v681, %v683
    %v685 = vrot.slane %v448, 1
    %v686 = vsel %vm677, %v683, %v685
    %v687 = vrot.slane %v452, 1
    %v688 = vsel %vm677, %v685, %v687
    %v689 = vrot.slane %v458, 1
    %v690 = vsel %vm677, %v687, %v689
    %v691 = vrot.slane %v462, 1
    %v692 = vsel %vm677, %v689, %v691
    %v693 = vrot.slane %v468, 1
    %v694 = vsel %vm677, %v691, %v693
    %v695 = vrot.slane %v472, 1
    %v696 = vsel %vm677, %v693, %v695
    %v697 = vrot.slane %v478, 1
    %v698 = vsel %vm677, %v695, %v697
    %v699 = vrot.slane %v482, 1
    %v700 = vrot.slane %v488, 1
    %v701 = vsel %vm677, %v699, %v700
    %v702 = vrot.slane %v492, 1
    %v703 = vsel %vm677, %v700, %v702
    %v704 = vrot.slane %v498, 1
    %v705 = vsel %vm677, %v702, %v704
    %v706 = vrot.slane %v502, 1
    %v707 = vsel %vm677, %v704, %v706
    %v708 = vrot.slane %v508, 1
    %v709 = vsel %vm677, %v706, %v708
    %v710 = vrot.slane %v512, 1
    %v711 = vsel %vm677, %v708, %v710
    %v712 = vrot.slane %v518, 1
    %v713 = vsel %vm677, %v710, %v712
    %v714 = vrot.slane %v522, 1
    %v715 = vsel %vm677, %v712, %v714
    %v716 = vrot.slane %v528, 1
    %v717 = vsel %vm677, %v714, %v716
    %v718 = vrot.slane %v532, 1
    %v719 = vsel %vm677, %v716, %v718
    %720 = vrot.lane.b32.xlu0 %v680, 96
    %v721 = vpop.permute.xlu0 %720
    %722 = vrot.lane.b32.xlu0 %v682, 96
    %v723 = vpop.permute.xlu0 %722
    %724 = vrot.lane.b32.xlu0 %v684, 96
    %v725 = vpop.permute.xlu0 %724
    %726 = vrot.lane.b32.xlu0 %v686, 96
    %v727 = vpop.permute.xlu0 %726
    %728 = vrot.lane.b32.xlu0 %v688, 96
    %v729 = vpop.permute.xlu0 %728
    %730 = vrot.lane.b32.xlu0 %v690, 96
    %v731 = vpop.permute.xlu0 %730
    %732 = vrot.lane.b32.xlu0 %v692, 96
    %v733 = vpop.permute.xlu0 %732
    %734 = vrot.lane.b32.xlu0 %v694, 96
    %v735 = vpop.permute.xlu0 %734
    %736 = vrot.lane.b32.xlu0 %v696, 96
    %v737 = vpop.permute.xlu0 %736
    %738 = vrot.lane.b32.xlu0 %v698, 96
    %v739 = vpop.permute.xlu0 %738
    %740 = vrot.lane.b32.xlu0 %v701, 96
    %v741 = vpop.permute.xlu0 %740
    %742 = vrot.lane.b32.xlu0 %v703, 96
    %v743 = vpop.permute.xlu0 %742
    %744 = vrot.lane.b32.xlu0 %v705, 96
    %v745 = vpop.permute.xlu0 %744
    %746 = vrot.lane.b32.xlu0 %v707, 96
    %v747 = vpop.permute.xlu0 %746
    %748 = vrot.lane.b32.xlu0 %v709, 96
    %v749 = vpop.permute.xlu0 %748
    %750 = vrot.lane.b32.xlu0 %v711, 96
    %v751 = vpop.permute.xlu0 %750
    %752 = vrot.lane.b32.xlu0 %v713, 96
    %v753 = vpop.permute.xlu0 %752
    %754 = vrot.lane.b32.xlu0 %v715, 96
    %v755 = vpop.permute.xlu0 %754
    %756 = vrot.lane.b32.xlu0 %v717, 96
    %v757 = vpop.permute.xlu0 %756
    %758 = vrot.lane.b32.xlu0 %v719, 96
    %v759 = vpop.permute.xlu0 %758
    %v780 = vadd.f32 %v428, %v721
    %v781 = vadd.f32 %v432, %v723
    %v782 = vadd.f32 %v438, %v725
    %v783 = vadd.f32 %v442, %v727
    %v784 = vadd.f32 %v448, %v729
    %v785 = vadd.f32 %v452, %v731
    %v786 = vadd.f32 %v458, %v733
    %v787 = vadd.f32 %v462, %v735
    %v788 = vadd.f32 %v468, %v737
    %v789 = vadd.f32 %v472, %v739
    %v790 = vadd.f32 %v482, %v741
    %v791 = vadd.f32 %v488, %v743
    %v792 = vadd.f32 %v492, %v745
    %v793 = vadd.f32 %v498, %v747
    %v794 = vadd.f32 %v502, %v749
    %v795 = vadd.f32 %v508, %v751
    %v796 = vadd.f32 %v512, %v753
    %v797 = vadd.f32 %v518, %v755
    %v798 = vadd.f32 %v522, %v757
    %v799 = vadd.f32 %v528, %v759
    %vm800 = vcmask 1045504
    %v801 = vrot.slane %v428, 2
    %v802 = vrot.slane %v432, 2
    %v803 = vsel %vm800, %v801, %v802
    %v804 = vrot.slane %v438, 2
    %v805 = vsel %vm800, %v802, %v804
    %v806 = vrot.slane %v442, 2
    %v807 = vsel %vm800, %v804, %v806
    %v808 = vrot.slane %v448, 2
    %v809 = vsel %vm800, %v806, %v808
    %v810 = vrot.slane %v452, 2
    %v811 = vsel %vm800, %v808, %v810
    %v812 = vrot.slane %v458, 2
    %v813 = vsel %vm800, %v810, %v812
    %v814 = vrot.slane %v462, 2
    %v815 = vsel %vm800, %v812, %v814
    %v816 = vrot.slane %v468, 2
    %v817 = vsel %vm800, %v814, %v816
    %v818 = vrot.slane %v472, 2
    %v819 = vsel %vm800, %v816, %v818
    %v820 = vrot.slane %v478, 2
    %v821 = vsel %vm800, %v818, %v820
    %v822 = vrot.slane %v482, 2
    %v823 = vrot.slane %v488, 2
    %v824 = vsel %vm800, %v822, %v823
    %v825 = vrot.slane %v492, 2
    %v826 = vsel %vm800, %v823, %v825
    %v827 = vrot.slane %v498, 2
    %v828 = vsel %vm800, %v825, %v827
    %v829 = vrot.slane %v502, 2
    %v830 = vsel %vm800, %v827, %v829
    %v831 = vrot.slane %v508, 2
    %v832 = vsel %vm800, %v829, %v831
    %v833 = vrot.slane %v512, 2
    %v834 = vsel %vm800, %v831, %v833
    %v835 = vrot.slane %v518, 2
    %v836 = vsel %vm800, %v833, %v835
    %v837 = vrot.slane %v522, 2
    %v838 = vsel %vm800, %v835, %v837
    %v839 = vrot.slane %v528, 2
    %v840 = vsel %vm800, %v837, %v839
    %v841 = vrot.slane %v532, 2
    %v842 = vsel %vm800, %v839, %v841
    %843 = vrot.lane.b32.xlu0 %v803, 64
    %v844 = vpop.permute.xlu0 %843
    %845 = vrot.lane.b32.xlu0 %v805, 64
    %v846 = vpop.permute.xlu0 %845
    %847 = vrot.lane.b32.xlu0 %v807, 64
    %v848 = vpop.permute.xlu0 %847
    %849 = vrot.lane.b32.xlu0 %v809, 64
    %v850 = vpop.permute.xlu0 %849
    %851 = vrot.lane.b32.xlu0 %v811, 64
    %v852 = vpop.permute.xlu0 %851
    %853 = vrot.lane.b32.xlu0 %v813, 64
    %v854 = vpop.permute.xlu0 %853
    %855 = vrot.lane.b32.xlu0 %v815, 64
    %v856 = vpop.permute.xlu0 %855
    %857 = vrot.lane.b32.xlu0 %v817, 64
    %v858 = vpop.permute.xlu0 %857
    %859 = vrot.lane.b32.xlu0 %v819, 64
    %v860 = vpop.permute.xlu0 %859
    %861 = vrot.lane.b32.xlu0 %v821, 64
    %v862 = vpop.permute.xlu0 %861
    %863 = vrot.lane.b32.xlu0 %v824, 64
    %v864 = vpop.permute.xlu0 %863
    %865 = vrot.lane.b32.xlu0 %v826, 64
    %v866 = vpop.permute.xlu0 %865
    %867 = vrot.lane.b32.xlu0 %v828, 64
    %v868 = vpop.permute.xlu0 %867
    %869 = vrot.lane.b32.xlu0 %v830, 64
    %v870 = vpop.permute.xlu0 %869
    %871 = vrot.lane.b32.xlu0 %v832, 64
    %v872 = vpop.permute.xlu0 %871
    %873 = vrot.lane.b32.xlu0 %v834, 64
    %v874 = vpop.permute.xlu0 %873
    %875 = vrot.lane.b32.xlu0 %v836, 64
    %v876 = vpop.permute.xlu0 %875
    %877 = vrot.lane.b32.xlu0 %v838, 64
    %v878 = vpop.permute.xlu0 %877
    %879 = vrot.lane.b32.xlu0 %v840, 64
    %v880 = vpop.permute.xlu0 %879
    %881 = vrot.lane.b32.xlu0 %v842, 64
    %v882 = vpop.permute.xlu0 %881
    %v903 = vadd.f32 %v780, %v844
    %v904 = vadd.f32 %v781, %v846
    %v905 = vadd.f32 %v782, %v848
    %v906 = vadd.f32 %v783, %v850
    %v907 = vadd.f32 %v784, %v852
    %v908 = vadd.f32 %v785, %v854
    %v909 = vadd.f32 %v786, %v856
    %v910 = vadd.f32 %v787, %v858
    %v911 = vadd.f32 %v788, %v860
    %v912 = vadd.f32 %v789, %v862
    %v913 = vadd.f32 %v790, %v864
    %v914 = vadd.f32 %v791, %v866
    %v915 = vadd.f32 %v792, %v868
    %v916 = vadd.f32 %v793, %v870
    %v917 = vadd.f32 %v794, %v872
    %v918 = vadd.f32 %v795, %v874
    %v919 = vadd.f32 %v796, %v876
    %v920 = vadd.f32 %v797, %v878
    %v921 = vadd.f32 %v798, %v880
    %v922 = vadd.f32 %v799, %v882
    %vm923 = vcmask 1044480
    %v924 = vrot.slane %v428, 3
    %v925 = vrot.slane %v432, 3
    %v926 = vsel %vm923, %v924, %v925
    %v927 = vrot.slane %v438, 3
    %v928 = vsel %vm923, %v925, %v927
    %v929 = vrot.slane %v442, 3
    %v930 = vsel %vm923, %v927, %v929
    %v931 = vrot.slane %v448, 3
    %v932 = vsel %vm923, %v929, %v931
    %v933 = vrot.slane %v452, 3
    %v934 = vsel %vm923, %v931, %v933
    %v935 = vrot.slane %v458, 3
    %v936 = vsel %vm923, %v933, %v935
    %v937 = vrot.slane %v462, 3
    %v938 = vsel %vm923, %v935, %v937
    %v939 = vrot.slane %v468, 3
    %v940 = vsel %vm923, %v937, %v939
    %v941 = vrot.slane %v472, 3
    %v942 = vsel %vm923, %v939, %v941
    %v943 = vrot.slane %v478, 3
    %v944 = vsel %vm923, %v941, %v943
    %v945 = vrot.slane %v482, 3
    %v946 = vrot.slane %v488, 3
    %v947 = vsel %vm923, %v945, %v946
    %v948 = vrot.slane %v492, 3
    %v949 = vsel %vm923, %v946, %v948
    %v950 = vrot.slane %v498, 3
    %v951 = vsel %vm923, %v948, %v950
    %v952 = vrot.slane %v502, 3
    %v953 = vsel %vm923, %v950, %v952
    %v954 = vrot.slane %v508, 3
    %v955 = vsel %vm923, %v952, %v954
    %v956 = vrot.slane %v512, 3
    %v957 = vsel %vm923, %v954, %v956
    %v958 = vrot.slane %v518, 3
    %v959 = vsel %vm923, %v956, %v958
    %v960 = vrot.slane %v522, 3
    %v961 = vsel %vm923, %v958, %v960
    %v962 = vrot.slane %v528, 3
    %v963 = vsel %vm923, %v960, %v962
    %v964 = vrot.slane %v532, 3
    %v965 = vsel %vm923, %v962, %v964
    %966 = vrot.lane.b32.xlu0 %v926, 32
    %v967 = vpop.permute.xlu0 %966
    %968 = vrot.lane.b32.xlu0 %v928, 32
    %v969 = vpop.permute.xlu0 %968
    %970 = vrot.lane.b32.xlu0 %v930, 32
    %v971 = vpop.permute.xlu0 %970
    %972 = vrot.lane.b32.xlu0 %v932, 32
    %v973 = vpop.permute.xlu0 %972
    %974 = vrot.lane.b32.xlu0 %v934, 32
    %v975 = vpop.permute.xlu0 %974
    %976 = vrot.lane.b32.xlu0 %v936, 32
    %v977 = vpop.permute.xlu0 %976
    %978 = vrot.lane.b32.xlu0 %v938, 32
    %v979 = vpop.permute.xlu0 %978
    %980 = vrot.lane.b32.xlu0 %v940, 32
    %v981 = vpop.permute.xlu0 %980
    %982 = vrot.lane.b32.xlu0 %v942, 32
    %v983 = vpop.permute.xlu0 %982
    %984 = vrot.lane.b32.xlu0 %v944, 32
    %v985 = vpop.permute.xlu0 %984
    %986 = vrot.lane.b32.xlu0 %v947, 32
    %v987 = vpop.permute.xlu0 %986
    %988 = vrot.lane.b32.xlu0 %v949, 32
    %v989 = vpop.permute.xlu0 %988
    %990 = vrot.lane.b32.xlu0 %v951, 32
    %v991 = vpop.permute.xlu0 %990
    %992 = vrot.lane.b32.xlu0 %v953, 32
    %v993 = vpop.permute.xlu0 %992
    %994 = vrot.lane.b32.xlu0 %v955, 32
    %v995 = vpop.permute.xlu0 %994
    %996 = vrot.lane.b32.xlu0 %v957, 32
    %v997 = vpop.permute.xlu0 %996
    %998 = vrot.lane.b32.xlu0 %v959, 32
    %v999 = vpop.permute.xlu0 %998
    %1000 = vrot.lane.b32.xlu0 %v961, 32
    %v1001 = vpop.permute.xlu0 %1000
    %1002 = vrot.lane.b32.xlu0 %v963, 32
    %v1003 = vpop.permute.xlu0 %1002
    %1004 = vrot.lane.b32.xlu0 %v965, 32
    %v1005 = vpop.permute.xlu0 %1004
    %v1026 = vadd.f32 %v903, %v967
    %v1027 = vadd.f32 %v904, %v969
    %v1028 = vadd.f32 %v905, %v971
    %v1029 = vadd.f32 %v906, %v973
    %v1030 = vadd.f32 %v907, %v975
    %v1031 = vadd.f32 %v908, %v977
    %v1032 = vadd.f32 %v909, %v979
    %v1033 = vadd.f32 %v910, %v981
    %v1034 = vadd.f32 %v911, %v983
    %v1035 = vadd.f32 %v912, %v985
    %v1036 = vadd.f32 %v913, %v987
    %v1037 = vadd.f32 %v914, %v989
    %v1038 = vadd.f32 %v915, %v991
    %v1039 = vadd.f32 %v916, %v993
    %v1040 = vadd.f32 %v917, %v995
    %v1041 = vadd.f32 %v918, %v997
    %v1042 = vadd.f32 %v919, %v999
    %v1043 = vadd.f32 %v920, %v1001
    %v1044 = vadd.f32 %v921, %v1003
    %v1045 = vadd.f32 %v922, %v1005
    %vm1068 = vcmask 1043456
    %v1069 = vrot.slane %v430, 4
    %v1070 = vrot.slane %v434, 4
    %v1071 = vsel %vm1068, %v1069, %v1070
    %v1072 = vrot.slane %v440, 4
    %v1073 = vsel %vm1068, %v1070, %v1072
    %v1074 = vrot.slane %v444, 4
    %v1075 = vsel %vm1068, %v1072, %v1074
    %v1076 = vrot.slane %v450, 4
    %v1077 = vsel %vm1068, %v1074, %v1076
    %v1078 = vrot.slane %v454, 4
    %v1079 = vsel %vm1068, %v1076, %v1078
    %v1080 = vrot.slane %v460, 4
    %v1081 = vsel %vm1068, %v1078, %v1080
    %v1082 = vrot.slane %v464, 4
    %v1083 = vsel %vm1068, %v1080, %v1082
    %v1084 = vrot.slane %v470, 4
    %v1085 = vsel %vm1068, %v1082, %v1084
    %v1086 = vrot.slane %v474, 4
    %v1087 = vsel %vm1068, %v1084, %v1086
    %v1088 = vrot.slane %v480, 4
    %v1089 = vsel %vm1068, %v1086, %v1088
    %v1090 = vrot.slane %v484, 4
    %v1091 = vrot.slane %v490, 4
    %v1092 = vsel %vm1068, %v1090, %v1091
    %v1093 = vrot.slane %v494, 4
    %v1094 = vsel %vm1068, %v1091, %v1093
    %v1095 = vrot.slane %v500, 4
    %v1096 = vsel %vm1068, %v1093, %v1095
    %v1097 = vrot.slane %v504, 4
    %v1098 = vsel %vm1068, %v1095, %v1097
    %v1099 = vrot.slane %v510, 4
    %v1100 = vsel %vm1068, %v1097, %v1099
    %v1101 = vrot.slane %v514, 4
    %v1102 = vsel %vm1068, %v1099, %v1101
    %v1103 = vrot.slane %v520, 4
    %v1104 = vsel %vm1068, %v1101, %v1103
    %v1105 = vrot.slane %v524, 4
    %v1106 = vsel %vm1068, %v1103, %v1105
    %v1107 = vrot.slane %v530, 4
    %v1108 = vsel %vm1068, %v1105, %v1107
    %v1109 = vrot.slane %v534, 4
    %v1110 = vsel %vm1068, %v1107, %v1109
    %v1131 = vadd.f32 %v1026, %v1071
    %v1132 = vadd.f32 %v1027, %v1073
    %v1133 = vadd.f32 %v1028, %v1075
    %v1134 = vadd.f32 %v1029, %v1077
    %v1135 = vadd.f32 %v1030, %v1079
    %v1136 = vadd.f32 %v1031, %v1081
    %v1137 = vadd.f32 %v1032, %v1083
    %v1138 = vadd.f32 %v1033, %v1085
    %v1139 = vadd.f32 %v1034, %v1087
    %v1140 = vadd.f32 %v1035, %v1089
    %v1141 = vadd.f32 %v1036, %v1092
    %v1142 = vadd.f32 %v1037, %v1094
    %v1143 = vadd.f32 %v1038, %v1096
    %v1144 = vadd.f32 %v1039, %v1098
    %v1145 = vadd.f32 %v1040, %v1100
    %v1146 = vadd.f32 %v1041, %v1102
    %v1147 = vadd.f32 %v1042, %v1104
    %v1148 = vadd.f32 %v1043, %v1106
    %v1149 = vadd.f32 %v1044, %v1108
    %v1150 = vadd.f32 %v1045, %v1110
    %vm1151 = vcmask 1042432
    %v1152 = vrot.slane %v430, 5
    %v1153 = vrot.slane %v434, 5
    %v1154 = vsel %vm1151, %v1152, %v1153
    %v1155 = vrot.slane %v440, 5
    %v1156 = vsel %vm1151, %v1153, %v1155
    %v1157 = vrot.slane %v444, 5
    %v1158 = vsel %vm1151, %v1155, %v1157
    %v1159 = vrot.slane %v450, 5
    %v1160 = vsel %vm1151, %v1157, %v1159
    %v1161 = vrot.slane %v454, 5
    %v1162 = vsel %vm1151, %v1159, %v1161
    %v1163 = vrot.slane %v460, 5
    %v1164 = vsel %vm1151, %v1161, %v1163
    %v1165 = vrot.slane %v464, 5
    %v1166 = vsel %vm1151, %v1163, %v1165
    %v1167 = vrot.slane %v470, 5
    %v1168 = vsel %vm1151, %v1165, %v1167
    %v1169 = vrot.slane %v474, 5
    %v1170 = vsel %vm1151, %v1167, %v1169
    %v1171 = vrot.slane %v480, 5
    %v1172 = vsel %vm1151, %v1169, %v1171
    %v1173 = vrot.slane %v484, 5
    %v1174 = vrot.slane %v490, 5
    %v1175 = vsel %vm1151, %v1173, %v1174
    %v1176 = vrot.slane %v494, 5
    %v1177 = vsel %vm1151, %v1174, %v1176
    %v1178 = vrot.slane %v500, 5
    %v1179 = vsel %vm1151, %v1176, %v1178
    %v1180 = vrot.slane %v504, 5
    %v1181 = vsel %vm1151, %v1178, %v1180
    %v1182 = vrot.slane %v510, 5
    %v1183 = vsel %vm1151, %v1180, %v1182
    %v1184 = vrot.slane %v514, 5
    %v1185 = vsel %vm1151, %v1182, %v1184
    %v1186 = vrot.slane %v520, 5
    %v1187 = vsel %vm1151, %v1184, %v1186
    %v1188 = vrot.slane %v524, 5
    %v1189 = vsel %vm1151, %v1186, %v1188
    %v1190 = vrot.slane %v530, 5
    %v1191 = vsel %vm1151, %v1188, %v1190
    %v1192 = vrot.slane %v534, 5
    %v1193 = vsel %vm1151, %v1190, %v1192
    %1194 = vrot.lane.b32.xlu0 %v1154, 96
    %v1195 = vpop.permute.xlu0 %1194
    %1196 = vrot.lane.b32.xlu0 %v1156, 96
    %v1197 = vpop.permute.xlu0 %1196
    %1198 = vrot.lane.b32.xlu0 %v1158, 96
    %v1199 = vpop.permute.xlu0 %1198
    %1200 = vrot.lane.b32.xlu0 %v1160, 96
    %v1201 = vpop.permute.xlu0 %1200
    %1202 = vrot.lane.b32.xlu0 %v1162, 96
    %v1203 = vpop.permute.xlu0 %1202
    %1204 = vrot.lane.b32.xlu0 %v1164, 96
    %v1205 = vpop.permute.xlu0 %1204
    %1206 = vrot.lane.b32.xlu0 %v1166, 96
    %v1207 = vpop.permute.xlu0 %1206
    %1208 = vrot.lane.b32.xlu0 %v1168, 96
    %v1209 = vpop.permute.xlu0 %1208
    %1210 = vrot.lane.b32.xlu0 %v1170, 96
    %v1211 = vpop.permute.xlu0 %1210
    %1212 = vrot.lane.b32.xlu0 %v1172, 96
    %v1213 = vpop.permute.xlu0 %1212
    %1214 = vrot.lane.b32.xlu0 %v1175, 96
    %v1215 = vpop.permute.xlu0 %1214
    %1216 = vrot.lane.b32.xlu0 %v1177, 96
    %v1217 = vpop.permute.xlu0 %1216
    %1218 = vrot.lane.b32.xlu0 %v1179, 96
    %v1219 = vpop.permute.xlu0 %1218
    %1220 = vrot.lane.b32.xlu0 %v1181, 96
    %v1221 = vpop.permute.xlu0 %1220
    %1222 = vrot.lane.b32.xlu0 %v1183, 96
    %v1223 = vpop.permute.xlu0 %1222
    %1224 = vrot.lane.b32.xlu0 %v1185, 96
    %v1225 = vpop.permute.xlu0 %1224
    %1226 = vrot.lane.b32.xlu0 %v1187, 96
    %v1227 = vpop.permute.xlu0 %1226
    %1228 = vrot.lane.b32.xlu0 %v1189, 96
    %v1229 = vpop.permute.xlu0 %1228
    %1230 = vrot.lane.b32.xlu0 %v1191, 96
    %v1231 = vpop.permute.xlu0 %1230
    %1232 = vrot.lane.b32.xlu0 %v1193, 96
    %v1233 = vpop.permute.xlu0 %1232
    %v1254 = vadd.f32 %v1131, %v1195
    %v1255 = vadd.f32 %v1132, %v1197
    %v1256 = vadd.f32 %v1133, %v1199
    %v1257 = vadd.f32 %v1134, %v1201
    %v1258 = vadd.f32 %v1135, %v1203
    %v1259 = vadd.f32 %v1136, %v1205
    %v1260 = vadd.f32 %v1137, %v1207
    %v1261 = vadd.f32 %v1138, %v1209
    %v1262 = vadd.f32 %v1139, %v1211
    %v1263 = vadd.f32 %v1140, %v1213
    %v1264 = vadd.f32 %v1141, %v1215
    %v1265 = vadd.f32 %v1142, %v1217
    %v1266 = vadd.f32 %v1143, %v1219
    %v1267 = vadd.f32 %v1144, %v1221
    %v1268 = vadd.f32 %v1145, %v1223
    %v1269 = vadd.f32 %v1146, %v1225
    %v1270 = vadd.f32 %v1147, %v1227
    %v1271 = vadd.f32 %v1148, %v1229
    %v1272 = vadd.f32 %v1149, %v1231
    %v1273 = vadd.f32 %v1150, %v1233
    %vm1274 = vcmask 1041408
    %v1275 = vrot.slane %v430, 6
    %v1276 = vrot.slane %v434, 6
    %v1277 = vsel %vm1274, %v1275, %v1276
    %v1278 = vrot.slane %v440, 6
    %v1279 = vsel %vm1274, %v1276, %v1278
    %v1280 = vrot.slane %v444, 6
    %v1281 = vsel %vm1274, %v1278, %v1280
    %v1282 = vrot.slane %v450, 6
    %v1283 = vsel %vm1274, %v1280, %v1282
    %v1284 = vrot.slane %v454, 6
    %v1285 = vsel %vm1274, %v1282, %v1284
    %v1286 = vrot.slane %v460, 6
    %v1287 = vsel %vm1274, %v1284, %v1286
    %v1288 = vrot.slane %v464, 6
    %v1289 = vsel %vm1274, %v1286, %v1288
    %v1290 = vrot.slane %v470, 6
    %v1291 = vsel %vm1274, %v1288, %v1290
    %v1292 = vrot.slane %v474, 6
    %v1293 = vsel %vm1274, %v1290, %v1292
    %v1294 = vrot.slane %v480, 6
    %v1295 = vsel %vm1274, %v1292, %v1294
    %v1296 = vrot.slane %v484, 6
    %v1297 = vrot.slane %v490, 6
    %v1298 = vsel %vm1274, %v1296, %v1297
    %v1299 = vrot.slane %v494, 6
    %v1300 = vsel %vm1274, %v1297, %v1299
    %v1301 = vrot.slane %v500, 6
    %v1302 = vsel %vm1274, %v1299, %v1301
    %v1303 = vrot.slane %v504, 6
    %v1304 = vsel %vm1274, %v1301, %v1303
    %v1305 = vrot.slane %v510, 6
    %v1306 = vsel %vm1274, %v1303, %v1305
    %v1307 = vrot.slane %v514, 6
    %v1308 = vsel %vm1274, %v1305, %v1307
    %v1309 = vrot.slane %v520, 6
    %v1310 = vsel %vm1274, %v1307, %v1309
    %v1311 = vrot.slane %v524, 6
    %v1312 = vsel %vm1274, %v1309, %v1311
    %v1313 = vrot.slane %v530, 6
    %v1314 = vsel %vm1274, %v1311, %v1313
    %v1315 = vrot.slane %v534, 6
    %v1316 = vsel %vm1274, %v1313, %v1315
    %1317 = vrot.lane.b32.xlu0 %v1277, 64
    %v1318 = vpop.permute.xlu0 %1317
    %1319 = vrot.lane.b32.xlu0 %v1279, 64
    %v1320 = vpop.permute.xlu0 %1319
    %1321 = vrot.lane.b32.xlu0 %v1281, 64
    %v1322 = vpop.permute.xlu0 %1321
    %1323 = vrot.lane.b32.xlu0 %v1283, 64
    %v1324 = vpop.permute.xlu0 %1323
    %1325 = vrot.lane.b32.xlu0 %v1285, 64
    %v1326 = vpop.permute.xlu0 %1325
    %1327 = vrot.lane.b32.xlu0 %v1287, 64
    %v1328 = vpop.permute.xlu0 %1327
    %1329 = vrot.lane.b32.xlu0 %v1289, 64
    %v1330 = vpop.permute.xlu0 %1329
    %1331 = vrot.lane.b32.xlu0 %v1291, 64
    %v1332 = vpop.permute.xlu0 %1331
    %1333 = vrot.lane.b32.xlu0 %v1293, 64
    %v1334 = vpop.permute.xlu0 %1333
    %1335 = vrot.lane.b32.xlu0 %v1295, 64
    %v1336 = vpop.permute.xlu0 %1335
    %1337 = vrot.lane.b32.xlu0 %v1298, 64
    %v1338 = vpop.permute.xlu0 %1337
    %1339 = vrot.lane.b32.xlu0 %v1300, 64
    %v1340 = vpop.permute.xlu0 %1339
    %1341 = vrot.lane.b32.xlu0 %v1302, 64
    %v1342 = vpop.permute.xlu0 %1341
    %1343 = vrot.lane.b32.xlu0 %v1304, 64
    %v1344 = vpop.permute.xlu0 %1343
    %1345 = vrot.lane.b32.xlu0 %v1306, 64
    %v1346 = vpop.permute.xlu0 %1345
    %1347 = vrot.lane.b32.xlu0 %v1308, 64
    %v1348 = vpop.permute.xlu0 %1347
    %1349 = vrot.lane.b32.xlu0 %v1310, 64
    %v1350 = vpop.permute.xlu0 %1349
    %1351 = vrot.lane.b32.xlu0 %v1312, 64
    %v1352 = vpop.permute.xlu0 %1351
    %1353 = vrot.lane.b32.xlu0 %v1314, 64
    %v1354 = vpop.permute.xlu0 %1353
    %1355 = vrot.lane.b32.xlu0 %v1316, 64
    %v1356 = vpop.permute.xlu0 %1355
    %v1377 = vadd.f32 %v1254, %v1318
    %v1378 = vadd.f32 %v1255, %v1320
    %v1379 = vadd.f32 %v1256, %v1322
    %v1380 = vadd.f32 %v1257, %v1324
    %v1381 = vadd.f32 %v1258, %v1326
    %v1382 = vadd.f32 %v1259, %v1328
    %v1383 = vadd.f32 %v1260, %v1330
    %v1384 = vadd.f32 %v1261, %v1332
    %v1385 = vadd.f32 %v1262, %v1334
    %v1386 = vadd.f32 %v1263, %v1336
    %v1387 = vadd.f32 %v1264, %v1338
    %v1388 = vadd.f32 %v1265, %v1340
    %v1389 = vadd.f32 %v1266, %v1342
    %v1390 = vadd.f32 %v1267, %v1344
    %v1391 = vadd.f32 %v1268, %v1346
    %v1392 = vadd.f32 %v1269, %v1348
    %v1393 = vadd.f32 %v1270, %v1350
    %v1394 = vadd.f32 %v1271, %v1352
    %v1395 = vadd.f32 %v1272, %v1354
    %v1396 = vadd.f32 %v1273, %v1356
    %vm1397 = vcmask 1040384
    %v1398 = vrot.slane %v430, 7
    %v1399 = vrot.slane %v434, 7
    %v1400 = vsel %vm1397, %v1398, %v1399
    %v1401 = vrot.slane %v440, 7
    %v1402 = vsel %vm1397, %v1399, %v1401
    %v1403 = vrot.slane %v444, 7
    %v1404 = vsel %vm1397, %v1401, %v1403
    %v1405 = vrot.slane %v450, 7
    %v1406 = vsel %vm1397, %v1403, %v1405
    %v1407 = vrot.slane %v454, 7
    %v1408 = vsel %vm1397, %v1405, %v1407
    %v1409 = vrot.slane %v460, 7
    %v1410 = vsel %vm1397, %v1407, %v1409
    %v1411 = vrot.slane %v464, 7
    %v1412 = vsel %vm1397, %v1409, %v1411
    %v1413 = vrot.slane %v470, 7
    %v1414 = vsel %vm1397, %v1411, %v1413
    %v1415 = vrot.slane %v474, 7
    %v1416 = vsel %vm1397, %v1413, %v1415
    %v1417 = vrot.slane %v480, 7
    %v1418 = vsel %vm1397, %v1415, %v1417
    %v1419 = vrot.slane %v484, 7
    %v1420 = vrot.slane %v490, 7
    %v1421 = vsel %vm1397, %v1419, %v1420
    %v1422 = vrot.slane %v494, 7
    %v1423 = vsel %vm1397, %v1420, %v1422
    %v1424 = vrot.slane %v500, 7
    %v1425 = vsel %vm1397, %v1422, %v1424
    %v1426 = vrot.slane %v504, 7
    %v1427 = vsel %vm1397, %v1424, %v1426
    %v1428 = vrot.slane %v510, 7
    %v1429 = vsel %vm1397, %v1426, %v1428
    %v1430 = vrot.slane %v514, 7
    %v1431 = vsel %vm1397, %v1428, %v1430
    %v1432 = vrot.slane %v520, 7
    %v1433 = vsel %vm1397, %v1430, %v1432
    %v1434 = vrot.slane %v524, 7
    %v1435 = vsel %vm1397, %v1432, %v1434
    %v1436 = vrot.slane %v530, 7
    %v1437 = vsel %vm1397, %v1434, %v1436
    %v1438 = vrot.slane %v534, 7
    %v1439 = vsel %vm1397, %v1436, %v1438
    %1440 = vrot.lane.b32.xlu0 %v1400, 32
    %v1441 = vpop.permute.xlu0 %1440
    %1442 = vrot.lane.b32.xlu0 %v1402, 32
    %v1443 = vpop.permute.xlu0 %1442
    %1444 = vrot.lane.b32.xlu0 %v1404, 32
    %v1445 = vpop.permute.xlu0 %1444
    %1446 = vrot.lane.b32.xlu0 %v1406, 32
    %v1447 = vpop.permute.xlu0 %1446
    %1448 = vrot.lane.b32.xlu0 %v1408, 32
    %v1449 = vpop.permute.xlu0 %1448
    %1450 = vrot.lane.b32.xlu0 %v1410, 32
    %v1451 = vpop.permute.xlu0 %1450
    %1452 = vrot.lane.b32.xlu0 %v1412, 32
    %v1453 = vpop.permute.xlu0 %1452
    %1454 = vrot.lane.b32.xlu0 %v1414, 32
    %v1455 = vpop.permute.xlu0 %1454
    %1456 = vrot.lane.b32.xlu0 %v1416, 32
    %v1457 = vpop.permute.xlu0 %1456
    %1458 = vrot.lane.b32.xlu0 %v1418, 32
    %v1459 = vpop.permute.xlu0 %1458
    %1460 = vrot.lane.b32.xlu0 %v1421, 32
    %v1461 = vpop.permute.xlu0 %1460
    %1462 = vrot.lane.b32.xlu0 %v1423, 32
    %v1463 = vpop.permute.xlu0 %1462
    %1464 = vrot.lane.b32.xlu0 %v1425, 32
    %v1465 = vpop.permute.xlu0 %1464
    %1466 = vrot.lane.b32.xlu0 %v1427, 32
    %v1467 = vpop.permute.xlu0 %1466
    %1468 = vrot.lane.b32.xlu0 %v1429, 32
    %v1469 = vpop.permute.xlu0 %1468
    %1470 = vrot.lane.b32.xlu0 %v1431, 32
    %v1471 = vpop.permute.xlu0 %1470
    %1472 = vrot.lane.b32.xlu0 %v1433, 32
    %v1473 = vpop.permute.xlu0 %1472
    %1474 = vrot.lane.b32.xlu0 %v1435, 32
    %v1475 = vpop.permute.xlu0 %1474
    %1476 = vrot.lane.b32.xlu0 %v1437, 32
    %v1477 = vpop.permute.xlu0 %1476
    %1478 = vrot.lane.b32.xlu0 %v1439, 32
    %v1479 = vpop.permute.xlu0 %1478
    %v1500 = vadd.f32 %v1377, %v1441
    %v1501 = vadd.f32 %v1378, %v1443
    %v1502 = vadd.f32 %v1379, %v1445
    %v1503 = vadd.f32 %v1380, %v1447
    %v1504 = vadd.f32 %v1381, %v1449
    %v1505 = vadd.f32 %v1382, %v1451
    %v1506 = vadd.f32 %v1383, %v1453
    %v1507 = vadd.f32 %v1384, %v1455
    %v1508 = vadd.f32 %v1385, %v1457
    %v1509 = vadd.f32 %v1386, %v1459
    %v1510 = vadd.f32 %v1387, %v1461
    %v1511 = vadd.f32 %v1388, %v1463
    %v1512 = vadd.f32 %v1389, %v1465
    %v1513 = vadd.f32 %v1390, %v1467
    %v1514 = vadd.f32 %v1391, %v1469
    %v1515 = vadd.f32 %v1392, %v1471
    %v1516 = vadd.f32 %v1393, %v1473
    %v1517 = vadd.f32 %v1394, %v1475
    %v1518 = vadd.f32 %v1395, %v1477
    %v1519 = vadd.f32 %v1396, %v1479
    %v1520 = vadd.f32 %v1500, %v573
    %v1521 = vadd.f32 %v1501, %v578
    %v1522 = vadd.f32 %v1502, %v581
    %v1523 = vadd.f32 %v1503, %v586
    %v1524 = vadd.f32 %v1504, %v589
    %v1525 = vadd.f32 %v1505, %v594
    %v1526 = vadd.f32 %v1506, %v597
    %v1527 = vadd.f32 %v1507, %v602
    %v1528 = vadd.f32 %v1508, %v605
    %v1529 = vadd.f32 %v1509, %v610
    %v1530 = vadd.f32 %v1510, %v617
    %v1531 = vadd.f32 %v1511, %v620
    %v1532 = vadd.f32 %v1512, %v625
    %v1533 = vadd.f32 %v1513, %v628
    %v1534 = vadd.f32 %v1514, %v633
    %v1535 = vadd.f32 %v1515, %v636
    %v1536 = vadd.f32 %v1516, %v641
    %v1537 = vadd.f32 %v1517, %v644
    %v1538 = vadd.f32 %v1518, %v649
    %v1539 = vadd.f32 %v1519, %v652
    %v1540 = vld [vmem:[%s3] sm:$0x1]
    %v1542 = vlaneseq
    %v1543 = vshrl.u32 %v1542, 7
    %v1544 = vsub.s32 0, %v1543
    %v1545 = vrot.slane %v1540, %v1544
    %v1547 = vadd.f32 %v1520, %v1545
    %v1548 = vadd.f32 %v1521, %v1545
    %v1549 = vadd.f32 %v1522, %v1545
    %v1550 = vadd.f32 %v1523, %v1545
    %v1551 = vadd.f32 %v1524, %v1545
    %v1552 = vadd.f32 %v1525, %v1545
    %v1553 = vadd.f32 %v1526, %v1545
    %v1554 = vadd.f32 %v1527, %v1545
    %v1555 = vadd.f32 %v1528, %v1545
    %v1556 = vadd.f32 %v1529, %v1545
    %v1557 = vadd.f32 %v1530, %v1545
    %v1558 = vadd.f32 %v1531, %v1545
    %v1559 = vadd.f32 %v1532, %v1545
    %v1560 = vadd.f32 %v1533, %v1545
    %v1561 = vadd.f32 %v1534, %v1545
    %v1562 = vadd.f32 %v1535, %v1545
    %v1563 = vadd.f32 %v1536, %v1545
    %v1564 = vadd.f32 %v1537, %v1545
    %v1565 = vadd.f32 %v1538, %v1545
    %v1566 = vadd.f32 %v1539, %v1545
    %v1567 = vmin.f32 %v1547, 20.0
    %v1568 = vmin.f32 %v1548, 20.0
    %v1569 = vmin.f32 %v1549, 20.0
    %v1570 = vmin.f32 %v1550, 20.0
    %v1571 = vmin.f32 %v1551, 20.0
    %v1572 = vmin.f32 %v1552, 20.0
    %v1573 = vmin.f32 %v1553, 20.0
    %v1574 = vmin.f32 %v1554, 20.0
    %v1575 = vmin.f32 %v1555, 20.0
    %v1576 = vmin.f32 %v1556, 20.0
    %v1577 = vmin.f32 %v1557, 20.0
    %v1578 = vmin.f32 %v1558, 20.0
    %v1579 = vmin.f32 %v1559, 20.0
    %v1580 = vmin.f32 %v1560, 20.0
    %v1581 = vmin.f32 %v1561, 20.0
    %v1582 = vmin.f32 %v1562, 20.0
    %v1583 = vmin.f32 %v1563, 20.0
    %v1584 = vmin.f32 %v1564, 20.0
    %v1585 = vmin.f32 %v1565, 20.0
    %v1586 = vmin.f32 %v1566, 20.0
    %v1587 = vmul.f32 %v1567, 1.442695
    %v1588 = vpow.pop %v1587
    %v1589 = vmul.f32 %v1568, 1.442695
    %v1590 = vpow.pop %v1589
    %v1591 = vmul.f32 %v1569, 1.442695
    %v1592 = vpow.pop %v1591
    %v1593 = vmul.f32 %v1570, 1.442695
    %v1594 = vpow.pop %v1593
    %v1595 = vmul.f32 %v1571, 1.442695
    %v1596 = vpow.pop %v1595
    %v1597 = vmul.f32 %v1572, 1.442695
    %v1598 = vpow.pop %v1597
    %v1599 = vmul.f32 %v1573, 1.442695
    %v1600 = vpow.pop %v1599
    %v1601 = vmul.f32 %v1574, 1.442695
    %v1602 = vpow.pop %v1601
    %v1603 = vmul.f32 %v1575, 1.442695
    %v1604 = vpow.pop %v1603
    %v1605 = vmul.f32 %v1576, 1.442695
    %v1606 = vpow.pop %v1605
    %v1607 = vmul.f32 %v1577, 1.442695
    %v1608 = vpow.pop %v1607
    %v1609 = vmul.f32 %v1578, 1.442695
    %v1610 = vpow.pop %v1609
    %v1611 = vmul.f32 %v1579, 1.442695
    %v1612 = vpow.pop %v1611
    %v1613 = vmul.f32 %v1580, 1.442695
    %v1614 = vpow.pop %v1613
    %v1615 = vmul.f32 %v1581, 1.442695
    %v1616 = vpow.pop %v1615
    %v1617 = vmul.f32 %v1582, 1.442695
    %v1618 = vpow.pop %v1617
    %v1619 = vmul.f32 %v1583, 1.442695
    %v1620 = vpow.pop %v1619
    %v1621 = vmul.f32 %v1584, 1.442695
    %v1622 = vpow.pop %v1621
    %v1623 = vmul.f32 %v1585, 1.442695
    %v1624 = vpow.pop %v1623
    %v1625 = vmul.f32 %v1586, 1.442695
    %v1626 = vpow.pop %v1625
    %v1627 = vadd.f32 %v1588, 1.0
    %v1628 = vadd.f32 %v1590, 1.0
    %v1629 = vadd.f32 %v1592, 1.0
    %v1630 = vadd.f32 %v1594, 1.0
    %v1631 = vadd.f32 %v1596, 1.0
    %v1632 = vadd.f32 %v1598, 1.0
    %v1633 = vadd.f32 %v1600, 1.0
    %v1634 = vadd.f32 %v1602, 1.0
    %v1635 = vadd.f32 %v1604, 1.0
    %v1636 = vadd.f32 %v1606, 1.0
    %v1637 = vadd.f32 %v1608, 1.0
    %v1638 = vadd.f32 %v1610, 1.0
    %v1639 = vadd.f32 %v1612, 1.0
    %v1640 = vadd.f32 %v1614, 1.0
    %v1641 = vadd.f32 %v1616, 1.0
    %v1642 = vadd.f32 %v1618, 1.0
    %v1643 = vadd.f32 %v1620, 1.0
    %v1644 = vadd.f32 %v1622, 1.0
    %v1645 = vadd.f32 %v1624, 1.0
    %v1646 = vadd.f32 %v1626, 1.0
    %v1647 = vmul.f32 %v1627, %v1627
    %v1648 = vmul.f32 %v1628, %v1628
    %v1649 = vmul.f32 %v1629, %v1629
    %v1650 = vmul.f32 %v1630, %v1630
    %v1651 = vmul.f32 %v1631, %v1631
    %v1652 = vmul.f32 %v1632, %v1632
    %v1653 = vmul.f32 %v1633, %v1633
    %v1654 = vmul.f32 %v1634, %v1634
    %v1655 = vmul.f32 %v1635, %v1635
    %v1656 = vmul.f32 %v1636, %v1636
    %v1657 = vmul.f32 %v1637, %v1637
    %v1658 = vmul.f32 %v1638, %v1638
    %v1659 = vmul.f32 %v1639, %v1639
    %v1660 = vmul.f32 %v1640, %v1640
    %v1661 = vmul.f32 %v1641, %v1641
    %v1662 = vmul.f32 %v1642, %v1642
    %v1663 = vmul.f32 %v1643, %v1643
    %v1664 = vmul.f32 %v1644, %v1644
    %v1665 = vmul.f32 %v1645, %v1645
    %v1666 = vmul.f32 %v1646, %v1646
    %v1667 = vadd.f32 %v1647, 1.0
    %v1668 = vadd.f32 %v1648, 1.0
    %v1669 = vadd.f32 %v1649, 1.0
    %v1670 = vadd.f32 %v1650, 1.0
    %v1671 = vadd.f32 %v1651, 1.0
    %v1672 = vadd.f32 %v1652, 1.0
    %v1673 = vadd.f32 %v1653, 1.0
    %v1674 = vadd.f32 %v1654, 1.0
    %v1675 = vadd.f32 %v1655, 1.0
    %v1676 = vadd.f32 %v1656, 1.0
    %v1677 = vadd.f32 %v1657, 1.0
    %v1678 = vadd.f32 %v1658, 1.0
    %v1679 = vadd.f32 %v1659, 1.0
    %v1680 = vadd.f32 %v1660, 1.0
    %v1681 = vadd.f32 %v1661, 1.0
    %v1682 = vadd.f32 %v1662, 1.0
    %v1683 = vadd.f32 %v1663, 1.0
    %v1684 = vadd.f32 %v1664, 1.0
    %v1685 = vadd.f32 %v1665, 1.0
    %v1686 = vadd.f32 %v1666, 1.0
    %v1687 = vrcp.pop %v1667
    %v1688 = vrcp.pop %v1668
    %v1689 = vrcp.pop %v1669
    %v1690 = vrcp.pop %v1670
    %v1691 = vrcp.pop %v1671
    %v1692 = vrcp.pop %v1672
    %v1693 = vrcp.pop %v1673
    %v1694 = vrcp.pop %v1674
    %v1695 = vrcp.pop %v1675
    %v1696 = vrcp.pop %v1676
    %v1697 = vrcp.pop %v1677
    %v1698 = vrcp.pop %v1678
    %v1699 = vrcp.pop %v1679
    %v1700 = vrcp.pop %v1680
    %v1701 = vrcp.pop %v1681
    %v1702 = vrcp.pop %v1682
    %v1703 = vrcp.pop %v1683
    %v1704 = vrcp.pop %v1684
    %v1705 = vrcp.pop %v1685
    %v1706 = vrcp.pop %v1686
    %v1707 = vmul.f32 %v1687, 2.0
    %v1708 = vmul.f32 %v1688, 2.0
    %v1709 = vmul.f32 %v1689, 2.0
    %v1710 = vmul.f32 %v1690, 2.0
    %v1711 = vmul.f32 %v1691, 2.0
    %v1712 = vmul.f32 %v1692, 2.0
    %v1713 = vmul.f32 %v1693, 2.0
    %v1714 = vmul.f32 %v1694, 2.0
    %v1715 = vmul.f32 %v1695, 2.0
    %v1716 = vmul.f32 %v1696, 2.0
    %v1717 = vmul.f32 %v1697, 2.0
    %v1718 = vmul.f32 %v1698, 2.0
    %v1719 = vmul.f32 %v1699, 2.0
    %v1720 = vmul.f32 %v1700, 2.0
    %v1721 = vmul.f32 %v1701, 2.0
    %v1722 = vmul.f32 %v1702, 2.0
    %v1723 = vmul.f32 %v1703, 2.0
    %v1724 = vmul.f32 %v1704, 2.0
    %v1725 = vmul.f32 %v1705, 2.0
    %v1726 = vmul.f32 %v1706, 2.0
    %v1727 = vsub.f32 1.0, %v1707
    %v1728 = vsub.f32 1.0, %v1708
    %v1729 = vsub.f32 1.0, %v1709
    %v1730 = vsub.f32 1.0, %v1710
    %v1731 = vsub.f32 1.0, %v1711
    %v1732 = vsub.f32 1.0, %v1712
    %v1733 = vsub.f32 1.0, %v1713
    %v1734 = vsub.f32 1.0, %v1714
    %v1735 = vsub.f32 1.0, %v1715
    %v1736 = vsub.f32 1.0, %v1716
    %v1737 = vsub.f32 1.0, %v1717
    %v1738 = vsub.f32 1.0, %v1718
    %v1739 = vsub.f32 1.0, %v1719
    %v1740 = vsub.f32 1.0, %v1720
    %v1741 = vsub.f32 1.0, %v1721
    %v1742 = vsub.f32 1.0, %v1722
    %v1743 = vsub.f32 1.0, %v1723
    %v1744 = vsub.f32 1.0, %v1724
    %v1745 = vsub.f32 1.0, %v1725
    %v1746 = vsub.f32 1.0, %v1726
    %v1747 = vmul.f32 %v1547, %v1727
    %v1748 = vmul.f32 %v1548, %v1728
    %v1749 = vmul.f32 %v1549, %v1729
    %v1750 = vmul.f32 %v1550, %v1730
    %v1751 = vmul.f32 %v1551, %v1731
    %v1752 = vmul.f32 %v1552, %v1732
    %v1753 = vmul.f32 %v1553, %v1733
    %v1754 = vmul.f32 %v1554, %v1734
    %v1755 = vmul.f32 %v1555, %v1735
    %v1756 = vmul.f32 %v1556, %v1736
    %v1757 = vmul.f32 %v1557, %v1737
    %v1758 = vmul.f32 %v1558, %v1738
    %v1759 = vmul.f32 %v1559, %v1739
    %v1760 = vmul.f32 %v1560, %v1740
    %v1761 = vmul.f32 %v1561, %v1741
    %v1762 = vmul.f32 %v1562, %v1742
    %v1763 = vmul.f32 %v1563, %v1743
    %v1764 = vmul.f32 %v1564, %v1744
    %v1765 = vmul.f32 %v1565, %v1745
    %v1766 = vmul.f32 %v1566, %v1746
    %v1787 = vcombine.high %v1747, %v1747
    %v1789 = vunpack.c.l.s4 1983009808
    %v1790 = vunpack.c.0.s8 %v1789
    %v1791 = vlaneseq
    %v1792 = vshrl.u32 %v1791, 7
    %v1793 = vsub.s32 %v1790, %v1792
    %v1794 = vrot.slane %v1747, %v1793
    %v1796 = vunpack.c.l.s4 1983009808
    %v1797 = vunpack.c.0.s8 %v1796
    %v1798 = vlaneseq
    %v1799 = vshrl.u32 %v1798, 7
    %v1800 = vsub.s32 %v1797, %v1799
    %v1801 = vrot.slane %v1787, %v1800
    %v1802 = vcombine.high %v1794, %v1794
    %v1803 = vcombine.high %v1801, %v1801
    %v1804 = vcombine.high %v1748, %v1748
    %v1806 = vunpack.c.l.s4 1983009808
    %v1807 = vunpack.c.0.s8 %v1806
    %v1808 = vlaneseq
    %v1809 = vshrl.u32 %v1808, 7
    %v1810 = vsub.s32 %v1807, %v1809
    %v1811 = vrot.slane %v1748, %v1810
    %v1813 = vunpack.c.l.s4 1983009808
    %v1814 = vunpack.c.0.s8 %v1813
    %v1815 = vlaneseq
    %v1816 = vshrl.u32 %v1815, 7
    %v1817 = vsub.s32 %v1814, %v1816
    %v1818 = vrot.slane %v1804, %v1817
    %v1819 = vcombine.high %v1811, %v1811
    %v1820 = vcombine.high %v1818, %v1818
    %v1821 = vcombine.high %v1749, %v1749
    %v1823 = vunpack.c.l.s4 1983009808
    %v1824 = vunpack.c.0.s8 %v1823
    %v1825 = vlaneseq
    %v1826 = vshrl.u32 %v1825, 7
    %v1827 = vsub.s32 %v1824, %v1826
    %v1828 = vrot.slane %v1749, %v1827
    %v1830 = vunpack.c.l.s4 1983009808
    %v1831 = vunpack.c.0.s8 %v1830
    %v1832 = vlaneseq
    %v1833 = vshrl.u32 %v1832, 7
    %v1834 = vsub.s32 %v1831, %v1833
    %v1835 = vrot.slane %v1821, %v1834
    %v1836 = vcombine.high %v1828, %v1828
    %v1837 = vcombine.high %v1835, %v1835
    %v1838 = vcombine.high %v1750, %v1750
    %v1840 = vunpack.c.l.s4 1983009808
    %v1841 = vunpack.c.0.s8 %v1840
    %v1842 = vlaneseq
    %v1843 = vshrl.u32 %v1842, 7
    %v1844 = vsub.s32 %v1841, %v1843
    %v1845 = vrot.slane %v1750, %v1844
    %v1847 = vunpack.c.l.s4 1983009808
    %v1848 = vunpack.c.0.s8 %v1847
    %v1849 = vlaneseq
    %v1850 = vshrl.u32 %v1849, 7
    %v1851 = vsub.s32 %v1848, %v1850
    %v1852 = vrot.slane %v1838, %v1851
    %v1853 = vcombine.high %v1845, %v1845
    %v1854 = vcombine.high %v1852, %v1852
    %v1855 = vcombine.high %v1751, %v1751
    %v1857 = vunpack.c.l.s4 1983009808
    %v1858 = vunpack.c.0.s8 %v1857
    %v1859 = vlaneseq
    %v1860 = vshrl.u32 %v1859, 7
    %v1861 = vsub.s32 %v1858, %v1860
    %v1862 = vrot.slane %v1751, %v1861
    %v1864 = vunpack.c.l.s4 1983009808
    %v1865 = vunpack.c.0.s8 %v1864
    %v1866 = vlaneseq
    %v1867 = vshrl.u32 %v1866, 7
    %v1868 = vsub.s32 %v1865, %v1867
    %v1869 = vrot.slane %v1855, %v1868
    %v1870 = vcombine.high %v1862, %v1862
    %v1871 = vcombine.high %v1869, %v1869
    %v1872 = vcombine.high %v1752, %v1752
    %v1874 = vunpack.c.l.s4 1983009808
    %v1875 = vunpack.c.0.s8 %v1874
    %v1876 = vlaneseq
    %v1877 = vshrl.u32 %v1876, 7
    %v1878 = vsub.s32 %v1875, %v1877
    %v1879 = vrot.slane %v1752, %v1878
    %v1881 = vunpack.c.l.s4 1983009808
    %v1882 = vunpack.c.0.s8 %v1881
    %v1883 = vlaneseq
    %v1884 = vshrl.u32 %v1883, 7
    %v1885 = vsub.s32 %v1882, %v1884
    %v1886 = vrot.slane %v1872, %v1885
    %v1887 = vcombine.high %v1879, %v1879
    %v1888 = vcombine.high %v1886, %v1886
    %v1889 = vcombine.high %v1753, %v1753
    %v1891 = vunpack.c.l.s4 1983009808
    %v1892 = vunpack.c.0.s8 %v1891
    %v1893 = vlaneseq
    %v1894 = vshrl.u32 %v1893, 7
    %v1895 = vsub.s32 %v1892, %v1894
    %v1896 = vrot.slane %v1753, %v1895
    %v1898 = vunpack.c.l.s4 1983009808
    %v1899 = vunpack.c.0.s8 %v1898
    %v1900 = vlaneseq
    %v1901 = vshrl.u32 %v1900, 7
    %v1902 = vsub.s32 %v1899, %v1901
    %v1903 = vrot.slane %v1889, %v1902
    %v1904 = vcombine.high %v1896, %v1896
    %v1905 = vcombine.high %v1903, %v1903
    %v1906 = vcombine.high %v1754, %v1754
    %v1908 = vunpack.c.l.s4 1983009808
    %v1909 = vunpack.c.0.s8 %v1908
    %v1910 = vlaneseq
    %v1911 = vshrl.u32 %v1910, 7
    %v1912 = vsub.s32 %v1909, %v1911
    %v1913 = vrot.slane %v1754, %v1912
    %v1915 = vunpack.c.l.s4 1983009808
    %v1916 = vunpack.c.0.s8 %v1915
    %v1917 = vlaneseq
    %v1918 = vshrl.u32 %v1917, 7
    %v1919 = vsub.s32 %v1916, %v1918
    %v1920 = vrot.slane %v1906, %v1919
    %v1921 = vcombine.high %v1913, %v1913
    %v1922 = vcombine.high %v1920, %v1920
    %v1923 = vcombine.high %v1755, %v1755
    %v1925 = vunpack.c.l.s4 1983009808
    %v1926 = vunpack.c.0.s8 %v1925
    %v1927 = vlaneseq
    %v1928 = vshrl.u32 %v1927, 7
    %v1929 = vsub.s32 %v1926, %v1928
    %v1930 = vrot.slane %v1755, %v1929
    %v1932 = vunpack.c.l.s4 1983009808
    %v1933 = vunpack.c.0.s8 %v1932
    %v1934 = vlaneseq
    %v1935 = vshrl.u32 %v1934, 7
    %v1936 = vsub.s32 %v1933, %v1935
    %v1937 = vrot.slane %v1923, %v1936
    %v1938 = vcombine.high %v1930, %v1930
    %v1939 = vcombine.high %v1937, %v1937
    %v1940 = vcombine.high %v1756, %v1756
    %v1942 = vunpack.c.l.s4 1983009808
    %v1943 = vunpack.c.0.s8 %v1942
    %v1944 = vlaneseq
    %v1945 = vshrl.u32 %v1944, 7
    %v1946 = vsub.s32 %v1943, %v1945
    %v1947 = vrot.slane %v1756, %v1946
    %v1949 = vunpack.c.l.s4 1983009808
    %v1950 = vunpack.c.0.s8 %v1949
    %v1951 = vlaneseq
    %v1952 = vshrl.u32 %v1951, 7
    %v1953 = vsub.s32 %v1950, %v1952
    %v1954 = vrot.slane %v1940, %v1953
    %v1955 = vcombine.high %v1947, %v1947
    %v1956 = vcombine.high %v1954, %v1954
    %v1957 = vcombine.high %v1757, %v1757
    %v1959 = vunpack.c.l.s4 1983009808
    %v1960 = vunpack.c.0.s8 %v1959
    %v1961 = vlaneseq
    %v1962 = vshrl.u32 %v1961, 7
    %v1963 = vsub.s32 %v1960, %v1962
    %v1964 = vrot.slane %v1757, %v1963
    %v1966 = vunpack.c.l.s4 1983009808
    %v1967 = vunpack.c.0.s8 %v1966
    %v1968 = vlaneseq
    %v1969 = vshrl.u32 %v1968, 7
    %v1970 = vsub.s32 %v1967, %v1969
    %v1971 = vrot.slane %v1957, %v1970
    %v1972 = vcombine.high %v1964, %v1964
    %v1973 = vcombine.high %v1971, %v1971
    %v1974 = vcombine.high %v1758, %v1758
    %v1976 = vunpack.c.l.s4 1983009808
    %v1977 = vunpack.c.0.s8 %v1976
    %v1978 = vlaneseq
    %v1979 = vshrl.u32 %v1978, 7
    %v1980 = vsub.s32 %v1977, %v1979
    %v1981 = vrot.slane %v1758, %v1980
    %v1983 = vunpack.c.l.s4 1983009808
    %v1984 = vunpack.c.0.s8 %v1983
    %v1985 = vlaneseq
    %v1986 = vshrl.u32 %v1985, 7
    %v1987 = vsub.s32 %v1984, %v1986
    %v1988 = vrot.slane %v1974, %v1987
    %v1989 = vcombine.high %v1981, %v1981
    %v1990 = vcombine.high %v1988, %v1988
    %v1991 = vcombine.high %v1759, %v1759
    %v1993 = vunpack.c.l.s4 1983009808
    %v1994 = vunpack.c.0.s8 %v1993
    %v1995 = vlaneseq
    %v1996 = vshrl.u32 %v1995, 7
    %v1997 = vsub.s32 %v1994, %v1996
    %v1998 = vrot.slane %v1759, %v1997
    %v2000 = vunpack.c.l.s4 1983009808
    %v2001 = vunpack.c.0.s8 %v2000
    %v2002 = vlaneseq
    %v2003 = vshrl.u32 %v2002, 7
    %v2004 = vsub.s32 %v2001, %v2003
    %v2005 = vrot.slane %v1991, %v2004
    %v2006 = vcombine.high %v1998, %v1998
    %v2007 = vcombine.high %v2005, %v2005
    %v2008 = vcombine.high %v1760, %v1760
    %v2010 = vunpack.c.l.s4 1983009808
    %v2011 = vunpack.c.0.s8 %v2010
    %v2012 = vlaneseq
    %v2013 = vshrl.u32 %v2012, 7
    %v2014 = vsub.s32 %v2011, %v2013
    %v2015 = vrot.slane %v1760, %v2014
    %v2017 = vunpack.c.l.s4 1983009808
    %v2018 = vunpack.c.0.s8 %v2017
    %v2019 = vlaneseq
    %v2020 = vshrl.u32 %v2019, 7
    %v2021 = vsub.s32 %v2018, %v2020
    %v2022 = vrot.slane %v2008, %v2021
    %v2023 = vcombine.high %v2015, %v2015
    %v2024 = vcombine.high %v2022, %v2022
    %v2025 = vcombine.high %v1761, %v1761
    %v2027 = vunpack.c.l.s4 1983009808
    %v2028 = vunpack.c.0.s8 %v2027
    %v2029 = vlaneseq
    %v2030 = vshrl.u32 %v2029, 7
    %v2031 = vsub.s32 %v2028, %v2030
    %v2032 = vrot.slane %v1761, %v2031
    %v2034 = vunpack.c.l.s4 1983009808
    %v2035 = vunpack.c.0.s8 %v2034
    %v2036 = vlaneseq
    %v2037 = vshrl.u32 %v2036, 7
    %v2038 = vsub.s32 %v2035, %v2037
    %v2039 = vrot.slane %v2025, %v2038
    %v2040 = vcombine.high %v2032, %v2032
    %v2041 = vcombine.high %v2039, %v2039
    %v2042 = vcombine.high %v1762, %v1762
    %v2044 = vunpack.c.l.s4 1983009808
    %v2045 = vunpack.c.0.s8 %v2044
    %v2046 = vlaneseq
    %v2047 = vshrl.u32 %v2046, 7
    %v2048 = vsub.s32 %v2045, %v2047
    %v2049 = vrot.slane %v1762, %v2048
    %v2051 = vunpack.c.l.s4 1983009808
    %v2052 = vunpack.c.0.s8 %v2051
    %v2053 = vlaneseq
    %v2054 = vshrl.u32 %v2053, 7
    %v2055 = vsub.s32 %v2052, %v2054
    %v2056 = vrot.slane %v2042, %v2055
    %v2057 = vcombine.high %v2049, %v2049
    %v2058 = vcombine.high %v2056, %v2056
    %v2059 = vcombine.high %v1763, %v1763
    %v2061 = vunpack.c.l.s4 1983009808
    %v2062 = vunpack.c.0.s8 %v2061
    %v2063 = vlaneseq
    %v2064 = vshrl.u32 %v2063, 7
    %v2065 = vsub.s32 %v2062, %v2064
    %v2066 = vrot.slane %v1763, %v2065
    %v2068 = vunpack.c.l.s4 1983009808
    %v2069 = vunpack.c.0.s8 %v2068
    %v2070 = vlaneseq
    %v2071 = vshrl.u32 %v2070, 7
    %v2072 = vsub.s32 %v2069, %v2071
    %v2073 = vrot.slane %v2059, %v2072
    %v2074 = vcombine.high %v2066, %v2066
    %v2075 = vcombine.high %v2073, %v2073
    %v2076 = vcombine.high %v1764, %v1764
    %v2078 = vunpack.c.l.s4 1983009808
    %v2079 = vunpack.c.0.s8 %v2078
    %v2080 = vlaneseq
    %v2081 = vshrl.u32 %v2080, 7
    %v2082 = vsub.s32 %v2079, %v2081
    %v2083 = vrot.slane %v1764, %v2082
    %v2085 = vunpack.c.l.s4 1983009808
    %v2086 = vunpack.c.0.s8 %v2085
    %v2087 = vlaneseq
    %v2088 = vshrl.u32 %v2087, 7
    %v2089 = vsub.s32 %v2086, %v2088
    %v2090 = vrot.slane %v2076, %v2089
    %v2091 = vcombine.high %v2083, %v2083
    %v2092 = vcombine.high %v2090, %v2090
    %v2093 = vcombine.high %v1765, %v1765
    %v2095 = vunpack.c.l.s4 1983009808
    %v2096 = vunpack.c.0.s8 %v2095
    %v2097 = vlaneseq
    %v2098 = vshrl.u32 %v2097, 7
    %v2099 = vsub.s32 %v2096, %v2098
    %v2100 = vrot.slane %v1765, %v2099
    %v2102 = vunpack.c.l.s4 1983009808
    %v2103 = vunpack.c.0.s8 %v2102
    %v2104 = vlaneseq
    %v2105 = vshrl.u32 %v2104, 7
    %v2106 = vsub.s32 %v2103, %v2105
    %v2107 = vrot.slane %v2093, %v2106
    %v2108 = vcombine.high %v2100, %v2100
    %v2109 = vcombine.high %v2107, %v2107
    %v2110 = vcombine.high %v1766, %v1766
    %v2112 = vunpack.c.l.s4 1983009808
    %v2113 = vunpack.c.0.s8 %v2112
    %v2114 = vlaneseq
    %v2115 = vshrl.u32 %v2114, 7
    %v2116 = vsub.s32 %v2113, %v2115
    %v2117 = vrot.slane %v1766, %v2116
    %v2119 = vunpack.c.l.s4 1983009808
    %v2120 = vunpack.c.0.s8 %v2119
    %v2121 = vlaneseq
    %v2122 = vshrl.u32 %v2121, 7
    %v2123 = vsub.s32 %v2120, %v2122
    %v2124 = vrot.slane %v2110, %v2123
    %v2125 = vcombine.high %v2117, %v2117
    %v2126 = vcombine.high %v2124, %v2124
    %vm2207 = vcmask 254976
    %v2208 = vsel %vm2207, %v1794, -inf
    %v2209 = vrot.slane %v2208, 4
    %v2210 = vmax.f32 %v2208, %v2209
    %v2211 = vrot.slane %v2210, 2
    %v2212 = vmax.f32 %v2210, %v2211
    %v2213 = vrot.slane %v2212, 1
    %v2214 = vmax.f32 %v2212, %v2213
    %v2215 = vsel %vm2207, %v1802, -inf
    %v2216 = vrot.slane %v2215, 4
    %v2217 = vmax.f32 %v2215, %v2216
    %v2218 = vrot.slane %v2217, 2
    %v2219 = vmax.f32 %v2217, %v2218
    %v2220 = vrot.slane %v2219, 1
    %v2221 = vmax.f32 %v2219, %v2220
    %v2222 = vsel %vm2207, %v1801, -inf
    %v2223 = vrot.slane %v2222, 4
    %v2224 = vmax.f32 %v2222, %v2223
    %v2225 = vrot.slane %v2224, 2
    %v2226 = vmax.f32 %v2224, %v2225
    %v2227 = vrot.slane %v2226, 1
    %v2228 = vmax.f32 %v2226, %v2227
    %v2229 = vsel %vm2207, %v1803, -inf
    %v2230 = vrot.slane %v2229, 4
    %v2231 = vmax.f32 %v2229, %v2230
    %v2232 = vrot.slane %v2231, 2
    %v2233 = vmax.f32 %v2231, %v2232
    %v2234 = vrot.slane %v2233, 1
    %v2235 = vmax.f32 %v2233, %v2234
    %v2236 = vsel %vm2207, %v1811, -inf
    %v2237 = vrot.slane %v2236, 4
    %v2238 = vmax.f32 %v2236, %v2237
    %v2239 = vrot.slane %v2238, 2
    %v2240 = vmax.f32 %v2238, %v2239
    %v2241 = vrot.slane %v2240, 1
    %v2242 = vmax.f32 %v2240, %v2241
    %v2243 = vsel %vm2207, %v1819, -inf
    %v2244 = vrot.slane %v2243, 4
    %v2245 = vmax.f32 %v2243, %v2244
    %v2246 = vrot.slane %v2245, 2
    %v2247 = vmax.f32 %v2245, %v2246
    %v2248 = vrot.slane %v2247, 1
    %v2249 = vmax.f32 %v2247, %v2248
    %v2250 = vsel %vm2207, %v1818, -inf
    %v2251 = vrot.slane %v2250, 4
    %v2252 = vmax.f32 %v2250, %v2251
    %v2253 = vrot.slane %v2252, 2
    %v2254 = vmax.f32 %v2252, %v2253
    %v2255 = vrot.slane %v2254, 1
    %v2256 = vmax.f32 %v2254, %v2255
    %v2257 = vsel %vm2207, %v1820, -inf
    %v2258 = vrot.slane %v2257, 4
    %v2259 = vmax.f32 %v2257, %v2258
    %v2260 = vrot.slane %v2259, 2
    %v2261 = vmax.f32 %v2259, %v2260
    %v2262 = vrot.slane %v2261, 1
    %v2263 = vmax.f32 %v2261, %v2262
    %v2264 = vsel %vm2207, %v1828, -inf
    %v2265 = vrot.slane %v2264, 4
    %v2266 = vmax.f32 %v2264, %v2265
    %v2267 = vrot.slane %v2266, 2
    %v2268 = vmax.f32 %v2266, %v2267
    %v2269 = vrot.slane %v2268, 1
    %v2270 = vmax.f32 %v2268, %v2269
    %v2271 = vsel %vm2207, %v1836, -inf
    %v2272 = vrot.slane %v2271, 4
    %v2273 = vmax.f32 %v2271, %v2272
    %v2274 = vrot.slane %v2273, 2
    %v2275 = vmax.f32 %v2273, %v2274
    %v2276 = vrot.slane %v2275, 1
    %v2277 = vmax.f32 %v2275, %v2276
    %v2278 = vsel %vm2207, %v1835, -inf
    %v2279 = vrot.slane %v2278, 4
    %v2280 = vmax.f32 %v2278, %v2279
    %v2281 = vrot.slane %v2280, 2
    %v2282 = vmax.f32 %v2280, %v2281
    %v2283 = vrot.slane %v2282, 1
    %v2284 = vmax.f32 %v2282, %v2283
    %v2285 = vsel %vm2207, %v1837, -inf
    %v2286 = vrot.slane %v2285, 4
    %v2287 = vmax.f32 %v2285, %v2286
    %v2288 = vrot.slane %v2287, 2
    %v2289 = vmax.f32 %v2287, %v2288
    %v2290 = vrot.slane %v2289, 1
    %v2291 = vmax.f32 %v2289, %v2290
    %v2292 = vsel %vm2207, %v1845, -inf
    %v2293 = vrot.slane %v2292, 4
    %v2294 = vmax.f32 %v2292, %v2293
    %v2295 = vrot.slane %v2294, 2
    %v2296 = vmax.f32 %v2294, %v2295
    %v2297 = vrot.slane %v2296, 1
    %v2298 = vmax.f32 %v2296, %v2297
    %v2299 = vsel %vm2207, %v1853, -inf
    %v2300 = vrot.slane %v2299, 4
    %v2301 = vmax.f32 %v2299, %v2300
    %v2302 = vrot.slane %v2301, 2
    %v2303 = vmax.f32 %v2301, %v2302
    %v2304 = vrot.slane %v2303, 1
    %v2305 = vmax.f32 %v2303, %v2304
    %v2306 = vsel %vm2207, %v1852, -inf
    %v2307 = vrot.slane %v2306, 4
    %v2308 = vmax.f32 %v2306, %v2307
    %v2309 = vrot.slane %v2308, 2
    %v2310 = vmax.f32 %v2308, %v2309
    %v2311 = vrot.slane %v2310, 1
    %v2312 = vmax.f32 %v2310, %v2311
    %v2313 = vsel %vm2207, %v1854, -inf
    %v2314 = vrot.slane %v2313, 4
    %v2315 = vmax.f32 %v2313, %v2314
    %v2316 = vrot.slane %v2315, 2
    %v2317 = vmax.f32 %v2315, %v2316
    %v2318 = vrot.slane %v2317, 1
    %v2319 = vmax.f32 %v2317, %v2318
    %v2320 = vsel %vm2207, %v1862, -inf
    %v2321 = vrot.slane %v2320, 4
    %v2322 = vmax.f32 %v2320, %v2321
    %v2323 = vrot.slane %v2322, 2
    %v2324 = vmax.f32 %v2322, %v2323
    %v2325 = vrot.slane %v2324, 1
    %v2326 = vmax.f32 %v2324, %v2325
    %v2327 = vsel %vm2207, %v1870, -inf
    %v2328 = vrot.slane %v2327, 4
    %v2329 = vmax.f32 %v2327, %v2328
    %v2330 = vrot.slane %v2329, 2
    %v2331 = vmax.f32 %v2329, %v2330
    %v2332 = vrot.slane %v2331, 1
    %v2333 = vmax.f32 %v2331, %v2332
    %v2334 = vsel %vm2207, %v1869, -inf
    %v2335 = vrot.slane %v2334, 4
    %v2336 = vmax.f32 %v2334, %v2335
    %v2337 = vrot.slane %v2336, 2
    %v2338 = vmax.f32 %v2336, %v2337
    %v2339 = vrot.slane %v2338, 1
    %v2340 = vmax.f32 %v2338, %v2339
    %v2341 = vsel %vm2207, %v1871, -inf
    %v2342 = vrot.slane %v2341, 4
    %v2343 = vmax.f32 %v2341, %v2342
    %v2344 = vrot.slane %v2343, 2
    %v2345 = vmax.f32 %v2343, %v2344
    %v2346 = vrot.slane %v2345, 1
    %v2347 = vmax.f32 %v2345, %v2346
    %v2348 = vsel %vm2207, %v1879, -inf
    %v2349 = vrot.slane %v2348, 4
    %v2350 = vmax.f32 %v2348, %v2349
    %v2351 = vrot.slane %v2350, 2
    %v2352 = vmax.f32 %v2350, %v2351
    %v2353 = vrot.slane %v2352, 1
    %v2354 = vmax.f32 %v2352, %v2353
    %v2355 = vsel %vm2207, %v1887, -inf
    %v2356 = vrot.slane %v2355, 4
    %v2357 = vmax.f32 %v2355, %v2356
    %v2358 = vrot.slane %v2357, 2
    %v2359 = vmax.f32 %v2357, %v2358
    %v2360 = vrot.slane %v2359, 1
    %v2361 = vmax.f32 %v2359, %v2360
    %v2362 = vsel %vm2207, %v1886, -inf
    %v2363 = vrot.slane %v2362, 4
    %v2364 = vmax.f32 %v2362, %v2363
    %v2365 = vrot.slane %v2364, 2
    %v2366 = vmax.f32 %v2364, %v2365
    %v2367 = vrot.slane %v2366, 1
    %v2368 = vmax.f32 %v2366, %v2367
    %v2369 = vsel %vm2207, %v1888, -inf
    %v2370 = vrot.slane %v2369, 4
    %v2371 = vmax.f32 %v2369, %v2370
    %v2372 = vrot.slane %v2371, 2
    %v2373 = vmax.f32 %v2371, %v2372
    %v2374 = vrot.slane %v2373, 1
    %v2375 = vmax.f32 %v2373, %v2374
    %v2376 = vsel %vm2207, %v1896, -inf
    %v2377 = vrot.slane %v2376, 4
    %v2378 = vmax.f32 %v2376, %v2377
    %v2379 = vrot.slane %v2378, 2
    %v2380 = vmax.f32 %v2378, %v2379
    %v2381 = vrot.slane %v2380, 1
    %v2382 = vmax.f32 %v2380, %v2381
    %v2383 = vsel %vm2207, %v1904, -inf
    %v2384 = vrot.slane %v2383, 4
    %v2385 = vmax.f32 %v2383, %v2384
    %v2386 = vrot.slane %v2385, 2
    %v2387 = vmax.f32 %v2385, %v2386
    %v2388 = vrot.slane %v2387, 1
    %v2389 = vmax.f32 %v2387, %v2388
    %v2390 = vsel %vm2207, %v1903, -inf
    %v2391 = vrot.slane %v2390, 4
    %v2392 = vmax.f32 %v2390, %v2391
    %v2393 = vrot.slane %v2392, 2
    %v2394 = vmax.f32 %v2392, %v2393
    %v2395 = vrot.slane %v2394, 1
    %v2396 = vmax.f32 %v2394, %v2395
    %v2397 = vsel %vm2207, %v1905, -inf
    %v2398 = vrot.slane %v2397, 4
    %v2399 = vmax.f32 %v2397, %v2398
    %v2400 = vrot.slane %v2399, 2
    %v2401 = vmax.f32 %v2399, %v2400
    %v2402 = vrot.slane %v2401, 1
    %v2403 = vmax.f32 %v2401, %v2402
    %v2404 = vsel %vm2207, %v1913, -inf
    %v2405 = vrot.slane %v2404, 4
    %v2406 = vmax.f32 %v2404, %v2405
    %v2407 = vrot.slane %v2406, 2
    %v2408 = vmax.f32 %v2406, %v2407
    %v2409 = vrot.slane %v2408, 1
    %v2410 = vmax.f32 %v2408, %v2409
    %v2411 = vsel %vm2207, %v1921, -inf
    %v2412 = vrot.slane %v2411, 4
    %v2413 = vmax.f32 %v2411, %v2412
    %v2414 = vrot.slane %v2413, 2
    %v2415 = vmax.f32 %v2413, %v2414
    %v2416 = vrot.slane %v2415, 1
    %v2417 = vmax.f32 %v2415, %v2416
    %v2418 = vsel %vm2207, %v1920, -inf
    %v2419 = vrot.slane %v2418, 4
    %v2420 = vmax.f32 %v2418, %v2419
    %v2421 = vrot.slane %v2420, 2
    %v2422 = vmax.f32 %v2420, %v2421
    %v2423 = vrot.slane %v2422, 1
    %v2424 = vmax.f32 %v2422, %v2423
    %v2425 = vsel %vm2207, %v1922, -inf
    %v2426 = vrot.slane %v2425, 4
    %v2427 = vmax.f32 %v2425, %v2426
    %v2428 = vrot.slane %v2427, 2
    %v2429 = vmax.f32 %v2427, %v2428
    %v2430 = vrot.slane %v2429, 1
    %v2431 = vmax.f32 %v2429, %v2430
    %v2432 = vsel %vm2207, %v1930, -inf
    %v2433 = vrot.slane %v2432, 4
    %v2434 = vmax.f32 %v2432, %v2433
    %v2435 = vrot.slane %v2434, 2
    %v2436 = vmax.f32 %v2434, %v2435
    %v2437 = vrot.slane %v2436, 1
    %v2438 = vmax.f32 %v2436, %v2437
    %v2439 = vsel %vm2207, %v1938, -inf
    %v2440 = vrot.slane %v2439, 4
    %v2441 = vmax.f32 %v2439, %v2440
    %v2442 = vrot.slane %v2441, 2
    %v2443 = vmax.f32 %v2441, %v2442
    %v2444 = vrot.slane %v2443, 1
    %v2445 = vmax.f32 %v2443, %v2444
    %v2446 = vsel %vm2207, %v1937, -inf
    %v2447 = vrot.slane %v2446, 4
    %v2448 = vmax.f32 %v2446, %v2447
    %v2449 = vrot.slane %v2448, 2
    %v2450 = vmax.f32 %v2448, %v2449
    %v2451 = vrot.slane %v2450, 1
    %v2452 = vmax.f32 %v2450, %v2451
    %v2453 = vsel %vm2207, %v1939, -inf
    %v2454 = vrot.slane %v2453, 4
    %v2455 = vmax.f32 %v2453, %v2454
    %v2456 = vrot.slane %v2455, 2
    %v2457 = vmax.f32 %v2455, %v2456
    %v2458 = vrot.slane %v2457, 1
    %v2459 = vmax.f32 %v2457, %v2458
    %v2460 = vsel %vm2207, %v1947, -inf
    %v2461 = vrot.slane %v2460, 4
    %v2462 = vmax.f32 %v2460, %v2461
    %v2463 = vrot.slane %v2462, 2
    %v2464 = vmax.f32 %v2462, %v2463
    %v2465 = vrot.slane %v2464, 1
    %v2466 = vmax.f32 %v2464, %v2465
    %v2467 = vsel %vm2207, %v1955, -inf
    %v2468 = vrot.slane %v2467, 4
    %v2469 = vmax.f32 %v2467, %v2468
    %v2470 = vrot.slane %v2469, 2
    %v2471 = vmax.f32 %v2469, %v2470
    %v2472 = vrot.slane %v2471, 1
    %v2473 = vmax.f32 %v2471, %v2472
    %v2474 = vsel %vm2207, %v1954, -inf
    %v2475 = vrot.slane %v2474, 4
    %v2476 = vmax.f32 %v2474, %v2475
    %v2477 = vrot.slane %v2476, 2
    %v2478 = vmax.f32 %v2476, %v2477
    %v2479 = vrot.slane %v2478, 1
    %v2480 = vmax.f32 %v2478, %v2479
    %v2481 = vsel %vm2207, %v1956, -inf
    %v2482 = vrot.slane %v2481, 4
    %v2483 = vmax.f32 %v2481, %v2482
    %v2484 = vrot.slane %v2483, 2
    %v2485 = vmax.f32 %v2483, %v2484
    %v2486 = vrot.slane %v2485, 1
    %v2487 = vmax.f32 %v2485, %v2486
    %v2488 = vsel %vm2207, %v1964, -inf
    %v2489 = vrot.slane %v2488, 4
    %v2490 = vmax.f32 %v2488, %v2489
    %v2491 = vrot.slane %v2490, 2
    %v2492 = vmax.f32 %v2490, %v2491
    %v2493 = vrot.slane %v2492, 1
    %v2494 = vmax.f32 %v2492, %v2493
    %v2495 = vsel %vm2207, %v1972, -inf
    %v2496 = vrot.slane %v2495, 4
    %v2497 = vmax.f32 %v2495, %v2496
    %v2498 = vrot.slane %v2497, 2
    %v2499 = vmax.f32 %v2497, %v2498
    %v2500 = vrot.slane %v2499, 1
    %v2501 = vmax.f32 %v2499, %v2500
    %v2502 = vsel %vm2207, %v1971, -inf
    %v2503 = vrot.slane %v2502, 4
    %v2504 = vmax.f32 %v2502, %v2503
    %v2505 = vrot.slane %v2504, 2
    %v2506 = vmax.f32 %v2504, %v2505
    %v2507 = vrot.slane %v2506, 1
    %v2508 = vmax.f32 %v2506, %v2507
    %v2509 = vsel %vm2207, %v1973, -inf
    %v2510 = vrot.slane %v2509, 4
    %v2511 = vmax.f32 %v2509, %v2510
    %v2512 = vrot.slane %v2511, 2
    %v2513 = vmax.f32 %v2511, %v2512
    %v2514 = vrot.slane %v2513, 1
    %v2515 = vmax.f32 %v2513, %v2514
    %v2516 = vsel %vm2207, %v1981, -inf
    %v2517 = vrot.slane %v2516, 4
    %v2518 = vmax.f32 %v2516, %v2517
    %v2519 = vrot.slane %v2518, 2
    %v2520 = vmax.f32 %v2518, %v2519
    %v2521 = vrot.slane %v2520, 1
    %v2522 = vmax.f32 %v2520, %v2521
    %v2523 = vsel %vm2207, %v1989, -inf
    %v2524 = vrot.slane %v2523, 4
    %v2525 = vmax.f32 %v2523, %v2524
    %v2526 = vrot.slane %v2525, 2
    %v2527 = vmax.f32 %v2525, %v2526
    %v2528 = vrot.slane %v2527, 1
    %v2529 = vmax.f32 %v2527, %v2528
    %v2530 = vsel %vm2207, %v1988, -inf
    %v2531 = vrot.slane %v2530, 4
    %v2532 = vmax.f32 %v2530, %v2531
    %v2533 = vrot.slane %v2532, 2
    %v2534 = vmax.f32 %v2532, %v2533
    %v2535 = vrot.slane %v2534, 1
    %v2536 = vmax.f32 %v2534, %v2535
    %v2537 = vsel %vm2207, %v1990, -inf
    %v2538 = vrot.slane %v2537, 4
    %v2539 = vmax.f32 %v2537, %v2538
    %v2540 = vrot.slane %v2539, 2
    %v2541 = vmax.f32 %v2539, %v2540
    %v2542 = vrot.slane %v2541, 1
    %v2543 = vmax.f32 %v2541, %v2542
    %v2544 = vsel %vm2207, %v1998, -inf
    %v2545 = vrot.slane %v2544, 4
    %v2546 = vmax.f32 %v2544, %v2545
    %v2547 = vrot.slane %v2546, 2
    %v2548 = vmax.f32 %v2546, %v2547
    %v2549 = vrot.slane %v2548, 1
    %v2550 = vmax.f32 %v2548, %v2549
    %v2551 = vsel %vm2207, %v2006, -inf
    %v2552 = vrot.slane %v2551, 4
    %v2553 = vmax.f32 %v2551, %v2552
    %v2554 = vrot.slane %v2553, 2
    %v2555 = vmax.f32 %v2553, %v2554
    %v2556 = vrot.slane %v2555, 1
    %v2557 = vmax.f32 %v2555, %v2556
    %v2558 = vsel %vm2207, %v2005, -inf
    %v2559 = vrot.slane %v2558, 4
    %v2560 = vmax.f32 %v2558, %v2559
    %v2561 = vrot.slane %v2560, 2
    %v2562 = vmax.f32 %v2560, %v2561
    %v2563 = vrot.slane %v2562, 1
    %v2564 = vmax.f32 %v2562, %v2563
    %v2565 = vsel %vm2207, %v2007, -inf
    %v2566 = vrot.slane %v2565, 4
    %v2567 = vmax.f32 %v2565, %v2566
    %v2568 = vrot.slane %v2567, 2
    %v2569 = vmax.f32 %v2567, %v2568
    %v2570 = vrot.slane %v2569, 1
    %v2571 = vmax.f32 %v2569, %v2570
    %v2572 = vsel %vm2207, %v2015, -inf
    %v2573 = vrot.slane %v2572, 4
    %v2574 = vmax.f32 %v2572, %v2573
    %v2575 = vrot.slane %v2574, 2
    %v2576 = vmax.f32 %v2574, %v2575
    %v2577 = vrot.slane %v2576, 1
    %v2578 = vmax.f32 %v2576, %v2577
    %v2579 = vsel %vm2207, %v2023, -inf
    %v2580 = vrot.slane %v2579, 4
    %v2581 = vmax.f32 %v2579, %v2580
    %v2582 = vrot.slane %v2581, 2
    %v2583 = vmax.f32 %v2581, %v2582
    %v2584 = vrot.slane %v2583, 1
    %v2585 = vmax.f32 %v2583, %v2584
    %v2586 = vsel %vm2207, %v2022, -inf
    %v2587 = vrot.slane %v2586, 4
    %v2588 = vmax.f32 %v2586, %v2587
    %v2589 = vrot.slane %v2588, 2
    %v2590 = vmax.f32 %v2588, %v2589
    %v2591 = vrot.slane %v2590, 1
    %v2592 = vmax.f32 %v2590, %v2591
    %v2593 = vsel %vm2207, %v2024, -inf
    %v2594 = vrot.slane %v2593, 4
    %v2595 = vmax.f32 %v2593, %v2594
    %v2596 = vrot.slane %v2595, 2
    %v2597 = vmax.f32 %v2595, %v2596
    %v2598 = vrot.slane %v2597, 1
    %v2599 = vmax.f32 %v2597, %v2598
    %v2600 = vsel %vm2207, %v2032, -inf
    %v2601 = vrot.slane %v2600, 4
    %v2602 = vmax.f32 %v2600, %v2601
    %v2603 = vrot.slane %v2602, 2
    %v2604 = vmax.f32 %v2602, %v2603
    %v2605 = vrot.slane %v2604, 1
    %v2606 = vmax.f32 %v2604, %v2605
    %v2607 = vsel %vm2207, %v2040, -inf
    %v2608 = vrot.slane %v2607, 4
    %v2609 = vmax.f32 %v2607, %v2608
    %v2610 = vrot.slane %v2609, 2
    %v2611 = vmax.f32 %v2609, %v2610
    %v2612 = vrot.slane %v2611, 1
    %v2613 = vmax.f32 %v2611, %v2612
    %v2614 = vsel %vm2207, %v2039, -inf
    %v2615 = vrot.slane %v2614, 4
    %v2616 = vmax.f32 %v2614, %v2615
    %v2617 = vrot.slane %v2616, 2
    %v2618 = vmax.f32 %v2616, %v2617
    %v2619 = vrot.slane %v2618, 1
    %v2620 = vmax.f32 %v2618, %v2619
    %v2621 = vsel %vm2207, %v2041, -inf
    %v2622 = vrot.slane %v2621, 4
    %v2623 = vmax.f32 %v2621, %v2622
    %v2624 = vrot.slane %v2623, 2
    %v2625 = vmax.f32 %v2623, %v2624
    %v2626 = vrot.slane %v2625, 1
    %v2627 = vmax.f32 %v2625, %v2626
    %v2628 = vsel %vm2207, %v2049, -inf
    %v2629 = vrot.slane %v2628, 4
    %v2630 = vmax.f32 %v2628, %v2629
    %v2631 = vrot.slane %v2630, 2
    %v2632 = vmax.f32 %v2630, %v2631
    %v2633 = vrot.slane %v2632, 1
    %v2634 = vmax.f32 %v2632, %v2633
    %v2635 = vsel %vm2207, %v2057, -inf
    %v2636 = vrot.slane %v2635, 4
    %v2637 = vmax.f32 %v2635, %v2636
    %v2638 = vrot.slane %v2637, 2
    %v2639 = vmax.f32 %v2637, %v2638
    %v2640 = vrot.slane %v2639, 1
    %v2641 = vmax.f32 %v2639, %v2640
    %v2642 = vsel %vm2207, %v2056, -inf
    %v2643 = vrot.slane %v2642, 4
    %v2644 = vmax.f32 %v2642, %v2643
    %v2645 = vrot.slane %v2644, 2
    %v2646 = vmax.f32 %v2644, %v2645
    %v2647 = vrot.slane %v2646, 1
    %v2648 = vmax.f32 %v2646, %v2647
    %v2649 = vsel %vm2207, %v2058, -inf
    %v2650 = vrot.slane %v2649, 4
    %v2651 = vmax.f32 %v2649, %v2650
    %v2652 = vrot.slane %v2651, 2
    %v2653 = vmax.f32 %v2651, %v2652
    %v2654 = vrot.slane %v2653, 1
    %v2655 = vmax.f32 %v2653, %v2654
    %v2656 = vsel %vm2207, %v2066, -inf
    %v2657 = vrot.slane %v2656, 4
    %v2658 = vmax.f32 %v2656, %v2657
    %v2659 = vrot.slane %v2658, 2
    %v2660 = vmax.f32 %v2658, %v2659
    %v2661 = vrot.slane %v2660, 1
    %v2662 = vmax.f32 %v2660, %v2661
    %v2663 = vsel %vm2207, %v2074, -inf
    %v2664 = vrot.slane %v2663, 4
    %v2665 = vmax.f32 %v2663, %v2664
    %v2666 = vrot.slane %v2665, 2
    %v2667 = vmax.f32 %v2665, %v2666
    %v2668 = vrot.slane %v2667, 1
    %v2669 = vmax.f32 %v2667, %v2668
    %v2670 = vsel %vm2207, %v2073, -inf
    %v2671 = vrot.slane %v2670, 4
    %v2672 = vmax.f32 %v2670, %v2671
    %v2673 = vrot.slane %v2672, 2
    %v2674 = vmax.f32 %v2672, %v2673
    %v2675 = vrot.slane %v2674, 1
    %v2676 = vmax.f32 %v2674, %v2675
    %v2677 = vsel %vm2207, %v2075, -inf
    %v2678 = vrot.slane %v2677, 4
    %v2679 = vmax.f32 %v2677, %v2678
    %v2680 = vrot.slane %v2679, 2
    %v2681 = vmax.f32 %v2679, %v2680
    %v2682 = vrot.slane %v2681, 1
    %v2683 = vmax.f32 %v2681, %v2682
    %v2684 = vsel %vm2207, %v2083, -inf
    %v2685 = vrot.slane %v2684, 4
    %v2686 = vmax.f32 %v2684, %v2685
    %v2687 = vrot.slane %v2686, 2
    %v2688 = vmax.f32 %v2686, %v2687
    %v2689 = vrot.slane %v2688, 1
    %v2690 = vmax.f32 %v2688, %v2689
    %v2691 = vsel %vm2207, %v2091, -inf
    %v2692 = vrot.slane %v2691, 4
    %v2693 = vmax.f32 %v2691, %v2692
    %v2694 = vrot.slane %v2693, 2
    %v2695 = vmax.f32 %v2693, %v2694
    %v2696 = vrot.slane %v2695, 1
    %v2697 = vmax.f32 %v2695, %v2696
    %v2698 = vsel %vm2207, %v2090, -inf
    %v2699 = vrot.slane %v2698, 4
    %v2700 = vmax.f32 %v2698, %v2699
    %v2701 = vrot.slane %v2700, 2
    %v2702 = vmax.f32 %v2700, %v2701
    %v2703 = vrot.slane %v2702, 1
    %v2704 = vmax.f32 %v2702, %v2703
    %v2705 = vsel %vm2207, %v2092, -inf
    %v2706 = vrot.slane %v2705, 4
    %v2707 = vmax.f32 %v2705, %v2706
    %v2708 = vrot.slane %v2707, 2
    %v2709 = vmax.f32 %v2707, %v2708
    %v2710 = vrot.slane %v2709, 1
    %v2711 = vmax.f32 %v2709, %v2710
    %v2712 = vsel %vm2207, %v2100, -inf
    %v2713 = vrot.slane %v2712, 4
    %v2714 = vmax.f32 %v2712, %v2713
    %v2715 = vrot.slane %v2714, 2
    %v2716 = vmax.f32 %v2714, %v2715
    %v2717 = vrot.slane %v2716, 1
    %v2718 = vmax.f32 %v2716, %v2717
    %v2719 = vsel %vm2207, %v2108, -inf
    %v2720 = vrot.slane %v2719, 4
    %v2721 = vmax.f32 %v2719, %v2720
    %v2722 = vrot.slane %v2721, 2
    %v2723 = vmax.f32 %v2721, %v2722
    %v2724 = vrot.slane %v2723, 1
    %v2725 = vmax.f32 %v2723, %v2724
    %v2726 = vsel %vm2207, %v2107, -inf
    %v2727 = vrot.slane %v2726, 4
    %v2728 = vmax.f32 %v2726, %v2727
    %v2729 = vrot.slane %v2728, 2
    %v2730 = vmax.f32 %v2728, %v2729
    %v2731 = vrot.slane %v2730, 1
    %v2732 = vmax.f32 %v2730, %v2731
    %v2733 = vsel %vm2207, %v2109, -inf
    %v2734 = vrot.slane %v2733, 4
    %v2735 = vmax.f32 %v2733, %v2734
    %v2736 = vrot.slane %v2735, 2
    %v2737 = vmax.f32 %v2735, %v2736
    %v2738 = vrot.slane %v2737, 1
    %v2739 = vmax.f32 %v2737, %v2738
    %v2740 = vsel %vm2207, %v2117, -inf
    %v2741 = vrot.slane %v2740, 4
    %v2742 = vmax.f32 %v2740, %v2741
    %v2743 = vrot.slane %v2742, 2
    %v2744 = vmax.f32 %v2742, %v2743
    %v2745 = vrot.slane %v2744, 1
    %v2746 = vmax.f32 %v2744, %v2745
    %v2747 = vsel %vm2207, %v2125, -inf
    %v2748 = vrot.slane %v2747, 4
    %v2749 = vmax.f32 %v2747, %v2748
    %v2750 = vrot.slane %v2749, 2
    %v2751 = vmax.f32 %v2749, %v2750
    %v2752 = vrot.slane %v2751, 1
    %v2753 = vmax.f32 %v2751, %v2752
    %v2754 = vsel %vm2207, %v2124, -inf
    %v2755 = vrot.slane %v2754, 4
    %v2756 = vmax.f32 %v2754, %v2755
    %v2757 = vrot.slane %v2756, 2
    %v2758 = vmax.f32 %v2756, %v2757
    %v2759 = vrot.slane %v2758, 1
    %v2760 = vmax.f32 %v2758, %v2759
    %v2761 = vsel %vm2207, %v2126, -inf
    %v2762 = vrot.slane %v2761, 4
    %v2763 = vmax.f32 %v2761, %v2762
    %v2764 = vrot.slane %v2763, 2
    %v2765 = vmax.f32 %v2763, %v2764
    %v2766 = vrot.slane %v2765, 1
    %v2767 = vmax.f32 %v2765, %v2766
    %v2768 = vlaneseq
    %v2769 = vshrl.u32 %v2768, 7
    %v2770 = vadd.s32 %v2769, 8
    %v2771 = vadd.s32 %v2769, 16
    %v2772 = vadd.s32 %v2769, 24
    %v2773 = vadd.s32 %v2769, 32
    %s2774 = smul.u32 0, 32
    %v2775 = vstv %s2774
    %v2776 = vadd.s32 %v2769, %v2775
    %v2777 = vadd.s32 %v2770, %v2775
    %v2778 = vadd.s32 %v2771, %v2775
    %v2779 = vadd.s32 %v2772, %v2775
    %v2780 = vadd.s32 %v2773, %v2775
    %v2781 = vsub.s32 %v2776, 4
    %v2782 = vsub.s32 %v2777, 4
    %v2783 = vsub.s32 %v2778, 4
    %v2784 = vsub.s32 %v2779, 4
    %v2785 = vsub.s32 %v2780, 4
    %vm2786 = vcmp.ge.s32.totalorder %v2781, 0
    %vm2787 = vcmp.ge.s32.totalorder %v2782, 0
    %vm2788 = vcmp.ge.s32.totalorder %v2783, 0
    %vm2789 = vcmp.ge.s32.totalorder %v2784, 0
    %vm2790 = vcmp.ge.s32.totalorder %v2785, 0
    %vm2791 = vcmp.lt.s32.totalorder %v2781, 32
    %vm2792 = vcmp.lt.s32.totalorder %v2782, 32
    %vm2793 = vcmp.lt.s32.totalorder %v2783, 32
    %vm2794 = vcmp.lt.s32.totalorder %v2784, 32
    %vm2795 = vcmp.lt.s32.totalorder %v2785, 32
    %vm2796 = vmand %vm2786, %vm2791
    %vm2797 = vmand %vm2787, %vm2792
    %vm2798 = vmand %vm2788, %vm2793
    %vm2799 = vmand %vm2789, %vm2794
    %vm2800 = vmand %vm2790, %vm2795
    %v2801 = vsel %vm2796, 1, 0
    %v2802 = vsel %vm2797, 1, 0
    %v2803 = vsel %vm2798, 1, 0
    %v2804 = vsel %vm2799, 1, 0
    %v2805 = vsel %vm2800, 1, 0
    %vm2806 = vcmp.eq.s32.totalorder %v2801, 1
    %vm2807 = vcmp.eq.s32.totalorder %v2802, 1
    %vm2808 = vcmp.eq.s32.totalorder %v2803, 1
    %vm2809 = vcmp.eq.s32.totalorder %v2804, 1
    %vm2810 = vcmp.eq.s32.totalorder %v2805, 1
    %vm2891 = vcmask 1041409
    %v2892 = vsel %vm2891, %v2221, %v2214
    %vm2893 = vcmask 1042434
    %v2894 = vsel %vm2893, %v2228, %v2892
    %vm2895 = vcmask 1043459
    %v2896 = vsel %vm2895, %v2235, %v2894
    %vm2897 = vcmask 1044484
    %v2898 = vsel %vm2897, %v2242, %v2896
    %vm2899 = vcmask 1045509
    %v2900 = vsel %vm2899, %v2249, %v2898
    %vm2901 = vcmask 1046534
    %v2902 = vsel %vm2901, %v2256, %v2900
    %vm2903 = vcmask 1047559
    %v2904 = vsel %vm2903, %v2263, %v2902
    %v2905 = vsel %vm2891, %v2277, %v2270
    %v2906 = vsel %vm2893, %v2284, %v2905
    %v2907 = vsel %vm2895, %v2291, %v2906
    %v2908 = vsel %vm2897, %v2298, %v2907
    %v2909 = vsel %vm2899, %v2305, %v2908
    %v2910 = vsel %vm2901, %v2312, %v2909
    %v2911 = vsel %vm2903, %v2319, %v2910
    %v2912 = vsel %vm2891, %v2333, %v2326
    %v2913 = vsel %vm2893, %v2340, %v2912
    %v2914 = vsel %vm2895, %v2347, %v2913
    %v2915 = vsel %vm2897, %v2354, %v2914
    %v2916 = vsel %vm2899, %v2361, %v2915
    %v2917 = vsel %vm2901, %v2368, %v2916
    %v2918 = vsel %vm2903, %v2375, %v2917
    %v2919 = vsel %vm2891, %v2389, %v2382
    %v2920 = vsel %vm2893, %v2396, %v2919
    %v2921 = vsel %vm2895, %v2403, %v2920
    %v2922 = vsel %vm2897, %v2410, %v2921
    %v2923 = vsel %vm2899, %v2417, %v2922
    %v2924 = vsel %vm2901, %v2424, %v2923
    %v2925 = vsel %vm2903, %v2431, %v2924
    %v2926 = vsel %vm2891, %v2445, %v2438
    %v2927 = vsel %vm2893, %v2452, %v2926
    %v2928 = vsel %vm2895, %v2459, %v2927
    %v2929 = vsel %vm2897, %v2466, %v2928
    %v2930 = vsel %vm2899, %v2473, %v2929
    %v2931 = vsel %vm2901, %v2480, %v2930
    %v2932 = vsel %vm2903, %v2487, %v2931
    %v2933 = vsel %vm2891, %v2501, %v2494
    %v2934 = vsel %vm2893, %v2508, %v2933
    %v2935 = vsel %vm2895, %v2515, %v2934
    %v2936 = vsel %vm2897, %v2522, %v2935
    %v2937 = vsel %vm2899, %v2529, %v2936
    %v2938 = vsel %vm2901, %v2536, %v2937
    %v2939 = vsel %vm2903, %v2543, %v2938
    %v2940 = vsel %vm2891, %v2557, %v2550
    %v2941 = vsel %vm2893, %v2564, %v2940
    %v2942 = vsel %vm2895, %v2571, %v2941
    %v2943 = vsel %vm2897, %v2578, %v2942
    %v2944 = vsel %vm2899, %v2585, %v2943
    %v2945 = vsel %vm2901, %v2592, %v2944
    %v2946 = vsel %vm2903, %v2599, %v2945
    %v2947 = vsel %vm2891, %v2613, %v2606
    %v2948 = vsel %vm2893, %v2620, %v2947
    %v2949 = vsel %vm2895, %v2627, %v2948
    %v2950 = vsel %vm2897, %v2634, %v2949
    %v2951 = vsel %vm2899, %v2641, %v2950
    %v2952 = vsel %vm2901, %v2648, %v2951
    %v2953 = vsel %vm2903, %v2655, %v2952
    %v2954 = vsel %vm2891, %v2669, %v2662
    %v2955 = vsel %vm2893, %v2676, %v2954
    %v2956 = vsel %vm2895, %v2683, %v2955
    %v2957 = vsel %vm2897, %v2690, %v2956
    %v2958 = vsel %vm2899, %v2697, %v2957
    %v2959 = vsel %vm2901, %v2704, %v2958
    %v2960 = vsel %vm2903, %v2711, %v2959
    %v2961 = vsel %vm2891, %v2725, %v2718
    %v2962 = vsel %vm2893, %v2732, %v2961
    %v2963 = vsel %vm2895, %v2739, %v2962
    %v2964 = vsel %vm2897, %v2746, %v2963
    %v2965 = vsel %vm2899, %v2753, %v2964
    %v2966 = vsel %vm2901, %v2760, %v2965
    %v2967 = vsel %vm2903, %v2767, %v2966
    %v2978 = vsel %vm2806, %v2904, 0.0
    %v2979 = vsel %vm2807, %v2911, 0.0
    %v2980 = vsel %vm2808, %v2918, 0.0
    %v2981 = vsel %vm2809, %v2925, 0.0
    %v2982 = vsel %vm2810, %v2932, 0.0
    %v2983 = vsel %vm2806, %v2939, 0.0
    %v2984 = vsel %vm2807, %v2946, 0.0
    %v2985 = vsel %vm2808, %v2953, 0.0
    %v2986 = vsel %vm2809, %v2960, 0.0
    %v2987 = vsel %vm2810, %v2967, 0.0
    %v2988 = vpack.c.bf16 %v2979, %v2978
    %v2989 = vpack.c.bf16 %v2981, %v2980
    %v2990 = vpack.c.bf16 %v2983, %v2982
    %v2991 = vpack.c.bf16 %v2985, %v2984
    %v2992 = vpack.c.bf16 %v2987, %v2986
    %v2993 = vld [vmem:[%s4] sm:$0xff]
    %v2994 = vld [vmem:[%s4 + $0x8] sm:$0xf]
    %v2995 = vld [vmem:[%s4 + $0xc] sm:$0xff]
    %v2996 = vld [vmem:[%s4 + $0x14] sm:$0xf]
    %v2997 = vld [vmem:[%s4 + $0x18] sm:$0xff]
    %v2998 = vld [vmem:[%s4 + $0x20] sm:$0xf]
    %v2999 = vld [vmem:[%s4 + $0x24] sm:$0xff]
    %v3000 = vld [vmem:[%s4 + $0x2c] sm:$0xf]
    %v3009 = vunpack.c.l.b16 %v2993
    %v3010 = vunpack.c.h.b16 %v2993
    %v3011 = vunpack.c.l.b16 %v2994
    %v3012 = vunpack.c.l.b16 %v2995
    %v3013 = vunpack.c.h.b16 %v2995
    %v3014 = vunpack.c.l.b16 %v2996
    %v3015 = vunpack.c.l.b16 %v2997
    %v3016 = vunpack.c.h.b16 %v2997
    %v3017 = vunpack.c.l.b16 %v2998
    %v3018 = vunpack.c.l.b16 %v2999
    %v3019 = vunpack.c.h.b16 %v2999
    %v3020 = vunpack.c.l.b16 %v3000
    %v3021 = vpack.c.b16 %v3012, %v3009
    %v3022 = vpack.c.b16 %v3013, %v3010
    %v3023 = vpack.c.b16 %v3014, %v3011
    %v3024 = vpack.c.b16 %v3018, %v3015
    %v3025 = vpack.c.b16 %v3019, %v3016
    %v3026 = vpack.c.b16 %v3020, %v3017
    %vm3033 = vcmask 261120
    %v3035 = vsel %vm3033, %v2988, 0
    %v3038 = vsel %vm3033, %v2989, 0
    %v3041 = vsel %vm3033, %v2990, 0
    %v3044 = vsel %vm3033, %v2991, 0
    %v3047 = vsel %vm3033, %v2992, 0
    %3049 = vmatprep.subr.bf16.mxu0 %v3022
    %3050 = vmatpush1.bf16.msra.mxu0 %v3021
    %3051 = vmatprep.subr.bf16.mxu0 %v3025
    %3052 = vmatpush1.bf16.msra.mxu0 %v3024
    %3053 = vmatprep.subr.bf16.mxu0 0
    %3054 = vmatpush1.bf16.msra.mxu0 0
    %3055 = vmatprep.subr.bf16.mxu0 0
    %3056 = vmatpush1.bf16.msra.mxu0 0
    %3057 = vmatprep.subr.bf16.mxu0 0
    %3058 = vmatpush1.bf16.msra.mxu0 0
    %3059 = vmatprep.subr.bf16.mxu0 0
    %3060 = vmatpush1.bf16.msra.mxu0 0
    %3061 = vmatprep.subr.bf16.mxu0 0
    %3062 = vmatpush1.bf16.msra.mxu0 0
    %3063 = vmatprep.subr.bf16.mxu0 0
    %3064 = vmatpush1.bf16.msra.mxu0 0
    %3065 = vmatprep.subr.bf16.mxu0 0
    %3066 = vmatpush1.bf16.msra.mxu0 0
    %3067 = vmatprep.subr.bf16.mxu0 0
    %3068 = vmatpush1.bf16.msra.mxu0 0
    %3069 = vmatprep.subr.bf16.mxu0 0
    %3070 = vmatpush1.bf16.msra.mxu0 0
    %3071 = vmatprep.subr.bf16.mxu0 0
    %3072 = vmatpush1.bf16.msra.mxu0 0
    %3073 = vmatprep.subr.bf16.mxu0 0
    %3074 = vmatpush1.bf16.msra.mxu0 0
    %3075 = vmatprep.subr.bf16.mxu0 0
    %3076 = vmatpush1.bf16.msra.mxu0 0
    %3077 = vmatprep.subr.bf16.mxu0 0
    %3078 = vmatpush1.bf16.msra.mxu0 0
    %3079 = vmatprep.subr.bf16.mxu0 0
    %3080 = vmatpush1.bf16.msra.mxu0 0
    %3081 = vmatprep.mubr.bf16.mxu0 0
    %3082 = vmatmul.mubr.bf16.gmra.mrb[0].mxu0 %v3035
    %v3083 = vpop.f32.mrb[0].mxu0
    %v3084 = vadd.f32 0.0, %v3083
    %v3085 = vpop.f32.mrb[0].mxu0
    %v3086 = vadd.f32 0.0, %v3085
    %v3087 = vpop.f32.mrb[0].mxu0
    %v3088 = vadd.f32 0.0, %v3087
    %v3089 = vpop.f32.mrb[0].mxu0
    %v3090 = vadd.f32 0.0, %v3089
    %3091 = vmatprep.mubr.bf16.mxu0 0
    %3092 = vmatmul.mubr.bf16.gmra.mrb[0].mxu0 %v3038
    %v3093 = vpop.f32.mrb[0].mxu0
    %v3094 = vadd.f32 0.0, %v3093
    %v3095 = vpop.f32.mrb[0].mxu0
    %v3096 = vadd.f32 0.0, %v3095
    %v3097 = vpop.f32.mrb[0].mxu0
    %v3098 = vadd.f32 0.0, %v3097
    %v3099 = vpop.f32.mrb[0].mxu0
    %v3100 = vadd.f32 0.0, %v3099
    %3101 = vmatprep.mubr.bf16.mxu0 0
    %3102 = vmatmul.mubr.bf16.gmra.mrb[0].mxu0 %v3041
    %v3103 = vpop.f32.mrb[0].mxu0
    %v3104 = vadd.f32 0.0, %v3103
    %v3105 = vpop.f32.mrb[0].mxu0
    %v3106 = vadd.f32 0.0, %v3105
    %v3107 = vpop.f32.mrb[0].mxu0
    %v3108 = vadd.f32 0.0, %v3107
    %v3109 = vpop.f32.mrb[0].mxu0
    %v3110 = vadd.f32 0.0, %v3109
    %3111 = vmatprep.mubr.bf16.mxu0 0
    %3112 = vmatmul.mubr.bf16.gmra.mrb[0].mxu0 %v3044
    %v3113 = vpop.f32.mrb[0].mxu0
    %v3114 = vadd.f32 0.0, %v3113
    %v3115 = vpop.f32.mrb[0].mxu0
    %v3116 = vadd.f32 0.0, %v3115
    %v3117 = vpop.f32.mrb[0].mxu0
    %v3118 = vadd.f32 0.0, %v3117
    %v3119 = vpop.f32.mrb[0].mxu0
    %v3120 = vadd.f32 0.0, %v3119
    %3121 = vmatprep.mubr.bf16.mxu0 0
    %3122 = vmatmul.mubr.bf16.gmra.mrb[0].mxu0 %v3047
    %v3123 = vpop.f32.mrb[0].mxu0
    %v3124 = vadd.f32 0.0, %v3123
    %v3125 = vpop.f32.mrb[0].mxu0
    %v3126 = vadd.f32 0.0, %v3125
    %v3127 = vpop.f32.mrb[0].mxu0
    %v3128 = vadd.f32 0.0, %v3127
    %v3129 = vpop.f32.mrb[0].mxu0
    %v3130 = vadd.f32 0.0, %v3129
    %3131 = vdwg.mxu0
    %3132 = vmatprep.subr.bf16.mxu0 0
    %3133 = vmatpush1.bf16.msra.mxu0 %v3023
    %3134 = vmatprep.subr.bf16.mxu0 0
    %3135 = vmatpush1.bf16.msra.mxu0 %v3026
    %3136 = vmatprep.subr.bf16.mxu0 0
    %3137 = vmatpush1.bf16.msra.mxu0 0
    %3138 = vmatprep.subr.bf16.mxu0 0
    %3139 = vmatpush1.bf16.msra.mxu0 0
    %3140 = vmatprep.subr.bf16.mxu0 0
    %3141 = vmatpush1.bf16.msra.mxu0 0
    %3142 = vmatprep.subr.bf16.mxu0 0
    %3143 = vmatpush1.bf16.msra.mxu0 0
    %3144 = vmatprep.subr.bf16.mxu0 0
    %3145 = vmatpush1.bf16.msra.mxu0 0
    %3146 = vmatprep.subr.bf16.mxu0 0
    %3147 = vmatpush1.bf16.msra.mxu0 0
    %3148 = vmatprep.subr.bf16.mxu0 0
    %3149 = vmatpush1.bf16.msra.mxu0 0
    %3150 = vmatprep.subr.bf16.mxu0 0
    %3151 = vmatpush1.bf16.msra.mxu0 0
    %3152 = vmatprep.subr.bf16.mxu0 0
    %3153 = vmatpush1.bf16.msra.mxu0 0
    %3154 = vmatprep.subr.bf16.mxu0 0
    %3155 = vmatpush1.bf16.msra.mxu0 0
    %3156 = vmatprep.subr.bf16.mxu0 0
    %3157 = vmatpush1.bf16.msra.mxu0 0
    %3158 = vmatprep.subr.bf16.mxu0 0
    %3159 = vmatpush1.bf16.msra.mxu0 0
    %3160 = vmatprep.subr.bf16.mxu0 0
    %3161 = vmatpush1.bf16.msra.mxu0 0
    %3162 = vmatprep.subr.bf16.mxu0 0
    %3163 = vmatpush1.bf16.msra.mxu0 0
    %3164 = vmatprep.mubr.bf16.mxu0 0
    %3165 = vmatmul.mubr.bf16.gmra.mrb[0].mxu0 %v3035
    %v3166 = vpop.f32.mrb[0].mxu0
    %v3167 = vpop.f32.mrb[0].mxu0
    %v3168 = vpop.f32.mrb[0].mxu0
    %v3169 = vadd.f32 0.0, %v3168
    %v3170 = vpop.f32.mrb[0].mxu0
    %3171 = vmatprep.mubr.bf16.mxu0 0
    %3172 = vmatmul.mubr.bf16.gmra.mrb[0].mxu0 %v3038
    %v3173 = vpop.f32.mrb[0].mxu0
    %v3174 = vadd.f32 0.0, %v3173
    %v3175 = vpop.f32.mrb[0].mxu0
    %v3176 = vpop.f32.mrb[0].mxu0
    %v3177 = vadd.f32 0.0, %v3176
    %v3178 = vpop.f32.mrb[0].mxu0
    %3179 = vmatprep.mubr.bf16.mxu0 0
    %3180 = vmatmul.mubr.bf16.gmra.mrb[0].mxu0 %v3041
    %v3181 = vpop.f32.mrb[0].mxu0
    %v3182 = vadd.f32 0.0, %v3181
    %v3183 = vpop.f32.mrb[0].mxu0
    %v3184 = vpop.f32.mrb[0].mxu0
    %v3185 = vpop.f32.mrb[0].mxu0
    %3186 = vmatprep.mubr.bf16.mxu0 0
    %3187 = vmatmul.mubr.bf16.gmra.mrb[0].mxu0 %v3044
    %v3188 = vpop.f32.mrb[0].mxu0
    %v3189 = vadd.f32 0.0, %v3188
    %v3190 = vpop.f32.mrb[0].mxu0
    %v3191 = vpop.f32.mrb[0].mxu0
    %v3192 = vadd.f32 0.0, %v3191
    %v3193 = vpop.f32.mrb[0].mxu0
    %3194 = vmatprep.mubr.bf16.mxu0 0
    %3195 = vmatmul.mubr.bf16.gmra.mrb[0].mxu0 %v3047
    %v3196 = vpop.f32.mrb[0].mxu0
    %v3197 = vadd.f32 0.0, %v3196
    %v3198 = vpop.f32.mrb[0].mxu0
    %v3199 = vpop.f32.mrb[0].mxu0
    %v3200 = vadd.f32 0.0, %v3199
    %v3201 = vpop.f32.mrb[0].mxu0
    %3202 = vdwg.mxu0
    %v3213 = vrot.slane %v3084, 1
    %v3214 = vrot.slane %v3088, 1
    %v3215 = vsel %vm677, %v3213, %v3214
    %v3216 = vrot.slane %v3094, 1
    %v3217 = vsel %vm677, %v3214, %v3216
    %v3218 = vrot.slane %v3098, 1
    %v3219 = vsel %vm677, %v3216, %v3218
    %v3220 = vrot.slane %v3104, 1
    %v3221 = vsel %vm677, %v3218, %v3220
    %v3222 = vrot.slane %v3108, 1
    %v3223 = vrot.slane %v3114, 1
    %v3224 = vsel %vm677, %v3222, %v3223
    %v3225 = vrot.slane %v3118, 1
    %v3226 = vsel %vm677, %v3223, %v3225
    %v3227 = vrot.slane %v3124, 1
    %v3228 = vsel %vm677, %v3225, %v3227
    %v3229 = vrot.slane %v3128, 1
    %v3230 = vsel %vm677, %v3227, %v3229
    %3231 = vrot.lane.b32.xlu0 %v3215, 96
    %v3232 = vpop.permute.xlu0 %3231
    %3233 = vrot.lane.b32.xlu0 %v3217, 96
    %v3234 = vpop.permute.xlu0 %3233
    %3235 = vrot.lane.b32.xlu0 %v3219, 96
    %v3236 = vpop.permute.xlu0 %3235
    %3237 = vrot.lane.b32.xlu0 %v3221, 96
    %v3238 = vpop.permute.xlu0 %3237
    %3239 = vrot.lane.b32.xlu0 %v3224, 96
    %v3240 = vpop.permute.xlu0 %3239
    %3241 = vrot.lane.b32.xlu0 %v3226, 96
    %v3242 = vpop.permute.xlu0 %3241
    %3243 = vrot.lane.b32.xlu0 %v3228, 96
    %v3244 = vpop.permute.xlu0 %3243
    %3245 = vrot.lane.b32.xlu0 %v3230, 96
    %v3246 = vpop.permute.xlu0 %3245
    %v3255 = vadd.f32 %v3084, %v3232
    %v3256 = vadd.f32 %v3088, %v3234
    %v3257 = vadd.f32 %v3094, %v3236
    %v3258 = vadd.f32 %v3098, %v3238
    %v3259 = vadd.f32 %v3108, %v3240
    %v3260 = vadd.f32 %v3114, %v3242
    %v3261 = vadd.f32 %v3118, %v3244
    %v3262 = vadd.f32 %v3124, %v3246
    %v3263 = vrot.slane %v3084, 2
    %v3264 = vrot.slane %v3088, 2
    %v3265 = vsel %vm800, %v3263, %v3264
    %v3266 = vrot.slane %v3094, 2
    %v3267 = vsel %vm800, %v3264, %v3266
    %v3268 = vrot.slane %v3098, 2
    %v3269 = vsel %vm800, %v3266, %v3268
    %v3270 = vrot.slane %v3104, 2
    %v3271 = vsel %vm800, %v3268, %v3270
    %v3272 = vrot.slane %v3108, 2
    %v3273 = vrot.slane %v3114, 2
    %v3274 = vsel %vm800, %v3272, %v3273
    %v3275 = vrot.slane %v3118, 2
    %v3276 = vsel %vm800, %v3273, %v3275
    %v3277 = vrot.slane %v3124, 2
    %v3278 = vsel %vm800, %v3275, %v3277
    %v3279 = vrot.slane %v3128, 2
    %v3280 = vsel %vm800, %v3277, %v3279
    %3281 = vrot.lane.b32.xlu0 %v3265, 64
    %v3282 = vpop.permute.xlu0 %3281
    %3283 = vrot.lane.b32.xlu0 %v3267, 64
    %v3284 = vpop.permute.xlu0 %3283
    %3285 = vrot.lane.b32.xlu0 %v3269, 64
    %v3286 = vpop.permute.xlu0 %3285
    %3287 = vrot.lane.b32.xlu0 %v3271, 64
    %v3288 = vpop.permute.xlu0 %3287
    %3289 = vrot.lane.b32.xlu0 %v3274, 64
    %v3290 = vpop.permute.xlu0 %3289
    %3291 = vrot.lane.b32.xlu0 %v3276, 64
    %v3292 = vpop.permute.xlu0 %3291
    %3293 = vrot.lane.b32.xlu0 %v3278, 64
    %v3294 = vpop.permute.xlu0 %3293
    %3295 = vrot.lane.b32.xlu0 %v3280, 64
    %v3296 = vpop.permute.xlu0 %3295
    %v3305 = vadd.f32 %v3255, %v3282
    %v3306 = vadd.f32 %v3256, %v3284
    %v3307 = vadd.f32 %v3257, %v3286
    %v3308 = vadd.f32 %v3258, %v3288
    %v3309 = vadd.f32 %v3259, %v3290
    %v3310 = vadd.f32 %v3260, %v3292
    %v3311 = vadd.f32 %v3261, %v3294
    %v3312 = vadd.f32 %v3262, %v3296
    %v3313 = vrot.slane %v3084, 3
    %v3314 = vrot.slane %v3088, 3
    %v3315 = vsel %vm923, %v3313, %v3314
    %v3316 = vrot.slane %v3094, 3
    %v3317 = vsel %vm923, %v3314, %v3316
    %v3318 = vrot.slane %v3098, 3
    %v3319 = vsel %vm923, %v3316, %v3318
    %v3320 = vrot.slane %v3104, 3
    %v3321 = vsel %vm923, %v3318, %v3320
    %v3322 = vrot.slane %v3108, 3
    %v3323 = vrot.slane %v3114, 3
    %v3324 = vsel %vm923, %v3322, %v3323
    %v3325 = vrot.slane %v3118, 3
    %v3326 = vsel %vm923, %v3323, %v3325
    %v3327 = vrot.slane %v3124, 3
    %v3328 = vsel %vm923, %v3325, %v3327
    %v3329 = vrot.slane %v3128, 3
    %v3330 = vsel %vm923, %v3327, %v3329
    %3331 = vrot.lane.b32.xlu0 %v3315, 32
    %v3332 = vpop.permute.xlu0 %3331
    %3333 = vrot.lane.b32.xlu0 %v3317, 32
    %v3334 = vpop.permute.xlu0 %3333
    %3335 = vrot.lane.b32.xlu0 %v3319, 32
    %v3336 = vpop.permute.xlu0 %3335
    %3337 = vrot.lane.b32.xlu0 %v3321, 32
    %v3338 = vpop.permute.xlu0 %3337
    %3339 = vrot.lane.b32.xlu0 %v3324, 32
    %v3340 = vpop.permute.xlu0 %3339
    %3341 = vrot.lane.b32.xlu0 %v3326, 32
    %v3342 = vpop.permute.xlu0 %3341
    %3343 = vrot.lane.b32.xlu0 %v3328, 32
    %v3344 = vpop.permute.xlu0 %3343
    %3345 = vrot.lane.b32.xlu0 %v3330, 32
    %v3346 = vpop.permute.xlu0 %3345
    %v3355 = vadd.f32 %v3305, %v3332
    %v3356 = vadd.f32 %v3306, %v3334
    %v3357 = vadd.f32 %v3307, %v3336
    %v3358 = vadd.f32 %v3308, %v3338
    %v3359 = vadd.f32 %v3309, %v3340
    %v3360 = vadd.f32 %v3310, %v3342
    %v3361 = vadd.f32 %v3311, %v3344
    %v3362 = vadd.f32 %v3312, %v3346
    %v3373 = vrot.slane %v3086, 4
    %v3374 = vrot.slane %v3090, 4
    %v3375 = vsel %vm1068, %v3373, %v3374
    %v3376 = vrot.slane %v3096, 4
    %v3377 = vsel %vm1068, %v3374, %v3376
    %v3378 = vrot.slane %v3100, 4
    %v3379 = vsel %vm1068, %v3376, %v3378
    %v3380 = vrot.slane %v3106, 4
    %v3381 = vsel %vm1068, %v3378, %v3380
    %v3382 = vrot.slane %v3110, 4
    %v3383 = vrot.slane %v3116, 4
    %v3384 = vsel %vm1068, %v3382, %v3383
    %v3385 = vrot.slane %v3120, 4
    %v3386 = vsel %vm1068, %v3383, %v3385
    %v3387 = vrot.slane %v3126, 4
    %v3388 = vsel %vm1068, %v3385, %v3387
    %v3389 = vrot.slane %v3130, 4
    %v3390 = vsel %vm1068, %v3387, %v3389
    %v3399 = vadd.f32 %v3355, %v3375
    %v3400 = vadd.f32 %v3356, %v3377
    %v3401 = vadd.f32 %v3357, %v3379
    %v3402 = vadd.f32 %v3358, %v3381
    %v3403 = vadd.f32 %v3359, %v3384
    %v3404 = vadd.f32 %v3360, %v3386
    %v3405 = vadd.f32 %v3361, %v3388
    %v3406 = vadd.f32 %v3362, %v3390
    %v3407 = vrot.slane %v3086, 5
    %v3408 = vrot.slane %v3090, 5
    %v3409 = vsel %vm1151, %v3407, %v3408
    %v3410 = vrot.slane %v3096, 5
    %v3411 = vsel %vm1151, %v3408, %v3410
    %v3412 = vrot.slane %v3100, 5
    %v3413 = vsel %vm1151, %v3410, %v3412
    %v3414 = vrot.slane %v3106, 5
    %v3415 = vsel %vm1151, %v3412, %v3414
    %v3416 = vrot.slane %v3110, 5
    %v3417 = vrot.slane %v3116, 5
    %v3418 = vsel %vm1151, %v3416, %v3417
    %v3419 = vrot.slane %v3120, 5
    %v3420 = vsel %vm1151, %v3417, %v3419
    %v3421 = vrot.slane %v3126, 5
    %v3422 = vsel %vm1151, %v3419, %v3421
    %v3423 = vrot.slane %v3130, 5
    %v3424 = vsel %vm1151, %v3421, %v3423
    %3425 = vrot.lane.b32.xlu0 %v3409, 96
    %v3426 = vpop.permute.xlu0 %3425
    %3427 = vrot.lane.b32.xlu0 %v3411, 96
    %v3428 = vpop.permute.xlu0 %3427
    %3429 = vrot.lane.b32.xlu0 %v3413, 96
    %v3430 = vpop.permute.xlu0 %3429
    %3431 = vrot.lane.b32.xlu0 %v3415, 96
    %v3432 = vpop.permute.xlu0 %3431
    %3433 = vrot.lane.b32.xlu0 %v3418, 96
    %v3434 = vpop.permute.xlu0 %3433
    %3435 = vrot.lane.b32.xlu0 %v3420, 96
    %v3436 = vpop.permute.xlu0 %3435
    %3437 = vrot.lane.b32.xlu0 %v3422, 96
    %v3438 = vpop.permute.xlu0 %3437
    %3439 = vrot.lane.b32.xlu0 %v3424, 96
    %v3440 = vpop.permute.xlu0 %3439
    %v3449 = vadd.f32 %v3399, %v3426
    %v3450 = vadd.f32 %v3400, %v3428
    %v3451 = vadd.f32 %v3401, %v3430
    %v3452 = vadd.f32 %v3402, %v3432
    %v3453 = vadd.f32 %v3403, %v3434
    %v3454 = vadd.f32 %v3404, %v3436
    %v3455 = vadd.f32 %v3405, %v3438
    %v3456 = vadd.f32 %v3406, %v3440
    %v3457 = vrot.slane %v3086, 6
    %v3458 = vrot.slane %v3090, 6
    %v3459 = vsel %vm1274, %v3457, %v3458
    %v3460 = vrot.slane %v3096, 6
    %v3461 = vsel %vm1274, %v3458, %v3460
    %v3462 = vrot.slane %v3100, 6
    %v3463 = vsel %vm1274, %v3460, %v3462
    %v3464 = vrot.slane %v3106, 6
    %v3465 = vsel %vm1274, %v3462, %v3464
    %v3466 = vrot.slane %v3110, 6
    %v3467 = vrot.slane %v3116, 6
    %v3468 = vsel %vm1274, %v3466, %v3467
    %v3469 = vrot.slane %v3120, 6
    %v3470 = vsel %vm1274, %v3467, %v3469
    %v3471 = vrot.slane %v3126, 6
    %v3472 = vsel %vm1274, %v3469, %v3471
    %v3473 = vrot.slane %v3130, 6
    %v3474 = vsel %vm1274, %v3471, %v3473
    %3475 = vrot.lane.b32.xlu0 %v3459, 64
    %v3476 = vpop.permute.xlu0 %3475
    %3477 = vrot.lane.b32.xlu0 %v3461, 64
    %v3478 = vpop.permute.xlu0 %3477
    %3479 = vrot.lane.b32.xlu0 %v3463, 64
    %v3480 = vpop.permute.xlu0 %3479
    %3481 = vrot.lane.b32.xlu0 %v3465, 64
    %v3482 = vpop.permute.xlu0 %3481
    %3483 = vrot.lane.b32.xlu0 %v3468, 64
    %v3484 = vpop.permute.xlu0 %3483
    %3485 = vrot.lane.b32.xlu0 %v3470, 64
    %v3486 = vpop.permute.xlu0 %3485
    %3487 = vrot.lane.b32.xlu0 %v3472, 64
    %v3488 = vpop.permute.xlu0 %3487
    %3489 = vrot.lane.b32.xlu0 %v3474, 64
    %v3490 = vpop.permute.xlu0 %3489
    %v3499 = vadd.f32 %v3449, %v3476
    %v3500 = vadd.f32 %v3450, %v3478
    %v3501 = vadd.f32 %v3451, %v3480
    %v3502 = vadd.f32 %v3452, %v3482
    %v3503 = vadd.f32 %v3453, %v3484
    %v3504 = vadd.f32 %v3454, %v3486
    %v3505 = vadd.f32 %v3455, %v3488
    %v3506 = vadd.f32 %v3456, %v3490
    %v3507 = vrot.slane %v3086, 7
    %v3508 = vrot.slane %v3090, 7
    %v3509 = vsel %vm1397, %v3507, %v3508
    %v3510 = vrot.slane %v3096, 7
    %v3511 = vsel %vm1397, %v3508, %v3510
    %v3512 = vrot.slane %v3100, 7
    %v3513 = vsel %vm1397, %v3510, %v3512
    %v3514 = vrot.slane %v3106, 7
    %v3515 = vsel %vm1397, %v3512, %v3514
    %v3516 = vrot.slane %v3110, 7
    %v3517 = vrot.slane %v3116, 7
    %v3518 = vsel %vm1397, %v3516, %v3517
    %v3519 = vrot.slane %v3120, 7
    %v3520 = vsel %vm1397, %v3517, %v3519
    %v3521 = vrot.slane %v3126, 7
    %v3522 = vsel %vm1397, %v3519, %v3521
    %v3523 = vrot.slane %v3130, 7
    %v3524 = vsel %vm1397, %v3521, %v3523
    %3525 = vrot.lane.b32.xlu0 %v3509, 32
    %v3526 = vpop.permute.xlu0 %3525
    %3527 = vrot.lane.b32.xlu0 %v3511, 32
    %v3528 = vpop.permute.xlu0 %3527
    %3529 = vrot.lane.b32.xlu0 %v3513, 32
    %v3530 = vpop.permute.xlu0 %3529
    %3531 = vrot.lane.b32.xlu0 %v3515, 32
    %v3532 = vpop.permute.xlu0 %3531
    %3533 = vrot.lane.b32.xlu0 %v3518, 32
    %v3534 = vpop.permute.xlu0 %3533
    %3535 = vrot.lane.b32.xlu0 %v3520, 32
    %v3536 = vpop.permute.xlu0 %3535
    %3537 = vrot.lane.b32.xlu0 %v3522, 32
    %v3538 = vpop.permute.xlu0 %3537
    %3539 = vrot.lane.b32.xlu0 %v3524, 32
    %v3540 = vpop.permute.xlu0 %3539
    %v3549 = vadd.f32 %v3499, %v3526
    %v3550 = vadd.f32 %v3500, %v3528
    %v3551 = vadd.f32 %v3501, %v3530
    %v3552 = vadd.f32 %v3502, %v3532
    %v3553 = vadd.f32 %v3503, %v3534
    %v3554 = vadd.f32 %v3504, %v3536
    %v3555 = vadd.f32 %v3505, %v3538
    %v3556 = vadd.f32 %v3506, %v3540
    %v3557 = vadd.f32 %v3549, %v3169
    %v3558 = vadd.f32 %v3550, %v3174
    %v3559 = vadd.f32 %v3551, %v3177
    %v3560 = vadd.f32 %v3552, %v3182
    %v3561 = vadd.f32 %v3553, %v3189
    %v3562 = vadd.f32 %v3554, %v3192
    %v3563 = vadd.f32 %v3555, %v3197
    %v3564 = vadd.f32 %v3556, %v3200
    %v3565 = vld [vmem:[%s5] sm:$0x1]
    %v3567 = vlaneseq
    %v3568 = vshrl.u32 %v3567, 7
    %v3569 = vsub.s32 0, %v3568
    %v3570 = vrot.slane %v3565, %v3569
    %v3572 = vadd.f32 %v3557, %v3570
    %v3573 = vadd.f32 %v3558, %v3570
    %v3574 = vadd.f32 %v3559, %v3570
    %v3575 = vadd.f32 %v3560, %v3570
    %v3576 = vadd.f32 %v3561, %v3570
    %v3577 = vadd.f32 %v3562, %v3570
    %v3578 = vadd.f32 %v3563, %v3570
    %v3579 = vadd.f32 %v3564, %v3570
    %v3580 = vmin.f32 %v3572, 20.0
    %v3581 = vmin.f32 %v3573, 20.0
    %v3582 = vmin.f32 %v3574, 20.0
    %v3583 = vmin.f32 %v3575, 20.0
    %v3584 = vmin.f32 %v3576, 20.0
    %v3585 = vmin.f32 %v3577, 20.0
    %v3586 = vmin.f32 %v3578, 20.0
    %v3587 = vmin.f32 %v3579, 20.0
    %v3588 = vmul.f32 %v3580, 1.442695
    %v3589 = vpow.pop %v3588
    %v3590 = vmul.f32 %v3581, 1.442695
    %v3591 = vpow.pop %v3590
    %v3592 = vmul.f32 %v3582, 1.442695
    %v3593 = vpow.pop %v3592
    %v3594 = vmul.f32 %v3583, 1.442695
    %v3595 = vpow.pop %v3594
    %v3596 = vmul.f32 %v3584, 1.442695
    %v3597 = vpow.pop %v3596
    %v3598 = vmul.f32 %v3585, 1.442695
    %v3599 = vpow.pop %v3598
    %v3600 = vmul.f32 %v3586, 1.442695
    %v3601 = vpow.pop %v3600
    %v3602 = vmul.f32 %v3587, 1.442695
    %v3603 = vpow.pop %v3602
    %v3604 = vadd.f32 %v3589, 1.0
    %v3605 = vadd.f32 %v3591, 1.0
    %v3606 = vadd.f32 %v3593, 1.0
    %v3607 = vadd.f32 %v3595, 1.0
    %v3608 = vadd.f32 %v3597, 1.0
    %v3609 = vadd.f32 %v3599, 1.0
    %v3610 = vadd.f32 %v3601, 1.0
    %v3611 = vadd.f32 %v3603, 1.0
    %v3612 = vmul.f32 %v3604, %v3604
    %v3613 = vmul.f32 %v3605, %v3605
    %v3614 = vmul.f32 %v3606, %v3606
    %v3615 = vmul.f32 %v3607, %v3607
    %v3616 = vmul.f32 %v3608, %v3608
    %v3617 = vmul.f32 %v3609, %v3609
    %v3618 = vmul.f32 %v3610, %v3610
    %v3619 = vmul.f32 %v3611, %v3611
    %v3620 = vadd.f32 %v3612, 1.0
    %v3621 = vadd.f32 %v3613, 1.0
    %v3622 = vadd.f32 %v3614, 1.0
    %v3623 = vadd.f32 %v3615, 1.0
    %v3624 = vadd.f32 %v3616, 1.0
    %v3625 = vadd.f32 %v3617, 1.0
    %v3626 = vadd.f32 %v3618, 1.0
    %v3627 = vadd.f32 %v3619, 1.0
    %v3628 = vrcp.pop %v3620
    %v3629 = vrcp.pop %v3621
    %v3630 = vrcp.pop %v3622
    %v3631 = vrcp.pop %v3623
    %v3632 = vrcp.pop %v3624
    %v3633 = vrcp.pop %v3625
    %v3634 = vrcp.pop %v3626
    %v3635 = vrcp.pop %v3627
    %v3636 = vmul.f32 %v3628, 2.0
    %v3637 = vmul.f32 %v3629, 2.0
    %v3638 = vmul.f32 %v3630, 2.0
    %v3639 = vmul.f32 %v3631, 2.0
    %v3640 = vmul.f32 %v3632, 2.0
    %v3641 = vmul.f32 %v3633, 2.0
    %v3642 = vmul.f32 %v3634, 2.0
    %v3643 = vmul.f32 %v3635, 2.0
    %v3644 = vsub.f32 1.0, %v3636
    %v3645 = vsub.f32 1.0, %v3637
    %v3646 = vsub.f32 1.0, %v3638
    %v3647 = vsub.f32 1.0, %v3639
    %v3648 = vsub.f32 1.0, %v3640
    %v3649 = vsub.f32 1.0, %v3641
    %v3650 = vsub.f32 1.0, %v3642
    %v3651 = vsub.f32 1.0, %v3643
    %v3652 = vmul.f32 %v3572, %v3644
    %v3653 = vmul.f32 %v3573, %v3645
    %v3654 = vmul.f32 %v3574, %v3646
    %v3655 = vmul.f32 %v3575, %v3647
    %v3656 = vmul.f32 %v3576, %v3648
    %v3657 = vmul.f32 %v3577, %v3649
    %v3658 = vmul.f32 %v3578, %v3650
    %v3659 = vmul.f32 %v3579, %v3651
    %v3668 = vcombine.high %v3652, %v3652
    %v3670 = vunpack.c.l.s4 1983009808
    %v3671 = vunpack.c.0.s8 %v3670
    %v3672 = vlaneseq
    %v3673 = vshrl.u32 %v3672, 7
    %v3674 = vsub.s32 %v3671, %v3673
    %v3675 = vrot.slane %v3652, %v3674
    %v3677 = vunpack.c.l.s4 1983009808
    %v3678 = vunpack.c.0.s8 %v3677
    %v3679 = vlaneseq
    %v3680 = vshrl.u32 %v3679, 7
    %v3681 = vsub.s32 %v3678, %v3680
    %v3682 = vrot.slane %v3668, %v3681
    %v3683 = vcombine.high %v3675, %v3675
    %v3684 = vcombine.high %v3682, %v3682
    %v3685 = vcombine.high %v3653, %v3653
    %v3687 = vunpack.c.l.s4 1983009808
    %v3688 = vunpack.c.0.s8 %v3687
    %v3689 = vlaneseq
    %v3690 = vshrl.u32 %v3689, 7
    %v3691 = vsub.s32 %v3688, %v3690
    %v3692 = vrot.slane %v3653, %v3691
    %v3694 = vunpack.c.l.s4 1983009808
    %v3695 = vunpack.c.0.s8 %v3694
    %v3696 = vlaneseq
    %v3697 = vshrl.u32 %v3696, 7
    %v3698 = vsub.s32 %v3695, %v3697
    %v3699 = vrot.slane %v3685, %v3698
    %v3700 = vcombine.high %v3692, %v3692
    %v3701 = vcombine.high %v3699, %v3699
    %v3702 = vcombine.high %v3654, %v3654
    %v3704 = vunpack.c.l.s4 1983009808
    %v3705 = vunpack.c.0.s8 %v3704
    %v3706 = vlaneseq
    %v3707 = vshrl.u32 %v3706, 7
    %v3708 = vsub.s32 %v3705, %v3707
    %v3709 = vrot.slane %v3654, %v3708
    %v3711 = vunpack.c.l.s4 1983009808
    %v3712 = vunpack.c.0.s8 %v3711
    %v3713 = vlaneseq
    %v3714 = vshrl.u32 %v3713, 7
    %v3715 = vsub.s32 %v3712, %v3714
    %v3716 = vrot.slane %v3702, %v3715
    %v3717 = vcombine.high %v3709, %v3709
    %v3718 = vcombine.high %v3716, %v3716
    %v3719 = vcombine.high %v3655, %v3655
    %v3721 = vunpack.c.l.s4 1983009808
    %v3722 = vunpack.c.0.s8 %v3721
    %v3723 = vlaneseq
    %v3724 = vshrl.u32 %v3723, 7
    %v3725 = vsub.s32 %v3722, %v3724
    %v3726 = vrot.slane %v3655, %v3725
    %v3728 = vunpack.c.l.s4 1983009808
    %v3729 = vunpack.c.0.s8 %v3728
    %v3730 = vlaneseq
    %v3731 = vshrl.u32 %v3730, 7
    %v3732 = vsub.s32 %v3729, %v3731
    %v3733 = vrot.slane %v3719, %v3732
    %v3734 = vcombine.high %v3726, %v3726
    %v3735 = vcombine.high %v3733, %v3733
    %v3736 = vcombine.high %v3656, %v3656
    %v3738 = vunpack.c.l.s4 1983009808
    %v3739 = vunpack.c.0.s8 %v3738
    %v3740 = vlaneseq
    %v3741 = vshrl.u32 %v3740, 7
    %v3742 = vsub.s32 %v3739, %v3741
    %v3743 = vrot.slane %v3656, %v3742
    %v3745 = vunpack.c.l.s4 1983009808
    %v3746 = vunpack.c.0.s8 %v3745
    %v3747 = vlaneseq
    %v3748 = vshrl.u32 %v3747, 7
    %v3749 = vsub.s32 %v3746, %v3748
    %v3750 = vrot.slane %v3736, %v3749
    %v3751 = vcombine.high %v3743, %v3743
    %v3752 = vcombine.high %v3750, %v3750
    %v3753 = vcombine.high %v3657, %v3657
    %v3755 = vunpack.c.l.s4 1983009808
    %v3756 = vunpack.c.0.s8 %v3755
    %v3757 = vlaneseq
    %v3758 = vshrl.u32 %v3757, 7
    %v3759 = vsub.s32 %v3756, %v3758
    %v3760 = vrot.slane %v3657, %v3759
    %v3762 = vunpack.c.l.s4 1983009808
    %v3763 = vunpack.c.0.s8 %v3762
    %v3764 = vlaneseq
    %v3765 = vshrl.u32 %v3764, 7
    %v3766 = vsub.s32 %v3763, %v3765
    %v3767 = vrot.slane %v3753, %v3766
    %v3768 = vcombine.high %v3760, %v3760
    %v3769 = vcombine.high %v3767, %v3767
    %v3770 = vcombine.high %v3658, %v3658
    %v3772 = vunpack.c.l.s4 1983009808
    %v3773 = vunpack.c.0.s8 %v3772
    %v3774 = vlaneseq
    %v3775 = vshrl.u32 %v3774, 7
    %v3776 = vsub.s32 %v3773, %v3775
    %v3777 = vrot.slane %v3658, %v3776
    %v3779 = vunpack.c.l.s4 1983009808
    %v3780 = vunpack.c.0.s8 %v3779
    %v3781 = vlaneseq
    %v3782 = vshrl.u32 %v3781, 7
    %v3783 = vsub.s32 %v3780, %v3782
    %v3784 = vrot.slane %v3770, %v3783
    %v3785 = vcombine.high %v3777, %v3777
    %v3786 = vcombine.high %v3784, %v3784
    %v3787 = vcombine.high %v3659, %v3659
    %v3789 = vunpack.c.l.s4 1983009808
    %v3790 = vunpack.c.0.s8 %v3789
    %v3791 = vlaneseq
    %v3792 = vshrl.u32 %v3791, 7
    %v3793 = vsub.s32 %v3790, %v3792
    %v3794 = vrot.slane %v3659, %v3793
    %v3796 = vunpack.c.l.s4 1983009808
    %v3797 = vunpack.c.0.s8 %v3796
    %v3798 = vlaneseq
    %v3799 = vshrl.u32 %v3798, 7
    %v3800 = vsub.s32 %v3797, %v3799
    %v3801 = vrot.slane %v3787, %v3800
    %v3802 = vcombine.high %v3794, %v3794
    %v3803 = vcombine.high %v3801, %v3801
    %v3836 = vsel %vm2207, %v3675, -inf
    %v3837 = vrot.slane %v3836, 4
    %v3838 = vmax.f32 %v3836, %v3837
    %v3839 = vrot.slane %v3838, 2
    %v3840 = vmax.f32 %v3838, %v3839
    %v3841 = vrot.slane %v3840, 1
    %v3842 = vmax.f32 %v3840, %v3841
    %v3843 = vsel %vm2207, %v3683, -inf
    %v3844 = vrot.slane %v3843, 4
    %v3845 = vmax.f32 %v3843, %v3844
    %v3846 = vrot.slane %v3845, 2
    %v3847 = vmax.f32 %v3845, %v3846
    %v3848 = vrot.slane %v3847, 1
    %v3849 = vmax.f32 %v3847, %v3848
    %v3850 = vsel %vm2207, %v3682, -inf
    %v3851 = vrot.slane %v3850, 4
    %v3852 = vmax.f32 %v3850, %v3851
    %v3853 = vrot.slane %v3852, 2
    %v3854 = vmax.f32 %v3852, %v3853
    %v3855 = vrot.slane %v3854, 1
    %v3856 = vmax.f32 %v3854, %v3855
    %v3857 = vsel %vm2207, %v3684, -inf
    %v3858 = vrot.slane %v3857, 4
    %v3859 = vmax.f32 %v3857, %v3858
    %v3860 = vrot.slane %v3859, 2
    %v3861 = vmax.f32 %v3859, %v3860
    %v3862 = vrot.slane %v3861, 1
    %v3863 = vmax.f32 %v3861, %v3862
    %v3864 = vsel %vm2207, %v3692, -inf
    %v3865 = vrot.slane %v3864, 4
    %v3866 = vmax.f32 %v3864, %v3865
    %v3867 = vrot.slane %v3866, 2
    %v3868 = vmax.f32 %v3866, %v3867
    %v3869 = vrot.slane %v3868, 1
    %v3870 = vmax.f32 %v3868, %v3869
    %v3871 = vsel %vm2207, %v3700, -inf
    %v3872 = vrot.slane %v3871, 4
    %v3873 = vmax.f32 %v3871, %v3872
    %v3874 = vrot.slane %v3873, 2
    %v3875 = vmax.f32 %v3873, %v3874
    %v3876 = vrot.slane %v3875, 1
    %v3877 = vmax.f32 %v3875, %v3876
    %v3878 = vsel %vm2207, %v3699, -inf
    %v3879 = vrot.slane %v3878, 4
    %v3880 = vmax.f32 %v3878, %v3879
    %v3881 = vrot.slane %v3880, 2
    %v3882 = vmax.f32 %v3880, %v3881
    %v3883 = vrot.slane %v3882, 1
    %v3884 = vmax.f32 %v3882, %v3883
    %v3885 = vsel %vm2207, %v3701, -inf
    %v3886 = vrot.slane %v3885, 4
    %v3887 = vmax.f32 %v3885, %v3886
    %v3888 = vrot.slane %v3887, 2
    %v3889 = vmax.f32 %v3887, %v3888
    %v3890 = vrot.slane %v3889, 1
    %v3891 = vmax.f32 %v3889, %v3890
    %v3892 = vsel %vm2207, %v3709, -inf
    %v3893 = vrot.slane %v3892, 4
    %v3894 = vmax.f32 %v3892, %v3893
    %v3895 = vrot.slane %v3894, 2
    %v3896 = vmax.f32 %v3894, %v3895
    %v3897 = vrot.slane %v3896, 1
    %v3898 = vmax.f32 %v3896, %v3897
    %v3899 = vsel %vm2207, %v3717, -inf
    %v3900 = vrot.slane %v3899, 4
    %v3901 = vmax.f32 %v3899, %v3900
    %v3902 = vrot.slane %v3901, 2
    %v3903 = vmax.f32 %v3901, %v3902
    %v3904 = vrot.slane %v3903, 1
    %v3905 = vmax.f32 %v3903, %v3904
    %v3906 = vsel %vm2207, %v3716, -inf
    %v3907 = vrot.slane %v3906, 4
    %v3908 = vmax.f32 %v3906, %v3907
    %v3909 = vrot.slane %v3908, 2
    %v3910 = vmax.f32 %v3908, %v3909
    %v3911 = vrot.slane %v3910, 1
    %v3912 = vmax.f32 %v3910, %v3911
    %v3913 = vsel %vm2207, %v3718, -inf
    %v3914 = vrot.slane %v3913, 4
    %v3915 = vmax.f32 %v3913, %v3914
    %v3916 = vrot.slane %v3915, 2
    %v3917 = vmax.f32 %v3915, %v3916
    %v3918 = vrot.slane %v3917, 1
    %v3919 = vmax.f32 %v3917, %v3918
    %v3920 = vsel %vm2207, %v3726, -inf
    %v3921 = vrot.slane %v3920, 4
    %v3922 = vmax.f32 %v3920, %v3921
    %v3923 = vrot.slane %v3922, 2
    %v3924 = vmax.f32 %v3922, %v3923
    %v3925 = vrot.slane %v3924, 1
    %v3926 = vmax.f32 %v3924, %v3925
    %v3927 = vsel %vm2207, %v3734, -inf
    %v3928 = vrot.slane %v3927, 4
    %v3929 = vmax.f32 %v3927, %v3928
    %v3930 = vrot.slane %v3929, 2
    %v3931 = vmax.f32 %v3929, %v3930
    %v3932 = vrot.slane %v3931, 1
    %v3933 = vmax.f32 %v3931, %v3932
    %v3934 = vsel %vm2207, %v3733, -inf
    %v3935 = vrot.slane %v3934, 4
    %v3936 = vmax.f32 %v3934, %v3935
    %v3937 = vrot.slane %v3936, 2
    %v3938 = vmax.f32 %v3936, %v3937
    %v3939 = vrot.slane %v3938, 1
    %v3940 = vmax.f32 %v3938, %v3939
    %v3941 = vsel %vm2207, %v3735, -inf
    %v3942 = vrot.slane %v3941, 4
    %v3943 = vmax.f32 %v3941, %v3942
    %v3944 = vrot.slane %v3943, 2
    %v3945 = vmax.f32 %v3943, %v3944
    %v3946 = vrot.slane %v3945, 1
    %v3947 = vmax.f32 %v3945, %v3946
    %v3948 = vsel %vm2207, %v3743, -inf
    %v3949 = vrot.slane %v3948, 4
    %v3950 = vmax.f32 %v3948, %v3949
    %v3951 = vrot.slane %v3950, 2
    %v3952 = vmax.f32 %v3950, %v3951
    %v3953 = vrot.slane %v3952, 1
    %v3954 = vmax.f32 %v3952, %v3953
    %v3955 = vsel %vm2207, %v3751, -inf
    %v3956 = vrot.slane %v3955, 4
    %v3957 = vmax.f32 %v3955, %v3956
    %v3958 = vrot.slane %v3957, 2
    %v3959 = vmax.f32 %v3957, %v3958
    %v3960 = vrot.slane %v3959, 1
    %v3961 = vmax.f32 %v3959, %v3960
    %v3962 = vsel %vm2207, %v3750, -inf
    %v3963 = vrot.slane %v3962, 4
    %v3964 = vmax.f32 %v3962, %v3963
    %v3965 = vrot.slane %v3964, 2
    %v3966 = vmax.f32 %v3964, %v3965
    %v3967 = vrot.slane %v3966, 1
    %v3968 = vmax.f32 %v3966, %v3967
    %v3969 = vsel %vm2207, %v3752, -inf
    %v3970 = vrot.slane %v3969, 4
    %v3971 = vmax.f32 %v3969, %v3970
    %v3972 = vrot.slane %v3971, 2
    %v3973 = vmax.f32 %v3971, %v3972
    %v3974 = vrot.slane %v3973, 1
    %v3975 = vmax.f32 %v3973, %v3974
    %v3976 = vsel %vm2207, %v3760, -inf
    %v3977 = vrot.slane %v3976, 4
    %v3978 = vmax.f32 %v3976, %v3977
    %v3979 = vrot.slane %v3978, 2
    %v3980 = vmax.f32 %v3978, %v3979
    %v3981 = vrot.slane %v3980, 1
    %v3982 = vmax.f32 %v3980, %v3981
    %v3983 = vsel %vm2207, %v3768, -inf
    %v3984 = vrot.slane %v3983, 4
    %v3985 = vmax.f32 %v3983, %v3984
    %v3986 = vrot.slane %v3985, 2
    %v3987 = vmax.f32 %v3985, %v3986
    %v3988 = vrot.slane %v3987, 1
    %v3989 = vmax.f32 %v3987, %v3988
    %v3990 = vsel %vm2207, %v3767, -inf
    %v3991 = vrot.slane %v3990, 4
    %v3992 = vmax.f32 %v3990, %v3991
    %v3993 = vrot.slane %v3992, 2
    %v3994 = vmax.f32 %v3992, %v3993
    %v3995 = vrot.slane %v3994, 1
    %v3996 = vmax.f32 %v3994, %v3995
    %v3997 = vsel %vm2207, %v3769, -inf
    %v3998 = vrot.slane %v3997, 4
    %v3999 = vmax.f32 %v3997, %v3998
    %v4000 = vrot.slane %v3999, 2
    %v4001 = vmax.f32 %v3999, %v4000
    %v4002 = vrot.slane %v4001, 1
    %v4003 = vmax.f32 %v4001, %v4002
    %v4004 = vsel %vm2207, %v3777, -inf
    %v4005 = vrot.slane %v4004, 4
    %v4006 = vmax.f32 %v4004, %v4005
    %v4007 = vrot.slane %v4006, 2
    %v4008 = vmax.f32 %v4006, %v4007
    %v4009 = vrot.slane %v4008, 1
    %v4010 = vmax.f32 %v4008, %v4009
    %v4011 = vsel %vm2207, %v3785, -inf
    %v4012 = vrot.slane %v4011, 4
    %v4013 = vmax.f32 %v4011, %v4012
    %v4014 = vrot.slane %v4013, 2
    %v4015 = vmax.f32 %v4013, %v4014
    %v4016 = vrot.slane %v4015, 1
    %v4017 = vmax.f32 %v4015, %v4016
    %v4018 = vsel %vm2207, %v3784, -inf
    %v4019 = vrot.slane %v4018, 4
    %v4020 = vmax.f32 %v4018, %v4019
    %v4021 = vrot.slane %v4020, 2
    %v4022 = vmax.f32 %v4020, %v4021
    %v4023 = vrot.slane %v4022, 1
    %v4024 = vmax.f32 %v4022, %v4023
    %v4025 = vsel %vm2207, %v3786, -inf
    %v4026 = vrot.slane %v4025, 4
    %v4027 = vmax.f32 %v4025, %v4026
    %v4028 = vrot.slane %v4027, 2
    %v4029 = vmax.f32 %v4027, %v4028
    %v4030 = vrot.slane %v4029, 1
    %v4031 = vmax.f32 %v4029, %v4030
    %v4032 = vsel %vm2207, %v3794, -inf
    %v4033 = vrot.slane %v4032, 4
    %v4034 = vmax.f32 %v4032, %v4033
    %v4035 = vrot.slane %v4034, 2
    %v4036 = vmax.f32 %v4034, %v4035
    %v4037 = vrot.slane %v4036, 1
    %v4038 = vmax.f32 %v4036, %v4037
    %v4039 = vsel %vm2207, %v3802, -inf
    %v4040 = vrot.slane %v4039, 4
    %v4041 = vmax.f32 %v4039, %v4040
    %v4042 = vrot.slane %v4041, 2
    %v4043 = vmax.f32 %v4041, %v4042
    %v4044 = vrot.slane %v4043, 1
    %v4045 = vmax.f32 %v4043, %v4044
    %v4046 = vsel %vm2207, %v3801, -inf
    %v4047 = vrot.slane %v4046, 4
    %v4048 = vmax.f32 %v4046, %v4047
    %v4049 = vrot.slane %v4048, 2
    %v4050 = vmax.f32 %v4048, %v4049
    %v4051 = vrot.slane %v4050, 1
    %v4052 = vmax.f32 %v4050, %v4051
    %v4053 = vsel %vm2207, %v3803, -inf
    %v4054 = vrot.slane %v4053, 4
    %v4055 = vmax.f32 %v4053, %v4054
    %v4056 = vrot.slane %v4055, 2
    %v4057 = vmax.f32 %v4055, %v4056
    %v4058 = vrot.slane %v4057, 1
    %v4059 = vmax.f32 %v4057, %v4058
    %v4068 = vsel %vm2891, %v3849, %v3842
    %v4069 = vsel %vm2893, %v3856, %v4068
    %v4070 = vsel %vm2895, %v3863, %v4069
    %v4071 = vsel %vm2891, %v3961, %v3954
    %v4072 = vsel %vm2893, %v3968, %v4071
    %v4073 = vsel %vm2895, %v3975, %v4072
    %v4084 = vsel %vm2891, %v3877, %v3870
    %v4085 = vsel %vm2893, %v3884, %v4084
    %v4086 = vsel %vm2895, %v3891, %v4085
    %v4087 = vsel %vm2891, %v3989, %v3982
    %v4088 = vsel %vm2893, %v3996, %v4087
    %v4089 = vsel %vm2895, %v4003, %v4088
    %4090 = vrot.lane.b32.xlu0 %v4086, 32
    %v4091 = vpop.permute.xlu0 %4090
    %4092 = vrot.lane.b32.xlu0 %v4089, 32
    %v4093 = vpop.permute.xlu0 %4092
    %v4104 = vsel %vm2891, %v3905, %v3898
    %v4105 = vsel %vm2893, %v3912, %v4104
    %v4106 = vsel %vm2895, %v3919, %v4105
    %v4107 = vsel %vm2891, %v4017, %v4010
    %v4108 = vsel %vm2893, %v4024, %v4107
    %v4109 = vsel %vm2895, %v4031, %v4108
    %4110 = vrot.lane.b32.xlu0 %v4106, 64
    %v4111 = vpop.permute.xlu0 %4110
    %4112 = vrot.lane.b32.xlu0 %v4109, 64
    %v4113 = vpop.permute.xlu0 %4112
    %v4124 = vsel %vm2891, %v3933, %v3926
    %v4125 = vsel %vm2893, %v3940, %v4124
    %v4126 = vsel %vm2895, %v3947, %v4125
    %v4127 = vsel %vm2891, %v4045, %v4038
    %v4128 = vsel %vm2893, %v4052, %v4127
    %v4129 = vsel %vm2895, %v4059, %v4128
    %4130 = vrot.lane.b32.xlu0 %v4126, 96
    %v4131 = vpop.permute.xlu0 %4130
    %4132 = vrot.lane.b32.xlu0 %v4129, 96
    %v4133 = vpop.permute.xlu0 %4132
    %v4136 = vsel %vm3033, %v4070, %v4091
    %v4137 = vsel %vm3033, %v4073, %v4093
    %v4138 = vsel %vm359, %v4136, %v4111
    %v4139 = vsel %vm359, %v4137, %v4113
    %vm4140 = vcmask 785408
    %v4141 = vsel %vm4140, %v4138, %v4131
    %v4142 = vsel %vm4140, %v4139, %v4133
    %4143 = vst [vmem:[%s6] sm:$0xf] %v4141
    %4144 = vst [vmem:[%s6 + $0x4] sm:$0xf] %v4142
    // Predicated region
    $region108: #{base_feature_net.1} parent=1 // pred_check
      _
    $region109: #{base_feature_net.1} parent=1 // pred_check_branch
      %4146 = sbr.rel (0) target = $region111
    $region110: #{base_feature_net.1} parent=1 // pred_region
      _
    $region111: #{base_feature_net.1} parent=1 // pred_fallthru
      _
    // Predicated region
    $region112: #{base_feature_net.1} parent=1 // pred_check
      _
    $region113: #{base_feature_net.1} parent=1 // pred_check_branch
      %4148 = sbr.rel (0) target = $region115
    $region114: #{base_feature_net.1} parent=1 // pred_region
      _
    $region115: #{base_feature_net.1} parent=1 // pred_fallthru
      _

</llo_original>
